<compile_context>
chip_gen: v6e
topology: v6e:2x2x1
jax: 0.10.0
libtpu: 0.0.40
codegen_flags: <defaults>
</compile_context>

<pallas_src>
import jax
import jax.numpy as jnp
from jax.experimental import pallas as pl
from jax.experimental.pallas import tpu as pltpu

# Small, TPU-friendly stand-ins for the module's batch_size=32 / embed_size=300
BATCH_SIZE = 32      # batch_size
EMBED_SIZE = 128     # embed_size (lane-aligned stand-in for 300)
N_NOISE = 16         # number of negative (noise) samples per example
NUM_TILES = 2        # grid steps: one per TensorCore on v7x, tiny overhead on v5e/v6e


def _log_sigmoid(z):
    # Numerically stable, 2 EUP ops (exp + log), no reciprocal:
    #   log(sigmoid(z)) = min(z, 0) - log(1 + exp(-|z|))
    return jnp.minimum(z, 0.0) - jnp.log(1.0 + jnp.exp(-jnp.abs(z)))


def _neg_loss_kernel(x_ref, out_ref, noise_ref,
                     out_part_ref, noise_part_ref, acc_ref):
    """One tile of B_TILE batch rows.

    Writes:
      out_part_ref   (1, 1, E)      : per-lane partial sums of log(sigmoid(outer))
      noise_part_ref (1, B_TILE, N) : log(sigmoid(noise @ x)) values (summed in wrapper)
    """
    xv = x_ref[...]          # (B_TILE, E)
    ov = out_ref[...]        # (B_TILE, E)
    b_tile, e = xv.shape

    acc_ref[...] = jnp.zeros_like(acc_ref)      # (1, E) accumulator, reset per tile

    # Per-batch-row (E, E) slab: bounded live set (~16 vregs), no spill-sized
    # intermediate. Static unrolled loop; EUP is the binding unit, the VALU
    # adds and the XLU sublane fold ride along for free.
    for b in range(b_tile):
        col_x = xv[b:b + 1, :, None]            # (1, E, 1)  x_b along sublanes
        row_o = ov[b:b + 1, None, :]            # (1, 1, E)  o_b along lanes
        slab = _log_sigmoid(col_x * row_o)[0]   # (E, E)
        acc_ref[...] += jnp.sum(slab, axis=0, keepdims=True)   # fold to (1, E)

    # noise scores: (B_TILE, N) = sum_e noise[b,n,e] * x[b,e]
    # VPU multiply + XLU lane reduce -> free filler next to the EUP-bound loop.
    scores = jnp.sum(noise_ref[...] * xv[:, None, :], axis=-1)

    out_part_ref[...] = acc_ref[...][None]             # (1, 1, E), lane-dense
    noise_part_ref[...] = _log_sigmoid(scores)[None]   # (1, B_TILE, N)


def negative_loss(x, out, noise, *, num_tiles=NUM_TILES):
    """x: (B, E, 1), out: (B, 1, E), noise: (B, N, E) -> scalar loss."""
    B, E = x.shape[0], x.shape[1]
    N = noise.shape[1]
    assert B % num_tiles == 0
    b_tile = B // num_tiles
    assert b_tile % 8 == 0, "batch tile must be a multiple of 8 sublanes"

    f32 = jnp.float32
    x2 = x.reshape(B, E).astype(f32)
    out2 = out.reshape(B, E).astype(f32)
    noise_f = noise.astype(f32)

    out_part, noise_part = pl.pallas_call(
        _neg_loss_kernel,
        out_shape=(
            jax.ShapeDtypeStruct((num_tiles, 1, E), f32),
            jax.ShapeDtypeStruct((num_tiles, b_tile, N), f32),
        ),
        grid_spec=pltpu.PrefetchScalarGridSpec(
            num_scalar_prefetch=0,
            grid=(num_tiles,),
            in_specs=[
                pl.BlockSpec((b_tile, E), lambda t: (t, 0)),
                pl.BlockSpec((b_tile, E), lambda t: (t, 0)),
                pl.BlockSpec((b_tile, N, E), lambda t: (t, 0, 0)),
            ],
            out_specs=[
                pl.BlockSpec((1, 1, E), lambda t: (t, 0, 0)),
                pl.BlockSpec((1, b_tile, N), lambda t: (t, 0, 0)),
            ],
            scratch_shapes=[pltpu.VMEM((1, E), f32)],
        ),
        compiler_params=pltpu.CompilerParams(
            dimension_semantics=("parallel",),   # independent tiles -> both TCs on v7x
        ),
    )(x2, out2, noise_f)

    s_out = jnp.sum(out_part)        # sum over (B, E, E) of log(sigmoid(x_i * o_j))
    s_noise = jnp.sum(noise_part)    # sum over (B, N)    of log(sigmoid(noise . x))
    return -(s_out / (B * E * E)) * s_noise


def negative_loss_ref(x, out, noise):
    """Pure-JAX reference mirroring the torch module."""
    B, E = x.shape[0], x.shape[1]
    iv = x.reshape(B, E, 1)
    ov = out.reshape(B, 1, E)
    out_loss = jnp.log(jax.nn.sigmoid(jnp.matmul(iv, ov)))       # (B, E, E)
    noise_loss = jnp.sum(jnp.log(jax.nn.sigmoid(jnp.matmul(noise, iv))))
    return -(out_loss * noise_loss).mean()


if __name__ == "__main__":
    key = jax.random.PRNGKey(0)
    k1, k2, k3 = jax.random.split(key, 3)
    x = 0.1 * jax.random.normal(k1, (BATCH_SIZE, EMBED_SIZE, 1), jnp.float32)
    out = 0.1 * jax.random.normal(k2, (BATCH_SIZE, 1, EMBED_SIZE), jnp.float32)
    noise = 0.1 * jax.random.normal(
        k3, (BATCH_SIZE, N_NOISE, EMBED_SIZE), jnp.float32
    )

    loss = jax.jit(negative_loss)(x, out, noise)
    jax.block_until_ready(loss)

    ref = negative_loss_ref(x, out, noise)
    assert jnp.allclose(loss, ref, rtol=1e-4, atol=1e-5), (loss, ref)

    print("KERNEL_OK")
</pallas_src>

<mosaic_0001>
module attributes {stable_mosaic.version = 11 : i64} {
  func.func @_neg_loss_kernel(%arg0: i32, %arg1: memref<16x128xf32, #tpu.memory_space<vmem>>, %arg2: memref<16x128xf32, #tpu.memory_space<vmem>>, %arg3: memref<16x16x128xf32, #tpu.memory_space<vmem>>, %arg4: memref<1x1x128xf32, #tpu.memory_space<vmem>>, %arg5: memref<1x16x16xf32, #tpu.memory_space<vmem>>, %arg6: memref<1x128xf32, #tpu.memory_space<vmem>>) attributes {dimension_semantics = [#tpu.dimension_semantics<parallel>], iteration_bounds = array<i64: 2>, scalar_prefetch = 0 : i64, scratch_operands = 1 : i64, tpu.core_type = #tpu.core_type<tc>, window_params = [{transform_indices = @transform_0, window_bounds = array<i64: 16, 128>}, {transform_indices = @transform_1, window_bounds = array<i64: 16, 128>}, {transform_indices = @transform_2, window_bounds = array<i64: 16, 16, 128>}, {transform_indices = @transform_3, window_bounds = array<i64: 1, 1, 128>}, {transform_indices = @transform_4, window_bounds = array<i64: 1, 16, 16>}]} {
    %c0 = arith.constant 0 : index
    %c0_0 = arith.constant 0 : index
    %0 = vector.load %arg1[%c0, %c0_0] : memref<16x128xf32, #tpu.memory_space<vmem>>, vector<16x128xf32>
    %c0_1 = arith.constant 0 : index
    %c0_2 = arith.constant 0 : index
    %1 = vector.load %arg2[%c0_1, %c0_2] : memref<16x128xf32, #tpu.memory_space<vmem>>, vector<16x128xf32>
    %cst = arith.constant 0.000000e+00 : f32
    %2 = vector.broadcast %cst : f32 to vector<1x128xf32>
    %c0_3 = arith.constant 0 : index
    %c0_4 = arith.constant 0 : index
    %3 = vector.load %arg6[%c0_3, %c0_4] : memref<1x128xf32, #tpu.memory_space<vmem>>, vector<1x128xf32>
    tpu.vector_store %arg6[%c0_3, %c0_4], %2 {strides = array<i32>} : memref<1x128xf32, #tpu.memory_space<vmem>>, vector<1x128xf32>,
    %4 = vector.extract_strided_slice %0 {offsets = [0, 0], sizes = [1, 128], strides = [1, 1]} : vector<16x128xf32> to vector<1x128xf32>
    %5 = vector.shape_cast %4 : vector<1x128xf32> to vector<1x128x1xf32>
    %6 = vector.extract_strided_slice %1 {offsets = [0, 0], sizes = [1, 128], strides = [1, 1]} : vector<16x128xf32> to vector<1x128xf32>
    %7 = vector.shape_cast %6 : vector<1x128xf32> to vector<1x1x128xf32>
    %8 = vector.broadcast %5 : vector<1x128x1xf32> to vector<1x128x128xf32>
    %9 = vector.broadcast %7 : vector<1x1x128xf32> to vector<1x128x128xf32>
    %10 = arith.mulf %8, %9 : vector<1x128x128xf32>
    %cst_5 = arith.constant 0.000000e+00 : f32
    %11 = vector.broadcast %cst_5 : f32 to vector<1x128x128xf32>
    %12 = arith.minimumf %10, %11 : vector<1x128x128xf32>
    %13 = math.absf %10 : vector<1x128x128xf32>
    %cst_6 = arith.constant 0.000000e+00 : f32
    %14 = vector.broadcast %cst_6 : f32 to vector<1x128x128xf32>
    %15 = arith.subf %14, %13 : vector<1x128x128xf32>
    %16 = math.exp %15 : vector<1x128x128xf32>
    %cst_7 = arith.constant 1.000000e+00 : f32
    %17 = vector.broadcast %cst_7 : f32 to vector<1x128x128xf32>
    %18 = arith.addf %17, %16 : vector<1x128x128xf32>
    %19 = math.log %18 : vector<1x128x128xf32>
    %20 = arith.subf %12, %19 : vector<1x128x128xf32>
    %21 = vector.shape_cast %20 : vector<1x128x128xf32> to vector<128x128xf32>
    %c0_8 = arith.constant 0 : index
    %c0_9 = arith.constant 0 : index
    %22 = vector.load %arg6[%c0_8, %c0_9] : memref<1x128xf32, #tpu.memory_space<vmem>>, vector<1x128xf32>
    %cst_10 = arith.constant dense<0.000000e+00> : vector<128xf32>
    %23 = vector.multi_reduction <add>, %21, %cst_10 [0] : vector<128x128xf32> to vector<128xf32>
    %24 = vector.shape_cast %23 : vector<128xf32> to vector<1x128xf32>
    %25 = arith.addf %22, %24 : vector<1x128xf32>
    %c0_11 = arith.constant 0 : index
    %c0_12 = arith.constant 0 : index
    %26 = vector.load %arg6[%c0_11, %c0_12] : memref<1x128xf32, #tpu.memory_space<vmem>>, vector<1x128xf32>
    tpu.vector_store %arg6[%c0_11, %c0_12], %25 {strides = array<i32>} : memref<1x128xf32, #tpu.memory_space<vmem>>, vector<1x128xf32>,
    %27 = vector.extract_strided_slice %0 {offsets = [1, 0], sizes = [1, 128], strides = [1, 1]} : vector<16x128xf32> to vector<1x128xf32>
    %28 = vector.shape_cast %27 : vector<1x128xf32> to vector<1x128x1xf32>
    %29 = vector.extract_strided_slice %1 {offsets = [1, 0], sizes = [1, 128], strides = [1, 1]} : vector<16x128xf32> to vector<1x128xf32>
    %30 = vector.shape_cast %29 : vector<1x128xf32> to vector<1x1x128xf32>
    %31 = vector.broadcast %28 : vector<1x128x1xf32> to vector<1x128x128xf32>
    %32 = vector.broadcast %30 : vector<1x1x128xf32> to vector<1x128x128xf32>
    %33 = arith.mulf %31, %32 : vector<1x128x128xf32>
    %cst_13 = arith.constant 0.000000e+00 : f32
    %34 = vector.broadcast %cst_13 : f32 to vector<1x128x128xf32>
    %35 = arith.minimumf %33, %34 : vector<1x128x128xf32>
    %36 = math.absf %33 : vector<1x128x128xf32>
    %cst_14 = arith.constant 0.000000e+00 : f32
    %37 = vector.broadcast %cst_14 : f32 to vector<1x128x128xf32>
    %38 = arith.subf %37, %36 : vector<1x128x128xf32>
    %39 = math.exp %38 : vector<1x128x128xf32>
    %cst_15 = arith.constant 1.000000e+00 : f32
    %40 = vector.broadcast %cst_15 : f32 to vector<1x128x128xf32>
    %41 = arith.addf %40, %39 : vector<1x128x128xf32>
    %42 = math.log %41 : vector<1x128x128xf32>
    %43 = arith.subf %35, %42 : vector<1x128x128xf32>
    %44 = vector.shape_cast %43 : vector<1x128x128xf32> to vector<128x128xf32>
    %c0_16 = arith.constant 0 : index
    %c0_17 = arith.constant 0 : index
    %45 = vector.load %arg6[%c0_16, %c0_17] : memref<1x128xf32, #tpu.memory_space<vmem>>, vector<1x128xf32>
    %cst_18 = arith.constant dense<0.000000e+00> : vector<128xf32>
    %46 = vector.multi_reduction <add>, %44, %cst_18 [0] : vector<128x128xf32> to vector<128xf32>
    %47 = vector.shape_cast %46 : vector<128xf32> to vector<1x128xf32>
    %48 = arith.addf %45, %47 : vector<1x128xf32>
    %c0_19 = arith.constant 0 : index
    %c0_20 = arith.constant 0 : index
    %49 = vector.load %arg6[%c0_19, %c0_20] : memref<1x128xf32, #tpu.memory_space<vmem>>, vector<1x128xf32>
    tpu.vector_store %arg6[%c0_19, %c0_20], %48 {strides = array<i32>} : memref<1x128xf32, #tpu.memory_space<vmem>>, vector<1x128xf32>,
    %50 = vector.extract_strided_slice %0 {offsets = [2, 0], sizes = [1, 128], strides = [1, 1]} : vector<16x128xf32> to vector<1x128xf32>
    %51 = vector.shape_cast %50 : vector<1x128xf32> to vector<1x128x1xf32>
    %52 = vector.extract_strided_slice %1 {offsets = [2, 0], sizes = [1, 128], strides = [1, 1]} : vector<16x128xf32> to vector<1x128xf32>
    %53 = vector.shape_cast %52 : vector<1x128xf32> to vector<1x1x128xf32>
    %54 = vector.broadcast %51 : vector<1x128x1xf32> to vector<1x128x128xf32>
    %55 = vector.broadcast %53 : vector<1x1x128xf32> to vector<1x128x128xf32>
    %56 = arith.mulf %54, %55 : vector<1x128x128xf32>
    %cst_21 = arith.constant 0.000000e+00 : f32
    %57 = vector.broadcast %cst_21 : f32 to vector<1x128x128xf32>
    %58 = arith.minimumf %56, %57 : vector<1x128x128xf32>
    %59 = math.absf %56 : vector<1x128x128xf32>
    %cst_22 = arith.constant 0.000000e+00 : f32
    %60 = vector.broadcast %cst_22 : f32 to vector<1x128x128xf32>
    %61 = arith.subf %60, %59 : vector<1x128x128xf32>
    %62 = math.exp %61 : vector<1x128x128xf32>
    %cst_23 = arith.constant 1.000000e+00 : f32
    %63 = vector.broadcast %cst_23 : f32 to vector<1x128x128xf32>
    %64 = arith.addf %63, %62 : vector<1x128x128xf32>
    %65 = math.log %64 : vector<1x128x128xf32>
    %66 = arith.subf %58, %65 : vector<1x128x128xf32>
    %67 = vector.shape_cast %66 : vector<1x128x128xf32> to vector<128x128xf32>
    %c0_24 = arith.constant 0 : index
    %c0_25 = arith.constant 0 : index
    %68 = vector.load %arg6[%c0_24, %c0_25] : memref<1x128xf32, #tpu.memory_space<vmem>>, vector<1x128xf32>
    %cst_26 = arith.constant dense<0.000000e+00> : vector<128xf32>
    %69 = vector.multi_reduction <add>, %67, %cst_26 [0] : vector<128x128xf32> to vector<128xf32>
    %70 = vector.shape_cast %69 : vector<128xf32> to vector<1x128xf32>
    %71 = arith.addf %68, %70 : vector<1x128xf32>
    %c0_27 = arith.constant 0 : index
    %c0_28 = arith.constant 0 : index
    %72 = vector.load %arg6[%c0_27, %c0_28] : memref<1x128xf32, #tpu.memory_space<vmem>>, vector<1x128xf32>
    tpu.vector_store %arg6[%c0_27, %c0_28], %71 {strides = array<i32>} : memref<1x128xf32, #tpu.memory_space<vmem>>, vector<1x128xf32>,
    %73 = vector.extract_strided_slice %0 {offsets = [3, 0], sizes = [1, 128], strides = [1, 1]} : vector<16x128xf32> to vector<1x128xf32>
    %74 = vector.shape_cast %73 : vector<1x128xf32> to vector<1x128x1xf32>
    %75 = vector.extract_strided_slice %1 {offsets = [3, 0], sizes = [1, 128], strides = [1, 1]} : vector<16x128xf32> to vector<1x128xf32>
    %76 = vector.shape_cast %75 : vector<1x128xf32> to vector<1x1x128xf32>
    %77 = vector.broadcast %74 : vector<1x128x1xf32> to vector<1x128x128xf32>
    %78 = vector.broadcast %76 : vector<1x1x128xf32> to vector<1x128x128xf32>
    %79 = arith.mulf %77, %78 : vector<1x128x128xf32>
    %cst_29 = arith.constant 0.000000e+00 : f32
    %80 = vector.broadcast %cst_29 : f32 to vector<1x128x128xf32>
    %81 = arith.minimumf %79, %80 : vector<1x128x128xf32>
    %82 = math.absf %79 : vector<1x128x128xf32>
    %cst_30 = arith.constant 0.000000e+00 : f32
    %83 = vector.broadcast %cst_30 : f32 to vector<1x128x128xf32>
    %84 = arith.subf %83, %82 : vector<1x128x128xf32>
    %85 = math.exp %84 : vector<1x128x128xf32>
    %cst_31 = arith.constant 1.000000e+00 : f32
    %86 = vector.broadcast %cst_31 : f32 to vector<1x128x128xf32>
    %87 = arith.addf %86, %85 : vector<1x128x128xf32>
    %88 = math.log %87 : vector<1x128x128xf32>
    %89 = arith.subf %81, %88 : vector<1x128x128xf32>
    %90 = vector.shape_cast %89 : vector<1x128x128xf32> to vector<128x128xf32>
    %c0_32 = arith.constant 0 : index
    %c0_33 = arith.constant 0 : index
    %91 = vector.load %arg6[%c0_32, %c0_33] : memref<1x128xf32, #tpu.memory_space<vmem>>, vector<1x128xf32>
    %cst_34 = arith.constant dense<0.000000e+00> : vector<128xf32>
    %92 = vector.multi_reduction <add>, %90, %cst_34 [0] : vector<128x128xf32> to vector<128xf32>
    %93 = vector.shape_cast %92 : vector<128xf32> to vector<1x128xf32>
    %94 = arith.addf %91, %93 : vector<1x128xf32>
    %c0_35 = arith.constant 0 : index
    %c0_36 = arith.constant 0 : index
    %95 = vector.load %arg6[%c0_35, %c0_36] : memref<1x128xf32, #tpu.memory_space<vmem>>, vector<1x128xf32>
    tpu.vector_store %arg6[%c0_35, %c0_36], %94 {strides = array<i32>} : memref<1x128xf32, #tpu.memory_space<vmem>>, vector<1x128xf32>,
    %96 = vector.extract_strided_slice %0 {offsets = [4, 0], sizes = [1, 128], strides = [1, 1]} : vector<16x128xf32> to vector<1x128xf32>
    %97 = vector.shape_cast %96 : vector<1x128xf32> to vector<1x128x1xf32>
    %98 = vector.extract_strided_slice %1 {offsets = [4, 0], sizes = [1, 128], strides = [1, 1]} : vector<16x128xf32> to vector<1x128xf32>
    %99 = vector.shape_cast %98 : vector<1x128xf32> to vector<1x1x128xf32>
    %100 = vector.broadcast %97 : vector<1x128x1xf32> to vector<1x128x128xf32>
    %101 = vector.broadcast %99 : vector<1x1x128xf32> to vector<1x128x128xf32>
    %102 = arith.mulf %100, %101 : vector<1x128x128xf32>
    %cst_37 = arith.constant 0.000000e+00 : f32
    %103 = vector.broadcast %cst_37 : f32 to vector<1x128x128xf32>
    %104 = arith.minimumf %102, %103 : vector<1x128x128xf32>
    %105 = math.absf %102 : vector<1x128x128xf32>
    %cst_38 = arith.constant 0.000000e+00 : f32
    %106 = vector.broadcast %cst_38 : f32 to vector<1x128x128xf32>
    %107 = arith.subf %106, %105 : vector<1x128x128xf32>
    %108 = math.exp %107 : vector<1x128x128xf32>
    %cst_39 = arith.constant 1.000000e+00 : f32
    %109 = vector.broadcast %cst_39 : f32 to vector<1x128x128xf32>
    %110 = arith.addf %109, %108 : vector<1x128x128xf32>
    %111 = math.log %110 : vector<1x128x128xf32>
    %112 = arith.subf %104, %111 : vector<1x128x128xf32>
    %113 = vector.shape_cast %112 : vector<1x128x128xf32> to vector<128x128xf32>
    %c0_40 = arith.constant 0 : index
    %c0_41 = arith.constant 0 : index
    %114 = vector.load %arg6[%c0_40, %c0_41] : memref<1x128xf32, #tpu.memory_space<vmem>>, vector<1x128xf32>
    %cst_42 = arith.constant dense<0.000000e+00> : vector<128xf32>
    %115 = vector.multi_reduction <add>, %113, %cst_42 [0] : vector<128x128xf32> to vector<128xf32>
    %116 = vector.shape_cast %115 : vector<128xf32> to vector<1x128xf32>
    %117 = arith.addf %114, %116 : vector<1x128xf32>
    %c0_43 = arith.constant 0 : index
    %c0_44 = arith.constant 0 : index
    %118 = vector.load %arg6[%c0_43, %c0_44] : memref<1x128xf32, #tpu.memory_space<vmem>>, vector<1x128xf32>
    tpu.vector_store %arg6[%c0_43, %c0_44], %117 {strides = array<i32>} : memref<1x128xf32, #tpu.memory_space<vmem>>, vector<1x128xf32>,
    %119 = vector.extract_strided_slice %0 {offsets = [5, 0], sizes = [1, 128], strides = [1, 1]} : vector<16x128xf32> to vector<1x128xf32>
    %120 = vector.shape_cast %119 : vector<1x128xf32> to vector<1x128x1xf32>
    %121 = vector.extract_strided_slice %1 {offsets = [5, 0], sizes = [1, 128], strides = [1, 1]} : vector<16x128xf32> to vector<1x128xf32>
    %122 = vector.shape_cast %121 : vector<1x128xf32> to vector<1x1x128xf32>
    %123 = vector.broadcast %120 : vector<1x128x1xf32> to vector<1x128x128xf32>
    %124 = vector.broadcast %122 : vector<1x1x128xf32> to vector<1x128x128xf32>
    %125 = arith.mulf %123, %124 : vector<1x128x128xf32>
    %cst_45 = arith.constant 0.000000e+00 : f32
    %126 = vector.broadcast %cst_45 : f32 to vector<1x128x128xf32>
    %127 = arith.minimumf %125, %126 : vector<1x128x128xf32>
    %128 = math.absf %125 : vector<1x128x128xf32>
    %cst_46 = arith.constant 0.000000e+00 : f32
    %129 = vector.broadcast %cst_46 : f32 to vector<1x128x128xf32>
    %130 = arith.subf %129, %128 : vector<1x128x128xf32>
    %131 = math.exp %130 : vector<1x128x128xf32>
    %cst_47 = arith.constant 1.000000e+00 : f32
    %132 = vector.broadcast %cst_47 : f32 to vector<1x128x128xf32>
    %133 = arith.addf %132, %131 : vector<1x128x128xf32>
    %134 = math.log %133 : vector<1x128x128xf32>
    %135 = arith.subf %127, %134 : vector<1x128x128xf32>
    %136 = vector.shape_cast %135 : vector<1x128x128xf32> to vector<128x128xf32>
    %c0_48 = arith.constant 0 : index
    %c0_49 = arith.constant 0 : index
    %137 = vector.load %arg6[%c0_48, %c0_49] : memref<1x128xf32, #tpu.memory_space<vmem>>, vector<1x128xf32>
    %cst_50 = arith.constant dense<0.000000e+00> : vector<128xf32>
    %138 = vector.multi_reduction <add>, %136, %cst_50 [0] : vector<128x128xf32> to vector<128xf32>
    %139 = vector.shape_cast %138 : vector<128xf32> to vector<1x128xf32>
    %140 = arith.addf %137, %139 : vector<1x128xf32>
    %c0_51 = arith.constant 0 : index
    %c0_52 = arith.constant 0 : index
    %141 = vector.load %arg6[%c0_51, %c0_52] : memref<1x128xf32, #tpu.memory_space<vmem>>, vector<1x128xf32>
    tpu.vector_store %arg6[%c0_51, %c0_52], %140 {strides = array<i32>} : memref<1x128xf32, #tpu.memory_space<vmem>>, vector<1x128xf32>,
    %142 = vector.extract_strided_slice %0 {offsets = [6, 0], sizes = [1, 128], strides = [1, 1]} : vector<16x128xf32> to vector<1x128xf32>
    %143 = vector.shape_cast %142 : vector<1x128xf32> to vector<1x128x1xf32>
    %144 = vector.extract_strided_slice %1 {offsets = [6, 0], sizes = [1, 128], strides = [1, 1]} : vector<16x128xf32> to vector<1x128xf32>
    %145 = vector.shape_cast %144 : vector<1x128xf32> to vector<1x1x128xf32>
    %146 = vector.broadcast %143 : vector<1x128x1xf32> to vector<1x128x128xf32>
    %147 = vector.broadcast %145 : vector<1x1x128xf32> to vector<1x128x128xf32>
    %148 = arith.mulf %146, %147 : vector<1x128x128xf32>
    %cst_53 = arith.constant 0.000000e+00 : f32
    %149 = vector.broadcast %cst_53 : f32 to vector<1x128x128xf32>
    %150 = arith.minimumf %148, %149 : vector<1x128x128xf32>
    %151 = math.absf %148 : vector<1x128x128xf32>
    %cst_54 = arith.constant 0.000000e+00 : f32
    %152 = vector.broadcast %cst_54 : f32 to vector<1x128x128xf32>
    %153 = arith.subf %152, %151 : vector<1x128x128xf32>
    %154 = math.exp %153 : vector<1x128x128xf32>
    %cst_55 = arith.constant 1.000000e+00 : f32
    %155 = vector.broadcast %cst_55 : f32 to vector<1x128x128xf32>
    %156 = arith.addf %155, %154 : vector<1x128x128xf32>
    %157 = math.log %156 : vector<1x128x128xf32>
    %158 = arith.subf %150, %157 : vector<1x128x128xf32>
    %159 = vector.shape_cast %158 : vector<1x128x128xf32> to vector<128x128xf32>
    %c0_56 = arith.constant 0 : index
    %c0_57 = arith.constant 0 : index
    %160 = vector.load %arg6[%c0_56, %c0_57] : memref<1x128xf32, #tpu.memory_space<vmem>>, vector<1x128xf32>
    %cst_58 = arith.constant dense<0.000000e+00> : vector<128xf32>
    %161 = vector.multi_reduction <add>, %159, %cst_58 [0] : vector<128x128xf32> to vector<128xf32>
    %162 = vector.shape_cast %161 : vector<128xf32> to vector<1x128xf32>
    %163 = arith.addf %160, %162 : vector<1x128xf32>
    %c0_59 = arith.constant 0 : index
    %c0_60 = arith.constant 0 : index
    %164 = vector.load %arg6[%c0_59, %c0_60] : memref<1x128xf32, #tpu.memory_space<vmem>>, vector<1x128xf32>
    tpu.vector_store %arg6[%c0_59, %c0_60], %163 {strides = array<i32>} : memref<1x128xf32, #tpu.memory_space<vmem>>, vector<1x128xf32>,
    %165 = vector.extract_strided_slice %0 {offsets = [7, 0], sizes = [1, 128], strides = [1, 1]} : vector<16x128xf32> to vector<1x128xf32>
    %166 = vector.shape_cast %165 : vector<1x128xf32> to vector<1x128x1xf32>
    %167 = vector.extract_strided_slice %1 {offsets = [7, 0], sizes = [1, 128], strides = [1, 1]} : vector<16x128xf32> to vector<1x128xf32>
    %168 = vector.shape_cast %167 : vector<1x128xf32> to vector<1x1x128xf32>
    %169 = vector.broadcast %166 : vector<1x128x1xf32> to vector<1x128x128xf32>
    %170 = vector.broadcast %168 : vector<1x1x128xf32> to vector<1x128x128xf32>
    %171 = arith.mulf %169, %170 : vector<1x128x128xf32>
    %cst_61 = arith.constant 0.000000e+00 : f32
    %172 = vector.broadcast %cst_61 : f32 to vector<1x128x128xf32>
    %173 = arith.minimumf %171, %172 : vector<1x128x128xf32>
    %174 = math.absf %171 : vector<1x128x128xf32>
    %cst_62 = arith.constant 0.000000e+00 : f32
    %175 = vector.broadcast %cst_62 : f32 to vector<1x128x128xf32>
    %176 = arith.subf %175, %174 : vector<1x128x128xf32>
    %177 = math.exp %176 : vector<1x128x128xf32>
    %cst_63 = arith.constant 1.000000e+00 : f32
    %178 = vector.broadcast %cst_63 : f32 to vector<1x128x128xf32>
    %179 = arith.addf %178, %177 : vector<1x128x128xf32>
    %180 = math.log %179 : vector<1x128x128xf32>
    %181 = arith.subf %173, %180 : vector<1x128x128xf32>
    %182 = vector.shape_cast %181 : vector<1x128x128xf32> to vector<128x128xf32>
    %c0_64 = arith.constant 0 : index
    %c0_65 = arith.constant 0 : index
    %183 = vector.load %arg6[%c0_64, %c0_65] : memref<1x128xf32, #tpu.memory_space<vmem>>, vector<1x128xf32>
    %cst_66 = arith.constant dense<0.000000e+00> : vector<128xf32>
    %184 = vector.multi_reduction <add>, %182, %cst_66 [0] : vector<128x128xf32> to vector<128xf32>
    %185 = vector.shape_cast %184 : vector<128xf32> to vector<1x128xf32>
    %186 = arith.addf %183, %185 : vector<1x128xf32>
    %c0_67 = arith.constant 0 : index
    %c0_68 = arith.constant 0 : index
    %187 = vector.load %arg6[%c0_67, %c0_68] : memref<1x128xf32, #tpu.memory_space<vmem>>, vector<1x128xf32>
    tpu.vector_store %arg6[%c0_67, %c0_68], %186 {strides = array<i32>} : memref<1x128xf32, #tpu.memory_space<vmem>>, vector<1x128xf32>,
    %188 = vector.extract_strided_slice %0 {offsets = [8, 0], sizes = [1, 128], strides = [1, 1]} : vector<16x128xf32> to vector<1x128xf32>
    %189 = vector.shape_cast %188 : vector<1x128xf32> to vector<1x128x1xf32>
    %190 = vector.extract_strided_slice %1 {offsets = [8, 0], sizes = [1, 128], strides = [1, 1]} : vector<16x128xf32> to vector<1x128xf32>
    %191 = vector.shape_cast %190 : vector<1x128xf32> to vector<1x1x128xf32>
    %192 = vector.broadcast %189 : vector<1x128x1xf32> to vector<1x128x128xf32>
    %193 = vector.broadcast %191 : vector<1x1x128xf32> to vector<1x128x128xf32>
    %194 = arith.mulf %192, %193 : vector<1x128x128xf32>
    %cst_69 = arith.constant 0.000000e+00 : f32
    %195 = vector.broadcast %cst_69 : f32 to vector<1x128x128xf32>
    %196 = arith.minimumf %194, %195 : vector<1x128x128xf32>
    %197 = math.absf %194 : vector<1x128x128xf32>
    %cst_70 = arith.constant 0.000000e+00 : f32
    %198 = vector.broadcast %cst_70 : f32 to vector<1x128x128xf32>
    %199 = arith.subf %198, %197 : vector<1x128x128xf32>
    %200 = math.exp %199 : vector<1x128x128xf32>
    %cst_71 = arith.constant 1.000000e+00 : f32
    %201 = vector.broadcast %cst_71 : f32 to vector<1x128x128xf32>
    %202 = arith.addf %201, %200 : vector<1x128x128xf32>
    %203 = math.log %202 : vector<1x128x128xf32>
    %204 = arith.subf %196, %203 : vector<1x128x128xf32>
    %205 = vector.shape_cast %204 : vector<1x128x128xf32> to vector<128x128xf32>
    %c0_72 = arith.constant 0 : index
    %c0_73 = arith.constant 0 : index
    %206 = vector.load %arg6[%c0_72, %c0_73] : memref<1x128xf32, #tpu.memory_space<vmem>>, vector<1x128xf32>
    %cst_74 = arith.constant dense<0.000000e+00> : vector<128xf32>
    %207 = vector.multi_reduction <add>, %205, %cst_74 [0] : vector<128x128xf32> to vector<128xf32>
    %208 = vector.shape_cast %207 : vector<128xf32> to vector<1x128xf32>
    %209 = arith.addf %206, %208 : vector<1x128xf32>
    %c0_75 = arith.constant 0 : index
    %c0_76 = arith.constant 0 : index
    %210 = vector.load %arg6[%c0_75, %c0_76] : memref<1x128xf32, #tpu.memory_space<vmem>>, vector<1x128xf32>
    tpu.vector_store %arg6[%c0_75, %c0_76], %209 {strides = array<i32>} : memref<1x128xf32, #tpu.memory_space<vmem>>, vector<1x128xf32>,
    %211 = vector.extract_strided_slice %0 {offsets = [9, 0], sizes = [1, 128], strides = [1, 1]} : vector<16x128xf32> to vector<1x128xf32>
    %212 = vector.shape_cast %211 : vector<1x128xf32> to vector<1x128x1xf32>
    %213 = vector.extract_strided_slice %1 {offsets = [9, 0], sizes = [1, 128], strides = [1, 1]} : vector<16x128xf32> to vector<1x128xf32>
    %214 = vector.shape_cast %213 : vector<1x128xf32> to vector<1x1x128xf32>
    %215 = vector.broadcast %212 : vector<1x128x1xf32> to vector<1x128x128xf32>
    %216 = vector.broadcast %214 : vector<1x1x128xf32> to vector<1x128x128xf32>
    %217 = arith.mulf %215, %216 : vector<1x128x128xf32>
    %cst_77 = arith.constant 0.000000e+00 : f32
    %218 = vector.broadcast %cst_77 : f32 to vector<1x128x128xf32>
    %219 = arith.minimumf %217, %218 : vector<1x128x128xf32>
    %220 = math.absf %217 : vector<1x128x128xf32>
    %cst_78 = arith.constant 0.000000e+00 : f32
    %221 = vector.broadcast %cst_78 : f32 to vector<1x128x128xf32>
    %222 = arith.subf %221, %220 : vector<1x128x128xf32>
    %223 = math.exp %222 : vector<1x128x128xf32>
    %cst_79 = arith.constant 1.000000e+00 : f32
    %224 = vector.broadcast %cst_79 : f32 to vector<1x128x128xf32>
    %225 = arith.addf %224, %223 : vector<1x128x128xf32>
    %226 = math.log %225 : vector<1x128x128xf32>
    %227 = arith.subf %219, %226 : vector<1x128x128xf32>
    %228 = vector.shape_cast %227 : vector<1x128x128xf32> to vector<128x128xf32>
    %c0_80 = arith.constant 0 : index
    %c0_81 = arith.constant 0 : index
    %229 = vector.load %arg6[%c0_80, %c0_81] : memref<1x128xf32, #tpu.memory_space<vmem>>, vector<1x128xf32>
    %cst_82 = arith.constant dense<0.000000e+00> : vector<128xf32>
    %230 = vector.multi_reduction <add>, %228, %cst_82 [0] : vector<128x128xf32> to vector<128xf32>
    %231 = vector.shape_cast %230 : vector<128xf32> to vector<1x128xf32>
    %232 = arith.addf %229, %231 : vector<1x128xf32>
    %c0_83 = arith.constant 0 : index
    %c0_84 = arith.constant 0 : index
    %233 = vector.load %arg6[%c0_83, %c0_84] : memref<1x128xf32, #tpu.memory_space<vmem>>, vector<1x128xf32>
    tpu.vector_store %arg6[%c0_83, %c0_84], %232 {strides = array<i32>} : memref<1x128xf32, #tpu.memory_space<vmem>>, vector<1x128xf32>,
    %234 = vector.extract_strided_slice %0 {offsets = [10, 0], sizes = [1, 128], strides = [1, 1]} : vector<16x128xf32> to vector<1x128xf32>
    %235 = vector.shape_cast %234 : vector<1x128xf32> to vector<1x128x1xf32>
    %236 = vector.extract_strided_slice %1 {offsets = [10, 0], sizes = [1, 128], strides = [1, 1]} : vector<16x128xf32> to vector<1x128xf32>
    %237 = vector.shape_cast %236 : vector<1x128xf32> to vector<1x1x128xf32>
    %238 = vector.broadcast %235 : vector<1x128x1xf32> to vector<1x128x128xf32>
    %239 = vector.broadcast %237 : vector<1x1x128xf32> to vector<1x128x128xf32>
    %240 = arith.mulf %238, %239 : vector<1x128x128xf32>
    %cst_85 = arith.constant 0.000000e+00 : f32
    %241 = vector.broadcast %cst_85 : f32 to vector<1x128x128xf32>
    %242 = arith.minimumf %240, %241 : vector<1x128x128xf32>
    %243 = math.absf %240 : vector<1x128x128xf32>
    %cst_86 = arith.constant 0.000000e+00 : f32
    %244 = vector.broadcast %cst_86 : f32 to vector<1x128x128xf32>
    %245 = arith.subf %244, %243 : vector<1x128x128xf32>
    %246 = math.exp %245 : vector<1x128x128xf32>
    %cst_87 = arith.constant 1.000000e+00 : f32
    %247 = vector.broadcast %cst_87 : f32 to vector<1x128x128xf32>
    %248 = arith.addf %247, %246 : vector<1x128x128xf32>
    %249 = math.log %248 : vector<1x128x128xf32>
    %250 = arith.subf %242, %249 : vector<1x128x128xf32>
    %251 = vector.shape_cast %250 : vector<1x128x128xf32> to vector<128x128xf32>
    %c0_88 = arith.constant 0 : index
    %c0_89 = arith.constant 0 : index
    %252 = vector.load %arg6[%c0_88, %c0_89] : memref<1x128xf32, #tpu.memory_space<vmem>>, vector<1x128xf32>
    %cst_90 = arith.constant dense<0.000000e+00> : vector<128xf32>
    %253 = vector.multi_reduction <add>, %251, %cst_90 [0] : vector<128x128xf32> to vector<128xf32>
    %254 = vector.shape_cast %253 : vector<128xf32> to vector<1x128xf32>
    %255 = arith.addf %252, %254 : vector<1x128xf32>
    %c0_91 = arith.constant 0 : index
    %c0_92 = arith.constant 0 : index
    %256 = vector.load %arg6[%c0_91, %c0_92] : memref<1x128xf32, #tpu.memory_space<vmem>>, vector<1x128xf32>
    tpu.vector_store %arg6[%c0_91, %c0_92], %255 {strides = array<i32>} : memref<1x128xf32, #tpu.memory_space<vmem>>, vector<1x128xf32>,
    %257 = vector.extract_strided_slice %0 {offsets = [11, 0], sizes = [1, 128], strides = [1, 1]} : vector<16x128xf32> to vector<1x128xf32>
    %258 = vector.shape_cast %257 : vector<1x128xf32> to vector<1x128x1xf32>
    %259 = vector.extract_strided_slice %1 {offsets = [11, 0], sizes = [1, 128], strides = [1, 1]} : vector<16x128xf32> to vector<1x128xf32>
    %260 = vector.shape_cast %259 : vector<1x128xf32> to vector<1x1x128xf32>
    %261 = vector.broadcast %258 : vector<1x128x1xf32> to vector<1x128x128xf32>
    %262 = vector.broadcast %260 : vector<1x1x128xf32> to vector<1x128x128xf32>
    %263 = arith.mulf %261, %262 : vector<1x128x128xf32>
    %cst_93 = arith.constant 0.000000e+00 : f32
    %264 = vector.broadcast %cst_93 : f32 to vector<1x128x128xf32>
    %265 = arith.minimumf %263, %264 : vector<1x128x128xf32>
    %266 = math.absf %263 : vector<1x128x128xf32>
    %cst_94 = arith.constant 0.000000e+00 : f32
    %267 = vector.broadcast %cst_94 : f32 to vector<1x128x128xf32>
    %268 = arith.subf %267, %266 : vector<1x128x128xf32>
    %269 = math.exp %268 : vector<1x128x128xf32>
    %cst_95 = arith.constant 1.000000e+00 : f32
    %270 = vector.broadcast %cst_95 : f32 to vector<1x128x128xf32>
    %271 = arith.addf %270, %269 : vector<1x128x128xf32>
    %272 = math.log %271 : vector<1x128x128xf32>
    %273 = arith.subf %265, %272 : vector<1x128x128xf32>
    %274 = vector.shape_cast %273 : vector<1x128x128xf32> to vector<128x128xf32>
    %c0_96 = arith.constant 0 : index
    %c0_97 = arith.constant 0 : index
    %275 = vector.load %arg6[%c0_96, %c0_97] : memref<1x128xf32, #tpu.memory_space<vmem>>, vector<1x128xf32>
    %cst_98 = arith.constant dense<0.000000e+00> : vector<128xf32>
    %276 = vector.multi_reduction <add>, %274, %cst_98 [0] : vector<128x128xf32> to vector<128xf32>
    %277 = vector.shape_cast %276 : vector<128xf32> to vector<1x128xf32>
    %278 = arith.addf %275, %277 : vector<1x128xf32>
    %c0_99 = arith.constant 0 : index
    %c0_100 = arith.constant 0 : index
    %279 = vector.load %arg6[%c0_99, %c0_100] : memref<1x128xf32, #tpu.memory_space<vmem>>, vector<1x128xf32>
    tpu.vector_store %arg6[%c0_99, %c0_100], %278 {strides = array<i32>} : memref<1x128xf32, #tpu.memory_space<vmem>>, vector<1x128xf32>,
    %280 = vector.extract_strided_slice %0 {offsets = [12, 0], sizes = [1, 128], strides = [1, 1]} : vector<16x128xf32> to vector<1x128xf32>
    %281 = vector.shape_cast %280 : vector<1x128xf32> to vector<1x128x1xf32>
    %282 = vector.extract_strided_slice %1 {offsets = [12, 0], sizes = [1, 128], strides = [1, 1]} : vector<16x128xf32> to vector<1x128xf32>
    %283 = vector.shape_cast %282 : vector<1x128xf32> to vector<1x1x128xf32>
    %284 = vector.broadcast %281 : vector<1x128x1xf32> to vector<1x128x128xf32>
    %285 = vector.broadcast %283 : vector<1x1x128xf32> to vector<1x128x128xf32>
    %286 = arith.mulf %284, %285 : vector<1x128x128xf32>
    %cst_101 = arith.constant 0.000000e+00 : f32
    %287 = vector.broadcast %cst_101 : f32 to vector<1x128x128xf32>
    %288 = arith.minimumf %286, %287 : vector<1x128x128xf32>
    %289 = math.absf %286 : vector<1x128x128xf32>
    %cst_102 = arith.constant 0.000000e+00 : f32
    %290 = vector.broadcast %cst_102 : f32 to vector<1x128x128xf32>
    %291 = arith.subf %290, %289 : vector<1x128x128xf32>
    %292 = math.exp %291 : vector<1x128x128xf32>
    %cst_103 = arith.constant 1.000000e+00 : f32
    %293 = vector.broadcast %cst_103 : f32 to vector<1x128x128xf32>
    %294 = arith.addf %293, %292 : vector<1x128x128xf32>
    %295 = math.log %294 : vector<1x128x128xf32>
    %296 = arith.subf %288, %295 : vector<1x128x128xf32>
    %297 = vector.shape_cast %296 : vector<1x128x128xf32> to vector<128x128xf32>
    %c0_104 = arith.constant 0 : index
    %c0_105 = arith.constant 0 : index
    %298 = vector.load %arg6[%c0_104, %c0_105] : memref<1x128xf32, #tpu.memory_space<vmem>>, vector<1x128xf32>
    %cst_106 = arith.constant dense<0.000000e+00> : vector<128xf32>
    %299 = vector.multi_reduction <add>, %297, %cst_106 [0] : vector<128x128xf32> to vector<128xf32>
    %300 = vector.shape_cast %299 : vector<128xf32> to vector<1x128xf32>
    %301 = arith.addf %298, %300 : vector<1x128xf32>
    %c0_107 = arith.constant 0 : index
    %c0_108 = arith.constant 0 : index
    %302 = vector.load %arg6[%c0_107, %c0_108] : memref<1x128xf32, #tpu.memory_space<vmem>>, vector<1x128xf32>
    tpu.vector_store %arg6[%c0_107, %c0_108], %301 {strides = array<i32>} : memref<1x128xf32, #tpu.memory_space<vmem>>, vector<1x128xf32>,
    %303 = vector.extract_strided_slice %0 {offsets = [13, 0], sizes = [1, 128], strides = [1, 1]} : vector<16x128xf32> to vector<1x128xf32>
    %304 = vector.shape_cast %303 : vector<1x128xf32> to vector<1x128x1xf32>
    %305 = vector.extract_strided_slice %1 {offsets = [13, 0], sizes = [1, 128], strides = [1, 1]} : vector<16x128xf32> to vector<1x128xf32>
    %306 = vector.shape_cast %305 : vector<1x128xf32> to vector<1x1x128xf32>
    %307 = vector.broadcast %304 : vector<1x128x1xf32> to vector<1x128x128xf32>
    %308 = vector.broadcast %306 : vector<1x1x128xf32> to vector<1x128x128xf32>
    %309 = arith.mulf %307, %308 : vector<1x128x128xf32>
    %cst_109 = arith.constant 0.000000e+00 : f32
    %310 = vector.broadcast %cst_109 : f32 to vector<1x128x128xf32>
    %311 = arith.minimumf %309, %310 : vector<1x128x128xf32>
    %312 = math.absf %309 : vector<1x128x128xf32>
    %cst_110 = arith.constant 0.000000e+00 : f32
    %313 = vector.broadcast %cst_110 : f32 to vector<1x128x128xf32>
    %314 = arith.subf %313, %312 : vector<1x128x128xf32>
    %315 = math.exp %314 : vector<1x128x128xf32>
    %cst_111 = arith.constant 1.000000e+00 : f32
    %316 = vector.broadcast %cst_111 : f32 to vector<1x128x128xf32>
    %317 = arith.addf %316, %315 : vector<1x128x128xf32>
    %318 = math.log %317 : vector<1x128x128xf32>
    %319 = arith.subf %311, %318 : vector<1x128x128xf32>
    %320 = vector.shape_cast %319 : vector<1x128x128xf32> to vector<128x128xf32>
    %c0_112 = arith.constant 0 : index
    %c0_113 = arith.constant 0 : index
    %321 = vector.load %arg6[%c0_112, %c0_113] : memref<1x128xf32, #tpu.memory_space<vmem>>, vector<1x128xf32>
    %cst_114 = arith.constant dense<0.000000e+00> : vector<128xf32>
    %322 = vector.multi_reduction <add>, %320, %cst_114 [0] : vector<128x128xf32> to vector<128xf32>
    %323 = vector.shape_cast %322 : vector<128xf32> to vector<1x128xf32>
    %324 = arith.addf %321, %323 : vector<1x128xf32>
    %c0_115 = arith.constant 0 : index
    %c0_116 = arith.constant 0 : index
    %325 = vector.load %arg6[%c0_115, %c0_116] : memref<1x128xf32, #tpu.memory_space<vmem>>, vector<1x128xf32>
    tpu.vector_store %arg6[%c0_115, %c0_116], %324 {strides = array<i32>} : memref<1x128xf32, #tpu.memory_space<vmem>>, vector<1x128xf32>,
    %326 = vector.extract_strided_slice %0 {offsets = [14, 0], sizes = [1, 128], strides = [1, 1]} : vector<16x128xf32> to vector<1x128xf32>
    %327 = vector.shape_cast %326 : vector<1x128xf32> to vector<1x128x1xf32>
    %328 = vector.extract_strided_slice %1 {offsets = [14, 0], sizes = [1, 128], strides = [1, 1]} : vector<16x128xf32> to vector<1x128xf32>
    %329 = vector.shape_cast %328 : vector<1x128xf32> to vector<1x1x128xf32>
    %330 = vector.broadcast %327 : vector<1x128x1xf32> to vector<1x128x128xf32>
    %331 = vector.broadcast %329 : vector<1x1x128xf32> to vector<1x128x128xf32>
    %332 = arith.mulf %330, %331 : vector<1x128x128xf32>
    %cst_117 = arith.constant 0.000000e+00 : f32
    %333 = vector.broadcast %cst_117 : f32 to vector<1x128x128xf32>
    %334 = arith.minimumf %332, %333 : vector<1x128x128xf32>
    %335 = math.absf %332 : vector<1x128x128xf32>
    %cst_118 = arith.constant 0.000000e+00 : f32
    %336 = vector.broadcast %cst_118 : f32 to vector<1x128x128xf32>
    %337 = arith.subf %336, %335 : vector<1x128x128xf32>
    %338 = math.exp %337 : vector<1x128x128xf32>
    %cst_119 = arith.constant 1.000000e+00 : f32
    %339 = vector.broadcast %cst_119 : f32 to vector<1x128x128xf32>
    %340 = arith.addf %339, %338 : vector<1x128x128xf32>
    %341 = math.log %340 : vector<1x128x128xf32>
    %342 = arith.subf %334, %341 : vector<1x128x128xf32>
    %343 = vector.shape_cast %342 : vector<1x128x128xf32> to vector<128x128xf32>
    %c0_120 = arith.constant 0 : index
    %c0_121 = arith.constant 0 : index
    %344 = vector.load %arg6[%c0_120, %c0_121] : memref<1x128xf32, #tpu.memory_space<vmem>>, vector<1x128xf32>
    %cst_122 = arith.constant dense<0.000000e+00> : vector<128xf32>
    %345 = vector.multi_reduction <add>, %343, %cst_122 [0] : vector<128x128xf32> to vector<128xf32>
    %346 = vector.shape_cast %345 : vector<128xf32> to vector<1x128xf32>
    %347 = arith.addf %344, %346 : vector<1x128xf32>
    %c0_123 = arith.constant 0 : index
    %c0_124 = arith.constant 0 : index
    %348 = vector.load %arg6[%c0_123, %c0_124] : memref<1x128xf32, #tpu.memory_space<vmem>>, vector<1x128xf32>
    tpu.vector_store %arg6[%c0_123, %c0_124], %347 {strides = array<i32>} : memref<1x128xf32, #tpu.memory_space<vmem>>, vector<1x128xf32>,
    %349 = vector.extract_strided_slice %0 {offsets = [15, 0], sizes = [1, 128], strides = [1, 1]} : vector<16x128xf32> to vector<1x128xf32>
    %350 = vector.shape_cast %349 : vector<1x128xf32> to vector<1x128x1xf32>
    %351 = vector.extract_strided_slice %1 {offsets = [15, 0], sizes = [1, 128], strides = [1, 1]} : vector<16x128xf32> to vector<1x128xf32>
    %352 = vector.shape_cast %351 : vector<1x128xf32> to vector<1x1x128xf32>
    %353 = vector.broadcast %350 : vector<1x128x1xf32> to vector<1x128x128xf32>
    %354 = vector.broadcast %352 : vector<1x1x128xf32> to vector<1x128x128xf32>
    %355 = arith.mulf %353, %354 : vector<1x128x128xf32>
    %cst_125 = arith.constant 0.000000e+00 : f32
    %356 = vector.broadcast %cst_125 : f32 to vector<1x128x128xf32>
    %357 = arith.minimumf %355, %356 : vector<1x128x128xf32>
    %358 = math.absf %355 : vector<1x128x128xf32>
    %cst_126 = arith.constant 0.000000e+00 : f32
    %359 = vector.broadcast %cst_126 : f32 to vector<1x128x128xf32>
    %360 = arith.subf %359, %358 : vector<1x128x128xf32>
    %361 = math.exp %360 : vector<1x128x128xf32>
    %cst_127 = arith.constant 1.000000e+00 : f32
    %362 = vector.broadcast %cst_127 : f32 to vector<1x128x128xf32>
    %363 = arith.addf %362, %361 : vector<1x128x128xf32>
    %364 = math.log %363 : vector<1x128x128xf32>
    %365 = arith.subf %357, %364 : vector<1x128x128xf32>
    %366 = vector.shape_cast %365 : vector<1x128x128xf32> to vector<128x128xf32>
    %c0_128 = arith.constant 0 : index
    %c0_129 = arith.constant 0 : index
    %367 = vector.load %arg6[%c0_128, %c0_129] : memref<1x128xf32, #tpu.memory_space<vmem>>, vector<1x128xf32>
    %cst_130 = arith.constant dense<0.000000e+00> : vector<128xf32>
    %368 = vector.multi_reduction <add>, %366, %cst_130 [0] : vector<128x128xf32> to vector<128xf32>
    %369 = vector.shape_cast %368 : vector<128xf32> to vector<1x128xf32>
    %370 = arith.addf %367, %369 : vector<1x128xf32>
    %c0_131 = arith.constant 0 : index
    %c0_132 = arith.constant 0 : index
    %371 = vector.load %arg6[%c0_131, %c0_132] : memref<1x128xf32, #tpu.memory_space<vmem>>, vector<1x128xf32>
    tpu.vector_store %arg6[%c0_131, %c0_132], %370 {strides = array<i32>} : memref<1x128xf32, #tpu.memory_space<vmem>>, vector<1x128xf32>,
    %c0_133 = arith.constant 0 : index
    %c0_134 = arith.constant 0 : index
    %c0_135 = arith.constant 0 : index
    %372 = vector.load %arg3[%c0_133, %c0_134, %c0_135] : memref<16x16x128xf32, #tpu.memory_space<vmem>>, vector<16x16x128xf32>
    %373 = vector.shape_cast %0 : vector<16x128xf32> to vector<16x1x128xf32>
    %374 = vector.broadcast %373 : vector<16x1x128xf32> to vector<16x16x128xf32>
    %375 = arith.mulf %372, %374 : vector<16x16x128xf32>
    %cst_136 = arith.constant dense<0.000000e+00> : vector<16x16xf32>
    %376 = vector.multi_reduction <add>, %375, %cst_136 [2] : vector<16x16x128xf32> to vector<16x16xf32>
    %c0_137 = arith.constant 0 : index
    %c0_138 = arith.constant 0 : index
    %377 = vector.load %arg6[%c0_137, %c0_138] : memref<1x128xf32, #tpu.memory_space<vmem>>, vector<1x128xf32>
    %378 = vector.shape_cast %377 : vector<1x128xf32> to vector<1x1x128xf32>
    %c0_139 = arith.constant 0 : index
    %c0_140 = arith.constant 0 : index
    %c0_141 = arith.constant 0 : index
    %379 = vector.load %arg4[%c0_139, %c0_140, %c0_141] : memref<1x1x128xf32, #tpu.memory_space<vmem>>, vector<1x1x128xf32>
    tpu.vector_store %arg4[%c0_139, %c0_140, %c0_141], %378 {strides = array<i32>} : memref<1x1x128xf32, #tpu.memory_space<vmem>>, vector<1x1x128xf32>,
    %cst_142 = arith.constant 0.000000e+00 : f32
    %380 = vector.broadcast %cst_142 : f32 to vector<16x16xf32>
    %381 = arith.minimumf %376, %380 : vector<16x16xf32>
    %382 = math.absf %376 : vector<16x16xf32>
    %cst_143 = arith.constant 0.000000e+00 : f32
    %383 = vector.broadcast %cst_143 : f32 to vector<16x16xf32>
    %384 = arith.subf %383, %382 : vector<16x16xf32>
    %385 = math.exp %384 : vector<16x16xf32>
    %cst_144 = arith.constant 1.000000e+00 : f32
    %386 = vector.broadcast %cst_144 : f32 to vector<16x16xf32>
    %387 = arith.addf %386, %385 : vector<16x16xf32>
    %388 = math.log %387 : vector<16x16xf32>
    %389 = arith.subf %381, %388 : vector<16x16xf32>
    %390 = vector.shape_cast %389 : vector<16x16xf32> to vector<1x16x16xf32>
    %c0_145 = arith.constant 0 : index
    %c0_146 = arith.constant 0 : index
    %c0_147 = arith.constant 0 : index
    %391 = vector.load %arg5[%c0_145, %c0_146, %c0_147] : memref<1x16x16xf32, #tpu.memory_space<vmem>>, vector<1x16x16xf32>
    tpu.vector_store %arg5[%c0_145, %c0_146, %c0_147], %390 {strides = array<i32>} : memref<1x16x16xf32, #tpu.memory_space<vmem>>, vector<1x16x16xf32>,
    return
  }
  func.func @transform_0(%arg0: i32) -> (i32, i32) {
    %c0_i32 = arith.constant 0 : i32
    %c0_i32_0 = arith.constant 0 : i32
    return %arg0, %c0_i32 : i32, i32
  }
  func.func @transform_1(%arg0: i32) -> (i32, i32) {
    %c0_i32 = arith.constant 0 : i32
    %c0_i32_0 = arith.constant 0 : i32
    return %arg0, %c0_i32 : i32, i32
  }
  func.func @transform_2(%arg0: i32) -> (i32, i32, i32) {
    %c0_i32 = arith.constant 0 : i32
    %c0_i32_0 = arith.constant 0 : i32
    %c0_i32_1 = arith.constant 0 : i32
    return %arg0, %c0_i32, %c0_i32_0 : i32, i32, i32
  }
  func.func @transform_3(%arg0: i32) -> (i32, i32, i32) {
    %c0_i32 = arith.constant 0 : i32
    %c0_i32_0 = arith.constant 0 : i32
    %c0_i32_1 = arith.constant 0 : i32
    return %arg0, %c0_i32, %c0_i32_0 : i32, i32, i32
  }
  func.func @transform_4(%arg0: i32) -> (i32, i32, i32) {
    %c0_i32 = arith.constant 0 : i32
    %c0_i32_0 = arith.constant 0 : i32
    %c0_i32_1 = arith.constant 0 : i32
    return %arg0, %c0_i32, %c0_i32_0 : i32, i32, i32
  }
}

</mosaic_0001>

<llo_original>
// kernel: negative_loss.1
$region0: #{negative_loss.1}
  #allocation0 [shape = 'u32[]', space=smem, size = 0x4, offset = 0x4, fixed_abs, tag = 'smem constant byte address 0x4 - core index']
  #allocation1 [shape = 'u32[144,128]{1,0:T(1,128)}', space=vmem, size = 0x12000, scoped, tag = 'internal scratch']
  #allocation2 [shape = 'f32[1,128]{1,0:T(1,128)}', space=vmem, size = 0x200, scoped, tag = 'scratch operand']
  %s0 = inlined_call_operand.hbm [shape: f32[32,128], index: 0, kind: input, shape index: {}]
  %s1 = inlined_call_operand.hbm [shape: f32[32,128], index: 1, kind: input, shape index: {}]
  %s2 = inlined_call_operand.hbm [shape: f32[32,16,128], index: 2, kind: input, shape index: {}]
  %s3 = inlined_call_operand.vmem [shape: f32[2,1,128], index: 3, kind: output, shape index: {0}]
  %s4 = inlined_call_operand.vmem [shape: f32[2,16,16], index: 4, kind: output, shape index: {1}]
  %5 = xla_tuple %s3, %s4
  %s6 = sld [smem:[#allocation0]]
  $region65: #{negative_loss.1} parent=0
    _
  %s8 = ssub.s32 1, %s6
  %s9 = scalar_select 0, %s8, %s6
  $region1: #{negative_loss.1} parent=0
    #allocation3 [shape = 'u8[16384]{0}', space=vmem, size = 0x4000, scoped, tag = 'input window, operand 0']
    #allocation4 [shape = 's32[2]{0}', space=sflag, size = 0x8, scoped, tag = 'scoped memory for negative_loss.1']
    #allocation5 [shape = 'u8[16384]{0}', space=vmem, size = 0x4000, scoped, tag = 'input window, operand 1']
    #allocation6 [shape = 's32[2]{0}', space=sflag, size = 0x8, scoped, tag = 'scoped memory for negative_loss.1']
    #allocation7 [shape = 'u8[262144]{0}', space=vmem, size = 0x40000, scoped, tag = 'input window, operand 2']
    %10 = vsyncpa [#allocation4], 0
    %s11 = scalar_lea.sflag [#allocation4], 1
    %12 = vsyncpa %s11, 0
    %13 = vsyncpa [#allocation6], 0
    %s14 = scalar_lea.sflag [#allocation6], 1
    %15 = vsyncpa %s14, 0
    loop: start=0, step=1, limit=4
    $region2: #{negative_loss.1} parent=1 // loop_pre_header
      _
    $region3: #{negative_loss.1} parent=1 // loop_header
      %s17 = sphi 0, %s21
      %p18 = scmp.ge.s32.totalorder %s17, 4
      %s27 = sphi 0, %s29
      %s30 = sphi 0, %s27
      %s31 = sphi 0, %s30
      %s47 = sphi 0, %s31
      %s53 = sphi 0, %s55
      %s56 = sphi 0, %s53
      %s57 = sphi 0, %s56
      %s73 = sphi 0, %s57
      %s79 = sphi 0, %s81
      %s82 = sphi 0, %s79
      %s83 = sphi 0, %s82
      %s99 = sphi 0, %s83
      %s105 = sphi 0, %s107
      %s108 = sphi 0, %s105
      %s109 = sphi 0, %s108
      %s125 = sphi 0, %s109
      %s131 = sphi 0, %s133
      %s134 = sphi 0, %s131
      %s135 = sphi 0, %s134
      %s151 = sphi 0, %s135
    $region4: #{negative_loss.1} parent=1 // loop_header_branch
      %20 = sbr.rel (%p18) target = $region8
    $region5: #{negative_loss.1} parent=1 // loop_body
      %s22 = ssub.s32 %s17, 1
      %s23 = ssub.s32 %s17, 2
      %s24 = sadd.s32 %s17, 1
      %s25 = ssub.s32 %s17, %s24
      %p26 = scmp.eq.s32.totalorder %s25, 0
      %s28 = sadd.s32 %s27, 1
      %s29 = scalar_select %p26, %s27, %s28
      %p32 = pneg %p26
      %p33 = scmp.eq.s32.totalorder %s17, 1
      %p34 = por %p32, %p33
      %p35 = scmp.ne.s32.totalorder %s27, %s30
      %p36 = scmp.eq.s32.totalorder %s17, 0
      %p37 = por %p35, %p36
      %p38 = scmp.ne.s32.totalorder %s27, %s30
      %p39 = scmp.eq.s32.totalorder %s22, 1
      %p40 = por %p38, %p39
      %p41 = scmp.ne.s32.totalorder %s30, %s31
      %p42 = scmp.eq.s32.totalorder %s22, 0
      %p43 = por %p41, %p42
      %p44 = scmp.ne.s32.totalorder %s30, %s31
      %p45 = scmp.eq.s32.totalorder %s23, 1
      %p46 = por %p44, %p45
      %p48 = scmp.ne.s32.totalorder %s31, %s47
      %p49 = scmp.eq.s32.totalorder %s23, 0
      %p50 = por %p48, %p49
      %s51 = ssub.s32 %s17, %s24
      %p52 = scmp.eq.s32.totalorder %s51, 0
      %s54 = sadd.s32 %s53, 1
      %s55 = scalar_select %p52, %s53, %s54
      %p58 = pneg %p52
      %p59 = scmp.eq.s32.totalorder %s17, 1
      %p60 = por %p58, %p59
      %p61 = scmp.ne.s32.totalorder %s53, %s56
      %p62 = scmp.eq.s32.totalorder %s17, 0
      %p63 = por %p61, %p62
      %p64 = scmp.ne.s32.totalorder %s53, %s56
      %p65 = scmp.eq.s32.totalorder %s22, 1
      %p66 = por %p64, %p65
      %p67 = scmp.ne.s32.totalorder %s56, %s57
      %p68 = scmp.eq.s32.totalorder %s22, 0
      %p69 = por %p67, %p68
      %p70 = scmp.ne.s32.totalorder %s56, %s57
      %p71 = scmp.eq.s32.totalorder %s23, 1
      %p72 = por %p70, %p71
      %p74 = scmp.ne.s32.totalorder %s57, %s73
      %p75 = scmp.eq.s32.totalorder %s23, 0
      %p76 = por %p74, %p75
      %s77 = ssub.s32 %s17, %s24
      %p78 = scmp.eq.s32.totalorder %s77, 0
      %s80 = sadd.s32 %s79, 1
      %s81 = scalar_select %p78, %s79, %s80
      %p84 = pneg %p78
      %p85 = scmp.eq.s32.totalorder %s17, 1
      %p86 = por %p84, %p85
      %p87 = scmp.ne.s32.totalorder %s79, %s82
      %p88 = scmp.eq.s32.totalorder %s17, 0
      %p89 = por %p87, %p88
      %p90 = scmp.ne.s32.totalorder %s79, %s82
      %p91 = scmp.eq.s32.totalorder %s22, 1
      %p92 = por %p90, %p91
      %p93 = scmp.ne.s32.totalorder %s82, %s83
      %p94 = scmp.eq.s32.totalorder %s22, 0
      %p95 = por %p93, %p94
      %p96 = scmp.ne.s32.totalorder %s82, %s83
      %p97 = scmp.eq.s32.totalorder %s23, 1
      %p98 = por %p96, %p97
      %p100 = scmp.ne.s32.totalorder %s83, %s99
      %p101 = scmp.eq.s32.totalorder %s23, 0
      %p102 = por %p100, %p101
      %s103 = ssub.s32 %s17, %s24
      %p104 = scmp.eq.s32.totalorder %s103, 0
      %s106 = sadd.s32 %s105, 1
      %s107 = scalar_select %p104, %s105, %s106
      %p110 = pneg %p104
      %p111 = scmp.eq.s32.totalorder %s17, 1
      %p112 = por %p110, %p111
      %p113 = scmp.ne.s32.totalorder %s105, %s108
      %p114 = scmp.eq.s32.totalorder %s17, 0
      %p115 = por %p113, %p114
      %p116 = scmp.ne.s32.totalorder %s105, %s108
      %p117 = scmp.eq.s32.totalorder %s22, 1
      %p118 = por %p116, %p117
      %p119 = scmp.ne.s32.totalorder %s108, %s109
      %p120 = scmp.eq.s32.totalorder %s22, 0
      %p121 = por %p119, %p120
      %p122 = scmp.ne.s32.totalorder %s108, %s109
      %p123 = scmp.eq.s32.totalorder %s23, 1
      %p124 = por %p122, %p123
      %p126 = scmp.ne.s32.totalorder %s109, %s125
      %p127 = scmp.eq.s32.totalorder %s23, 0
      %p128 = por %p126, %p127
      %s129 = ssub.s32 %s17, %s24
      %p130 = scmp.eq.s32.totalorder %s129, 0
      %s132 = sadd.s32 %s131, 1
      %s133 = scalar_select %p130, %s131, %s132
      %p136 = pneg %p130
      %p137 = scmp.eq.s32.totalorder %s17, 1
      %p138 = por %p136, %p137
      %p139 = scmp.ne.s32.totalorder %s131, %s134
      %p140 = scmp.eq.s32.totalorder %s17, 0
      %p141 = por %p139, %p140
      %p142 = scmp.ne.s32.totalorder %s131, %s134
      %p143 = scmp.eq.s32.totalorder %s22, 1
      %p144 = por %p142, %p143
      %p145 = scmp.ne.s32.totalorder %s134, %s135
      %p146 = scmp.eq.s32.totalorder %s22, 0
      %p147 = por %p145, %p146
      %p148 = scmp.ne.s32.totalorder %s134, %s135
      %p149 = scmp.eq.s32.totalorder %s23, 1
      %p150 = por %p148, %p149
      %p152 = scmp.ne.s32.totalorder %s135, %s151
      %p153 = scmp.eq.s32.totalorder %s23, 0
      %p154 = por %p152, %p153
      %p155 = scmp.le.s32.totalorder 1, %s17
      %p156 = scmp.lt.s32.totalorder %s17, 3
      %p157 = pnand %p155, %p156
      %p158 = pneg %p157
      // Predicated region
      $region9: #{negative_loss.1} parent=5 // pred_check
        _
      $region10: #{negative_loss.1} parent=5 // pred_check_branch
        %160 = sbr.rel (%p157) target = $region12
      $region11: #{negative_loss.1} parent=5 // pred_region
        %s161 = ssub.s32 %s17, 1
      $region12: #{negative_loss.1} parent=5 // pred_fallthru
        _
      %p162 = scmp.lt.s32.totalorder %s17, 2
      // Predicated region
      $region13: #{negative_loss.1} parent=5 // pred_check
        %p163 = pneg %p162
      $region14: #{negative_loss.1} parent=5 // pred_check_branch
        %165 = sbr.rel (%p163) target = $region16
      $region15: #{negative_loss.1} parent=5 // pred_region
        // Predicated region
        $region17: #{negative_loss.1} parent=15 // pred_check
          %p166 = pneg %p37
        $region18: #{negative_loss.1} parent=15 // pred_check_branch
          %168 = sbr.rel (%p166) target = $region20
        $region19: #{negative_loss.1} parent=15 // pred_region
          %s169 = sand.u32 %s27, 1
          %s170 = scalar_lea.sflag [#allocation4], %s169
          %s171 = sand.u32 %s27, 1
          %s172 = smul.addr %s171, 16
          %s173 = scalar_lea.vmem [#allocation3], %s172
          %s174 = smul.u32 2, %s17
          %s176 = ssub.s32 256, 256
          %177 = vsyncadd %s170, %s176
          %s178 = smul.addr %s174, 128
          %s179 = scalar_lea.hbm %s0, %s178
          %s180 = sshll.u32 %s173, 4
          %s181 = int_to_ptr.vmem [resolvable:$true] %s180
          %186 = dma.hbm_to_vmem [thread:$0]  %s179, 256, %s181, %s170, 128, 128, 8
        $region20: #{negative_loss.1} parent=15 // pred_fallthru
          _
        // Predicated region
        $region21: #{negative_loss.1} parent=15 // pred_check
          %p187 = pneg %p63
        $region22: #{negative_loss.1} parent=15 // pred_check_branch
          %189 = sbr.rel (%p187) target = $region24
        $region23: #{negative_loss.1} parent=15 // pred_region
          %s190 = sand.u32 %s17, 1
          %s191 = scalar_lea.sflag [#allocation6], %s190
          %s192 = sand.u32 %s53, 1
          %s193 = smul.addr %s192, 16
          %s194 = scalar_lea.vmem [#allocation5], %s193
          %s195 = smul.u32 2, %s17
          %s197 = ssub.s32 256, 256
          %198 = vsyncadd %s191, %s197
          %s199 = smul.addr %s195, 128
          %s200 = scalar_lea.hbm %s1, %s199
          %s201 = sshll.u32 %s194, 4
          %s202 = int_to_ptr.vmem [resolvable:$true] %s201
          %207 = dma.hbm_to_vmem [thread:$0]  %s200, 256, %s202, %s191, 128, 128, 8
        $region24: #{negative_loss.1} parent=15 // pred_fallthru
          _
        // Predicated region
        $region25: #{negative_loss.1} parent=15 // pred_check
          %p208 = pneg %p89
        $region26: #{negative_loss.1} parent=15 // pred_check_branch
          %210 = sbr.rel (%p208) target = $region28
        $region27: #{negative_loss.1} parent=15 // pred_region
          %s211 = sand.u32 %s17, 1
          %s212 = scalar_lea.sflag [#allocation6], %s211
          %s213 = sand.u32 %s79, 1
          %s214 = smul.addr %s213, 256
          %s215 = scalar_lea.vmem [#allocation7], %s214
          %s216 = smul.u32 16, %s17
          %s218 = ssub.s32 4096, 4096
          %219 = vsyncadd %s212, %s218
          %s220 = smul.addr %s216, 2
          %s221 = smul.addr %s220, 128
          %s222 = scalar_lea.hbm %s2, %s221
          %s223 = sshll.u32 %s215, 4
          %s224 = int_to_ptr.vmem [resolvable:$true] %s223
          %229 = dma.hbm_to_vmem [thread:$0]  %s222, 4096, %s224, %s212, 128, 128, 8
        $region28: #{negative_loss.1} parent=15 // pred_fallthru
          _
      $region16: #{negative_loss.1} parent=5 // pred_fallthru
        _
      %p230 = scmp.le.s32.totalorder 1, %s17
      %p231 = scmp.lt.s32.totalorder %s17, 3
      %p232 = pnand %p230, %p231
      %p233 = pneg %p232
      // Predicated region
      $region29: #{negative_loss.1} parent=5 // pred_check
        _
      $region30: #{negative_loss.1} parent=5 // pred_check_branch
        %235 = sbr.rel (%p232) target = $region32
      $region31: #{negative_loss.1} parent=5 // pred_region
        %s236 = ssub.s32 %s17, 1
        %s237 = sand.u32 %s30, 1
        %s238 = scalar_lea.sflag [#allocation4], %s237
        %s239 = sand.u32 %s30, 1
        %s240 = smul.addr %s239, 16
        %s241 = scalar_lea.vmem [#allocation3], %s240
        // Predicated region
        $region33: #{negative_loss.1} parent=31 // pred_check
          %p242 = pneg %p43
        $region34: #{negative_loss.1} parent=31 // pred_check_branch
          %244 = sbr.rel (%p242) target = $region36
        $region35: #{negative_loss.1} parent=31 // pred_region
          %245 = dma.done %s238, 256
        $region36: #{negative_loss.1} parent=31 // pred_fallthru
          _
        %s246 = sand.u32 %s22, 1
        %s247 = scalar_lea.sflag [#allocation6], %s246
        %s248 = sand.u32 %s56, 1
        %s249 = smul.addr %s248, 16
        %s250 = scalar_lea.vmem [#allocation5], %s249
        // Predicated region
        $region37: #{negative_loss.1} parent=31 // pred_check
          %p251 = pneg %p69
        $region38: #{negative_loss.1} parent=31 // pred_check_branch
          %253 = sbr.rel (%p251) target = $region40
        $region39: #{negative_loss.1} parent=31 // pred_region
          %254 = dma.done %s247, 256
        $region40: #{negative_loss.1} parent=31 // pred_fallthru
          _
        %s255 = sand.u32 %s22, 1
        %s256 = scalar_lea.sflag [#allocation6], %s255
        %s257 = sand.u32 %s82, 1
        %s258 = smul.addr %s257, 256
        %s259 = scalar_lea.vmem [#allocation7], %s258
        // Predicated region
        $region41: #{negative_loss.1} parent=31 // pred_check
          %p260 = pneg %p95
        $region42: #{negative_loss.1} parent=31 // pred_check_branch
          %262 = sbr.rel (%p260) target = $region44
        $region43: #{negative_loss.1} parent=31 // pred_region
          %263 = dma.done %s256, 4096
        $region44: #{negative_loss.1} parent=31 // pred_fallthru
          _
        %s264 = sand.u32 %s30, 1
        %s265 = scalar_lea.sflag [#allocation4], %s264
        %s266 = sand.u32 %s30, 1
        %s267 = smul.addr %s266, 16
        %s268 = scalar_lea.vmem [#allocation3], %s267
        %p269 = pneg %p43
        %p270 = pneg %p40
        %s271 = sand.u32 %s22, 1
        %s272 = scalar_lea.sflag [#allocation6], %s271
        %s273 = sand.u32 %s56, 1
        %s274 = smul.addr %s273, 16
        %s275 = scalar_lea.vmem [#allocation5], %s274
        %p276 = pneg %p69
        %p277 = pneg %p66
        %s278 = sand.u32 %s22, 1
        %s279 = scalar_lea.sflag [#allocation6], %s278
        %s280 = sand.u32 %s82, 1
        %s281 = smul.addr %s280, 256
        %s282 = scalar_lea.vmem [#allocation7], %s281
        %p283 = pneg %p95
        %p284 = pneg %p92
        %p285 = pneg %p121
        %p286 = pneg %p118
        %p287 = scmp.lt.s32.totalorder %s22, 1
        %s288 = scalar_select %p287, %s22, 1
        %s289 = scalar_lea.vmem %s3, %s288
        %p290 = pneg %p147
        %p291 = pneg %p144
        %p292 = scmp.lt.s32.totalorder %s22, 1
        %s293 = scalar_select %p292, %s22, 1
        %s294 = smul.addr %s293, 2
        %s295 = smul.addr %s294, 8
        %s296 = scalar_lea.vmem %s4, %s295
        %s297 = smul.u32 2, %s22
        %s298 = smul.u32 2, %s22
        %s299 = smul.u32 16, %s22
        %p300 = scmp.lt.s32.totalorder %s22, 1
        %s301 = scalar_select %p300, %s22, 1
        %s302 = scalar_lea.vmem %s3, %s301
        %p303 = scmp.lt.s32.totalorder %s22, 1
        %s304 = scalar_select %p303, %s22, 1
        %s305 = smul.addr %s304, 2
        %s306 = smul.addr %s305, 8
        %s307 = scalar_lea.vmem %s4, %s306
        %v308 = vld [vmem:[%s241] sm:$0xff]
        %v309 = vld [vmem:[%s241 + $0x8] sm:$0xff]
        %v310 = vld [vmem:[%s250] sm:$0xff]
        %v311 = vld [vmem:[%s250 + $0x8] sm:$0xff]
        %312 = vst [vmem:[#allocation2] sm:$0x1] 0.0
        %v313 = vlaneseq
        %v314 = vshrl.u32 %v313, 7
        %v315 = vsub.s32 0, %v314
        %v316 = vrot.slane %v308, %v315
        %318 = vbcast.lane.b32.xlu0 %v316, 256
        %v319 = vpop.permute.xlu0 %318
        %s321 = sor.u32 256, 8
        %322 = vbcast.lane.b32.xlu0 %v316, %s321
        %v323 = vpop.permute.xlu0 %322
        %s325 = sor.u32 256, 16
        %326 = vbcast.lane.b32.xlu0 %v316, %s325
        %v327 = vpop.permute.xlu0 %326
        %s329 = sor.u32 256, 24
        %330 = vbcast.lane.b32.xlu0 %v316, %s329
        %v331 = vpop.permute.xlu0 %330
        %s333 = sor.u32 256, 32
        %334 = vbcast.lane.b32.xlu0 %v316, %s333
        %v335 = vpop.permute.xlu0 %334
        %s337 = sor.u32 256, 40
        %338 = vbcast.lane.b32.xlu0 %v316, %s337
        %v339 = vpop.permute.xlu0 %338
        %s341 = sor.u32 256, 48
        %342 = vbcast.lane.b32.xlu0 %v316, %s341
        %v343 = vpop.permute.xlu0 %342
        %s345 = sor.u32 256, 56
        %346 = vbcast.lane.b32.xlu0 %v316, %s345
        %v347 = vpop.permute.xlu0 %346
        %s349 = sor.u32 256, 64
        %350 = vbcast.lane.b32.xlu0 %v316, %s349
        %v351 = vpop.permute.xlu0 %350
        %s353 = sor.u32 256, 72
        %354 = vbcast.lane.b32.xlu0 %v316, %s353
        %v355 = vpop.permute.xlu0 %354
        %s357 = sor.u32 256, 80
        %358 = vbcast.lane.b32.xlu0 %v316, %s357
        %v359 = vpop.permute.xlu0 %358
        %s361 = sor.u32 256, 88
        %362 = vbcast.lane.b32.xlu0 %v316, %s361
        %v363 = vpop.permute.xlu0 %362
        %s365 = sor.u32 256, 96
        %366 = vbcast.lane.b32.xlu0 %v316, %s365
        %v367 = vpop.permute.xlu0 %366
        %s369 = sor.u32 256, 104
        %370 = vbcast.lane.b32.xlu0 %v316, %s369
        %v371 = vpop.permute.xlu0 %370
        %s373 = sor.u32 256, 112
        %374 = vbcast.lane.b32.xlu0 %v316, %s373
        %v375 = vpop.permute.xlu0 %374
        %s377 = sor.u32 256, 120
        %378 = vbcast.lane.b32.xlu0 %v316, %s377
        %v379 = vpop.permute.xlu0 %378
        %v380 = vlaneseq
        %v381 = vshrl.u32 %v380, 7
        %v382 = vsub.s32 0, %v381
        %v383 = vrot.slane %v310, %v382
        %v384 = vmul.f32 %v319, %v383
        %v385 = vmul.f32 %v323, %v383
        %v386 = vmul.f32 %v327, %v383
        %v387 = vmul.f32 %v331, %v383
        %v388 = vmul.f32 %v335, %v383
        %v389 = vmul.f32 %v339, %v383
        %v390 = vmul.f32 %v343, %v383
        %v391 = vmul.f32 %v347, %v383
        %v392 = vmul.f32 %v351, %v383
        %v393 = vmul.f32 %v355, %v383
        %v394 = vmul.f32 %v359, %v383
        %v395 = vmul.f32 %v363, %v383
        %v396 = vmul.f32 %v367, %v383
        %v397 = vmul.f32 %v371, %v383
        %v398 = vmul.f32 %v375, %v383
        %v399 = vmul.f32 %v379, %v383
        %v400 = vmin.f32 %v384, 0.0
        %v401 = vmin.f32 %v385, 0.0
        %v402 = vmin.f32 %v386, 0.0
        %v403 = vmin.f32 %v387, 0.0
        %v404 = vmin.f32 %v388, 0.0
        %v405 = vmin.f32 %v389, 0.0
        %v406 = vmin.f32 %v390, 0.0
        %v407 = vmin.f32 %v391, 0.0
        %v408 = vmin.f32 %v392, 0.0
        %v409 = vmin.f32 %v393, 0.0
        %v410 = vmin.f32 %v394, 0.0
        %v411 = vmin.f32 %v395, 0.0
        %v412 = vmin.f32 %v396, 0.0
        %v413 = vmin.f32 %v397, 0.0
        %v414 = vmin.f32 %v398, 0.0
        %v415 = vmin.f32 %v399, 0.0
        %v416 = vand.u32 2147483647, %v384
        %v417 = vand.u32 2147483647, %v385
        %v418 = vand.u32 2147483647, %v386
        %v419 = vand.u32 2147483647, %v387
        %v420 = vand.u32 2147483647, %v388
        %v421 = vand.u32 2147483647, %v389
        %v422 = vand.u32 2147483647, %v390
        %v423 = vand.u32 2147483647, %v391
        %v424 = vand.u32 2147483647, %v392
        %v425 = vand.u32 2147483647, %v393
        %v426 = vand.u32 2147483647, %v394
        %v427 = vand.u32 2147483647, %v395
        %v428 = vand.u32 2147483647, %v396
        %v429 = vand.u32 2147483647, %v397
        %v430 = vand.u32 2147483647, %v398
        %v431 = vand.u32 2147483647, %v399
        %v432 = vsub.f32 0.0, %v416
        %v433 = vsub.f32 0.0, %v417
        %v434 = vsub.f32 0.0, %v418
        %v435 = vsub.f32 0.0, %v419
        %v436 = vsub.f32 0.0, %v420
        %v437 = vsub.f32 0.0, %v421
        %v438 = vsub.f32 0.0, %v422
        %v439 = vsub.f32 0.0, %v423
        %v440 = vsub.f32 0.0, %v424
        %v441 = vsub.f32 0.0, %v425
        %v442 = vsub.f32 0.0, %v426
        %v443 = vsub.f32 0.0, %v427
        %v444 = vsub.f32 0.0, %v428
        %v445 = vsub.f32 0.0, %v429
        %v446 = vsub.f32 0.0, %v430
        %v447 = vsub.f32 0.0, %v431
        %v448 = vmul.f32 %v432, 1.442695
        %v449 = vpow.pop %v448
        %v450 = vmul.f32 %v433, 1.442695
        %v451 = vpow.pop %v450
        %v452 = vmul.f32 %v434, 1.442695
        %v453 = vpow.pop %v452
        %v454 = vmul.f32 %v435, 1.442695
        %v455 = vpow.pop %v454
        %v456 = vmul.f32 %v436, 1.442695
        %v457 = vpow.pop %v456
        %v458 = vmul.f32 %v437, 1.442695
        %v459 = vpow.pop %v458
        %v460 = vmul.f32 %v438, 1.442695
        %v461 = vpow.pop %v460
        %v462 = vmul.f32 %v439, 1.442695
        %v463 = vpow.pop %v462
        %v464 = vmul.f32 %v440, 1.442695
        %v465 = vpow.pop %v464
        %v466 = vmul.f32 %v441, 1.442695
        %v467 = vpow.pop %v466
        %v468 = vmul.f32 %v442, 1.442695
        %v469 = vpow.pop %v468
        %v470 = vmul.f32 %v443, 1.442695
        %v471 = vpow.pop %v470
        %v472 = vmul.f32 %v444, 1.442695
        %v473 = vpow.pop %v472
        %v474 = vmul.f32 %v445, 1.442695
        %v475 = vpow.pop %v474
        %v476 = vmul.f32 %v446, 1.442695
        %v477 = vpow.pop %v476
        %v478 = vmul.f32 %v447, 1.442695
        %v479 = vpow.pop %v478
        %v480 = vadd.f32 %v449, 1.0
        %v481 = vadd.f32 %v451, 1.0
        %v482 = vadd.f32 %v453, 1.0
        %v483 = vadd.f32 %v455, 1.0
        %v484 = vadd.f32 %v457, 1.0
        %v485 = vadd.f32 %v459, 1.0
        %v486 = vadd.f32 %v461, 1.0
        %v487 = vadd.f32 %v463, 1.0
        %v488 = vadd.f32 %v465, 1.0
        %v489 = vadd.f32 %v467, 1.0
        %v490 = vadd.f32 %v469, 1.0
        %v491 = vadd.f32 %v471, 1.0
        %v492 = vadd.f32 %v473, 1.0
        %v493 = vadd.f32 %v475, 1.0
        %v494 = vadd.f32 %v477, 1.0
        %v495 = vadd.f32 %v479, 1.0
        %v496 = vlog2.pop %v480
        %v497 = vmul.f32 %v496, 0.6931472
        %v498 = vlog2.pop %v481
        %v499 = vmul.f32 %v498, 0.6931472
        %v500 = vlog2.pop %v482
        %v501 = vmul.f32 %v500, 0.6931472
        %v502 = vlog2.pop %v483
        %v503 = vmul.f32 %v502, 0.6931472
        %v504 = vlog2.pop %v484
        %v505 = vmul.f32 %v504, 0.6931472
        %v506 = vlog2.pop %v485
        %v507 = vmul.f32 %v506, 0.6931472
        %v508 = vlog2.pop %v486
        %v509 = vmul.f32 %v508, 0.6931472
        %v510 = vlog2.pop %v487
        %v511 = vmul.f32 %v510, 0.6931472
        %v512 = vlog2.pop %v488
        %v513 = vmul.f32 %v512, 0.6931472
        %v514 = vlog2.pop %v489
        %v515 = vmul.f32 %v514, 0.6931472
        %v516 = vlog2.pop %v490
        %v517 = vmul.f32 %v516, 0.6931472
        %v518 = vlog2.pop %v491
        %v519 = vmul.f32 %v518, 0.6931472
        %v520 = vlog2.pop %v492
        %v521 = vmul.f32 %v520, 0.6931472
        %v522 = vlog2.pop %v493
        %v523 = vmul.f32 %v522, 0.6931472
        %v524 = vlog2.pop %v494
        %v525 = vmul.f32 %v524, 0.6931472
        %v526 = vlog2.pop %v495
        %v527 = vmul.f32 %v526, 0.6931472
        %v528 = vsub.f32 %v400, %v497
        %v529 = vsub.f32 %v401, %v499
        %v530 = vsub.f32 %v402, %v501
        %v531 = vsub.f32 %v403, %v503
        %v532 = vsub.f32 %v404, %v505
        %v533 = vsub.f32 %v405, %v507
        %v534 = vsub.f32 %v406, %v509
        %v535 = vsub.f32 %v407, %v511
        %v536 = vsub.f32 %v408, %v513
        %v537 = vsub.f32 %v409, %v515
        %v538 = vsub.f32 %v410, %v517
        %v539 = vsub.f32 %v411, %v519
        %v540 = vsub.f32 %v412, %v521
        %v541 = vsub.f32 %v413, %v523
        %v542 = vsub.f32 %v414, %v525
        %v543 = vsub.f32 %v415, %v527
        %v544 = vld [vmem:[#allocation2] sm:$0x1]
        %v545 = vadd.f32 %v528, %v529
        %v546 = vadd.f32 %v545, %v530
        %v547 = vadd.f32 %v546, %v531
        %v548 = vadd.f32 %v547, %v532
        %v549 = vadd.f32 %v548, %v533
        %v550 = vadd.f32 %v549, %v534
        %v551 = vadd.f32 %v550, %v535
        %v552 = vadd.f32 %v551, %v536
        %v553 = vadd.f32 %v552, %v537
        %v554 = vadd.f32 %v553, %v538
        %v555 = vadd.f32 %v554, %v539
        %v556 = vadd.f32 %v555, %v540
        %v557 = vadd.f32 %v556, %v541
        %v558 = vadd.f32 %v557, %v542
        %v559 = vadd.f32 %v558, %v543
        %v560 = vrot.slane %v559, 4
        %v561 = vadd.f32 %v559, %v560
        %v562 = vrot.slane %v561, 2
        %v563 = vadd.f32 %v561, %v562
        %v564 = vrot.slane %v563, 1
        %v565 = vadd.f32 %v563, %v564
        %v566 = vadd.f32 %v544, %v565
        %567 = vst [vmem:[#allocation2] sm:$0x1] %v566
        %v568 = vlaneseq
        %v569 = vshrl.u32 %v568, 7
        %v570 = vsub.s32 1, %v569
        %v571 = vrot.slane %v308, %v570
        %573 = vbcast.lane.b32.xlu0 %v571, 256
        %v574 = vpop.permute.xlu0 %573
        %s576 = sor.u32 256, 8
        %577 = vbcast.lane.b32.xlu0 %v571, %s576
        %v578 = vpop.permute.xlu0 %577
        %s580 = sor.u32 256, 16
        %581 = vbcast.lane.b32.xlu0 %v571, %s580
        %v582 = vpop.permute.xlu0 %581
        %s584 = sor.u32 256, 24
        %585 = vbcast.lane.b32.xlu0 %v571, %s584
        %v586 = vpop.permute.xlu0 %585
        %s588 = sor.u32 256, 32
        %589 = vbcast.lane.b32.xlu0 %v571, %s588
        %v590 = vpop.permute.xlu0 %589
        %s592 = sor.u32 256, 40
        %593 = vbcast.lane.b32.xlu0 %v571, %s592
        %v594 = vpop.permute.xlu0 %593
        %s596 = sor.u32 256, 48
        %597 = vbcast.lane.b32.xlu0 %v571, %s596
        %v598 = vpop.permute.xlu0 %597
        %s600 = sor.u32 256, 56
        %601 = vbcast.lane.b32.xlu0 %v571, %s600
        %v602 = vpop.permute.xlu0 %601
        %s604 = sor.u32 256, 64
        %605 = vbcast.lane.b32.xlu0 %v571, %s604
        %v606 = vpop.permute.xlu0 %605
        %s608 = sor.u32 256, 72
        %609 = vbcast.lane.b32.xlu0 %v571, %s608
        %v610 = vpop.permute.xlu0 %609
        %s612 = sor.u32 256, 80
        %613 = vbcast.lane.b32.xlu0 %v571, %s612
        %v614 = vpop.permute.xlu0 %613
        %s616 = sor.u32 256, 88
        %617 = vbcast.lane.b32.xlu0 %v571, %s616
        %v618 = vpop.permute.xlu0 %617
        %s620 = sor.u32 256, 96
        %621 = vbcast.lane.b32.xlu0 %v571, %s620
        %v622 = vpop.permute.xlu0 %621
        %s624 = sor.u32 256, 104
        %625 = vbcast.lane.b32.xlu0 %v571, %s624
        %v626 = vpop.permute.xlu0 %625
        %s628 = sor.u32 256, 112
        %629 = vbcast.lane.b32.xlu0 %v571, %s628
        %v630 = vpop.permute.xlu0 %629
        %s632 = sor.u32 256, 120
        %633 = vbcast.lane.b32.xlu0 %v571, %s632
        %v634 = vpop.permute.xlu0 %633
        %v635 = vlaneseq
        %v636 = vshrl.u32 %v635, 7
        %v637 = vsub.s32 1, %v636
        %v638 = vrot.slane %v310, %v637
        %v639 = vmul.f32 %v574, %v638
        %v640 = vmul.f32 %v578, %v638
        %v641 = vmul.f32 %v582, %v638
        %v642 = vmul.f32 %v586, %v638
        %v643 = vmul.f32 %v590, %v638
        %v644 = vmul.f32 %v594, %v638
        %v645 = vmul.f32 %v598, %v638
        %v646 = vmul.f32 %v602, %v638
        %v647 = vmul.f32 %v606, %v638
        %v648 = vmul.f32 %v610, %v638
        %v649 = vmul.f32 %v614, %v638
        %v650 = vmul.f32 %v618, %v638
        %v651 = vmul.f32 %v622, %v638
        %v652 = vmul.f32 %v626, %v638
        %v653 = vmul.f32 %v630, %v638
        %v654 = vmul.f32 %v634, %v638
        %v655 = vmin.f32 %v639, 0.0
        %v656 = vmin.f32 %v640, 0.0
        %v657 = vmin.f32 %v641, 0.0
        %v658 = vmin.f32 %v642, 0.0
        %v659 = vmin.f32 %v643, 0.0
        %v660 = vmin.f32 %v644, 0.0
        %v661 = vmin.f32 %v645, 0.0
        %v662 = vmin.f32 %v646, 0.0
        %v663 = vmin.f32 %v647, 0.0
        %v664 = vmin.f32 %v648, 0.0
        %v665 = vmin.f32 %v649, 0.0
        %v666 = vmin.f32 %v650, 0.0
        %v667 = vmin.f32 %v651, 0.0
        %v668 = vmin.f32 %v652, 0.0
        %v669 = vmin.f32 %v653, 0.0
        %v670 = vmin.f32 %v654, 0.0
        %v671 = vand.u32 2147483647, %v639
        %v672 = vand.u32 2147483647, %v640
        %v673 = vand.u32 2147483647, %v641
        %v674 = vand.u32 2147483647, %v642
        %v675 = vand.u32 2147483647, %v643
        %v676 = vand.u32 2147483647, %v644
        %v677 = vand.u32 2147483647, %v645
        %v678 = vand.u32 2147483647, %v646
        %v679 = vand.u32 2147483647, %v647
        %v680 = vand.u32 2147483647, %v648
        %v681 = vand.u32 2147483647, %v649
        %v682 = vand.u32 2147483647, %v650
        %v683 = vand.u32 2147483647, %v651
        %v684 = vand.u32 2147483647, %v652
        %v685 = vand.u32 2147483647, %v653
        %v686 = vand.u32 2147483647, %v654
        %v687 = vsub.f32 0.0, %v671
        %v688 = vsub.f32 0.0, %v672
        %v689 = vsub.f32 0.0, %v673
        %v690 = vsub.f32 0.0, %v674
        %v691 = vsub.f32 0.0, %v675
        %v692 = vsub.f32 0.0, %v676
        %v693 = vsub.f32 0.0, %v677
        %v694 = vsub.f32 0.0, %v678
        %v695 = vsub.f32 0.0, %v679
        %v696 = vsub.f32 0.0, %v680
        %v697 = vsub.f32 0.0, %v681
        %v698 = vsub.f32 0.0, %v682
        %v699 = vsub.f32 0.0, %v683
        %v700 = vsub.f32 0.0, %v684
        %v701 = vsub.f32 0.0, %v685
        %v702 = vsub.f32 0.0, %v686
        %v703 = vmul.f32 %v687, 1.442695
        %v704 = vpow.pop %v703
        %v705 = vmul.f32 %v688, 1.442695
        %v706 = vpow.pop %v705
        %v707 = vmul.f32 %v689, 1.442695
        %v708 = vpow.pop %v707
        %v709 = vmul.f32 %v690, 1.442695
        %v710 = vpow.pop %v709
        %v711 = vmul.f32 %v691, 1.442695
        %v712 = vpow.pop %v711
        %v713 = vmul.f32 %v692, 1.442695
        %v714 = vpow.pop %v713
        %v715 = vmul.f32 %v693, 1.442695
        %v716 = vpow.pop %v715
        %v717 = vmul.f32 %v694, 1.442695
        %v718 = vpow.pop %v717
        %v719 = vmul.f32 %v695, 1.442695
        %v720 = vpow.pop %v719
        %v721 = vmul.f32 %v696, 1.442695
        %v722 = vpow.pop %v721
        %v723 = vmul.f32 %v697, 1.442695
        %v724 = vpow.pop %v723
        %v725 = vmul.f32 %v698, 1.442695
        %v726 = vpow.pop %v725
        %v727 = vmul.f32 %v699, 1.442695
        %v728 = vpow.pop %v727
        %v729 = vmul.f32 %v700, 1.442695
        %v730 = vpow.pop %v729
        %v731 = vmul.f32 %v701, 1.442695
        %v732 = vpow.pop %v731
        %v733 = vmul.f32 %v702, 1.442695
        %v734 = vpow.pop %v733
        %v735 = vadd.f32 %v704, 1.0
        %v736 = vadd.f32 %v706, 1.0
        %v737 = vadd.f32 %v708, 1.0
        %v738 = vadd.f32 %v710, 1.0
        %v739 = vadd.f32 %v712, 1.0
        %v740 = vadd.f32 %v714, 1.0
        %v741 = vadd.f32 %v716, 1.0
        %v742 = vadd.f32 %v718, 1.0
        %v743 = vadd.f32 %v720, 1.0
        %v744 = vadd.f32 %v722, 1.0
        %v745 = vadd.f32 %v724, 1.0
        %v746 = vadd.f32 %v726, 1.0
        %v747 = vadd.f32 %v728, 1.0
        %v748 = vadd.f32 %v730, 1.0
        %v749 = vadd.f32 %v732, 1.0
        %v750 = vadd.f32 %v734, 1.0
        %v751 = vlog2.pop %v735
        %v752 = vmul.f32 %v751, 0.6931472
        %v753 = vlog2.pop %v736
        %v754 = vmul.f32 %v753, 0.6931472
        %v755 = vlog2.pop %v737
        %v756 = vmul.f32 %v755, 0.6931472
        %v757 = vlog2.pop %v738
        %v758 = vmul.f32 %v757, 0.6931472
        %v759 = vlog2.pop %v739
        %v760 = vmul.f32 %v759, 0.6931472
        %v761 = vlog2.pop %v740
        %v762 = vmul.f32 %v761, 0.6931472
        %v763 = vlog2.pop %v741
        %v764 = vmul.f32 %v763, 0.6931472
        %v765 = vlog2.pop %v742
        %v766 = vmul.f32 %v765, 0.6931472
        %v767 = vlog2.pop %v743
        %v768 = vmul.f32 %v767, 0.6931472
        %v769 = vlog2.pop %v744
        %v770 = vmul.f32 %v769, 0.6931472
        %v771 = vlog2.pop %v745
        %v772 = vmul.f32 %v771, 0.6931472
        %v773 = vlog2.pop %v746
        %v774 = vmul.f32 %v773, 0.6931472
        %v775 = vlog2.pop %v747
        %v776 = vmul.f32 %v775, 0.6931472
        %v777 = vlog2.pop %v748
        %v778 = vmul.f32 %v777, 0.6931472
        %v779 = vlog2.pop %v749
        %v780 = vmul.f32 %v779, 0.6931472
        %v781 = vlog2.pop %v750
        %v782 = vmul.f32 %v781, 0.6931472
        %v783 = vsub.f32 %v655, %v752
        %v784 = vsub.f32 %v656, %v754
        %v785 = vsub.f32 %v657, %v756
        %v786 = vsub.f32 %v658, %v758
        %v787 = vsub.f32 %v659, %v760
        %v788 = vsub.f32 %v660, %v762
        %v789 = vsub.f32 %v661, %v764
        %v790 = vsub.f32 %v662, %v766
        %v791 = vsub.f32 %v663, %v768
        %v792 = vsub.f32 %v664, %v770
        %v793 = vsub.f32 %v665, %v772
        %v794 = vsub.f32 %v666, %v774
        %v795 = vsub.f32 %v667, %v776
        %v796 = vsub.f32 %v668, %v778
        %v797 = vsub.f32 %v669, %v780
        %v798 = vsub.f32 %v670, %v782
        %v799 = vld [vmem:[#allocation2] sm:$0x1]
        %v800 = vadd.f32 %v783, %v784
        %v801 = vadd.f32 %v800, %v785
        %v802 = vadd.f32 %v801, %v786
        %v803 = vadd.f32 %v802, %v787
        %v804 = vadd.f32 %v803, %v788
        %v805 = vadd.f32 %v804, %v789
        %v806 = vadd.f32 %v805, %v790
        %v807 = vadd.f32 %v806, %v791
        %v808 = vadd.f32 %v807, %v792
        %v809 = vadd.f32 %v808, %v793
        %v810 = vadd.f32 %v809, %v794
        %v811 = vadd.f32 %v810, %v795
        %v812 = vadd.f32 %v811, %v796
        %v813 = vadd.f32 %v812, %v797
        %v814 = vadd.f32 %v813, %v798
        %v815 = vrot.slane %v814, 4
        %v816 = vadd.f32 %v814, %v815
        %v817 = vrot.slane %v816, 2
        %v818 = vadd.f32 %v816, %v817
        %v819 = vrot.slane %v818, 1
        %v820 = vadd.f32 %v818, %v819
        %v821 = vadd.f32 %v799, %v820
        %822 = vst [vmem:[#allocation2] sm:$0x1] %v821
        %v823 = vlaneseq
        %v824 = vshrl.u32 %v823, 7
        %v825 = vsub.s32 2, %v824
        %v826 = vrot.slane %v308, %v825
        %828 = vbcast.lane.b32.xlu0 %v826, 256
        %v829 = vpop.permute.xlu0 %828
        %s831 = sor.u32 256, 8
        %832 = vbcast.lane.b32.xlu0 %v826, %s831
        %v833 = vpop.permute.xlu0 %832
        %s835 = sor.u32 256, 16
        %836 = vbcast.lane.b32.xlu0 %v826, %s835
        %v837 = vpop.permute.xlu0 %836
        %s839 = sor.u32 256, 24
        %840 = vbcast.lane.b32.xlu0 %v826, %s839
        %v841 = vpop.permute.xlu0 %840
        %s843 = sor.u32 256, 32
        %844 = vbcast.lane.b32.xlu0 %v826, %s843
        %v845 = vpop.permute.xlu0 %844
        %s847 = sor.u32 256, 40
        %848 = vbcast.lane.b32.xlu0 %v826, %s847
        %v849 = vpop.permute.xlu0 %848
        %s851 = sor.u32 256, 48
        %852 = vbcast.lane.b32.xlu0 %v826, %s851
        %v853 = vpop.permute.xlu0 %852
        %s855 = sor.u32 256, 56
        %856 = vbcast.lane.b32.xlu0 %v826, %s855
        %v857 = vpop.permute.xlu0 %856
        %s859 = sor.u32 256, 64
        %860 = vbcast.lane.b32.xlu0 %v826, %s859
        %v861 = vpop.permute.xlu0 %860
        %s863 = sor.u32 256, 72
        %864 = vbcast.lane.b32.xlu0 %v826, %s863
        %v865 = vpop.permute.xlu0 %864
        %s867 = sor.u32 256, 80
        %868 = vbcast.lane.b32.xlu0 %v826, %s867
        %v869 = vpop.permute.xlu0 %868
        %s871 = sor.u32 256, 88
        %872 = vbcast.lane.b32.xlu0 %v826, %s871
        %v873 = vpop.permute.xlu0 %872
        %s875 = sor.u32 256, 96
        %876 = vbcast.lane.b32.xlu0 %v826, %s875
        %v877 = vpop.permute.xlu0 %876
        %s879 = sor.u32 256, 104
        %880 = vbcast.lane.b32.xlu0 %v826, %s879
        %v881 = vpop.permute.xlu0 %880
        %s883 = sor.u32 256, 112
        %884 = vbcast.lane.b32.xlu0 %v826, %s883
        %v885 = vpop.permute.xlu0 %884
        %s887 = sor.u32 256, 120
        %888 = vbcast.lane.b32.xlu0 %v826, %s887
        %v889 = vpop.permute.xlu0 %888
        %v890 = vlaneseq
        %v891 = vshrl.u32 %v890, 7
        %v892 = vsub.s32 2, %v891
        %v893 = vrot.slane %v310, %v892
        %v894 = vmul.f32 %v829, %v893
        %v895 = vmul.f32 %v833, %v893
        %v896 = vmul.f32 %v837, %v893
        %v897 = vmul.f32 %v841, %v893
        %v898 = vmul.f32 %v845, %v893
        %v899 = vmul.f32 %v849, %v893
        %v900 = vmul.f32 %v853, %v893
        %v901 = vmul.f32 %v857, %v893
        %v902 = vmul.f32 %v861, %v893
        %v903 = vmul.f32 %v865, %v893
        %v904 = vmul.f32 %v869, %v893
        %v905 = vmul.f32 %v873, %v893
        %v906 = vmul.f32 %v877, %v893
        %v907 = vmul.f32 %v881, %v893
        %v908 = vmul.f32 %v885, %v893
        %v909 = vmul.f32 %v889, %v893
        %v910 = vmin.f32 %v894, 0.0
        %v911 = vmin.f32 %v895, 0.0
        %v912 = vmin.f32 %v896, 0.0
        %v913 = vmin.f32 %v897, 0.0
        %v914 = vmin.f32 %v898, 0.0
        %v915 = vmin.f32 %v899, 0.0
        %v916 = vmin.f32 %v900, 0.0
        %v917 = vmin.f32 %v901, 0.0
        %v918 = vmin.f32 %v902, 0.0
        %v919 = vmin.f32 %v903, 0.0
        %v920 = vmin.f32 %v904, 0.0
        %v921 = vmin.f32 %v905, 0.0
        %v922 = vmin.f32 %v906, 0.0
        %v923 = vmin.f32 %v907, 0.0
        %v924 = vmin.f32 %v908, 0.0
        %v925 = vmin.f32 %v909, 0.0
        %v926 = vand.u32 2147483647, %v894
        %v927 = vand.u32 2147483647, %v895
        %v928 = vand.u32 2147483647, %v896
        %v929 = vand.u32 2147483647, %v897
        %v930 = vand.u32 2147483647, %v898
        %v931 = vand.u32 2147483647, %v899
        %v932 = vand.u32 2147483647, %v900
        %v933 = vand.u32 2147483647, %v901
        %v934 = vand.u32 2147483647, %v902
        %v935 = vand.u32 2147483647, %v903
        %v936 = vand.u32 2147483647, %v904
        %v937 = vand.u32 2147483647, %v905
        %v938 = vand.u32 2147483647, %v906
        %v939 = vand.u32 2147483647, %v907
        %v940 = vand.u32 2147483647, %v908
        %v941 = vand.u32 2147483647, %v909
        %v942 = vsub.f32 0.0, %v926
        %v943 = vsub.f32 0.0, %v927
        %v944 = vsub.f32 0.0, %v928
        %v945 = vsub.f32 0.0, %v929
        %v946 = vsub.f32 0.0, %v930
        %v947 = vsub.f32 0.0, %v931
        %v948 = vsub.f32 0.0, %v932
        %v949 = vsub.f32 0.0, %v933
        %v950 = vsub.f32 0.0, %v934
        %v951 = vsub.f32 0.0, %v935
        %v952 = vsub.f32 0.0, %v936
        %v953 = vsub.f32 0.0, %v937
        %v954 = vsub.f32 0.0, %v938
        %v955 = vsub.f32 0.0, %v939
        %v956 = vsub.f32 0.0, %v940
        %v957 = vsub.f32 0.0, %v941
        %v958 = vmul.f32 %v942, 1.442695
        %v959 = vpow.pop %v958
        %v960 = vmul.f32 %v943, 1.442695
        %v961 = vpow.pop %v960
        %v962 = vmul.f32 %v944, 1.442695
        %v963 = vpow.pop %v962
        %v964 = vmul.f32 %v945, 1.442695
        %v965 = vpow.pop %v964
        %v966 = vmul.f32 %v946, 1.442695
        %v967 = vpow.pop %v966
        %v968 = vmul.f32 %v947, 1.442695
        %v969 = vpow.pop %v968
        %v970 = vmul.f32 %v948, 1.442695
        %v971 = vpow.pop %v970
        %v972 = vmul.f32 %v949, 1.442695
        %v973 = vpow.pop %v972
        %v974 = vmul.f32 %v950, 1.442695
        %v975 = vpow.pop %v974
        %v976 = vmul.f32 %v951, 1.442695
        %v977 = vpow.pop %v976
        %v978 = vmul.f32 %v952, 1.442695
        %v979 = vpow.pop %v978
        %v980 = vmul.f32 %v953, 1.442695
        %v981 = vpow.pop %v980
        %v982 = vmul.f32 %v954, 1.442695
        %v983 = vpow.pop %v982
        %v984 = vmul.f32 %v955, 1.442695
        %v985 = vpow.pop %v984
        %v986 = vmul.f32 %v956, 1.442695
        %v987 = vpow.pop %v986
        %v988 = vmul.f32 %v957, 1.442695
        %v989 = vpow.pop %v988
        %v990 = vadd.f32 %v959, 1.0
        %v991 = vadd.f32 %v961, 1.0
        %v992 = vadd.f32 %v963, 1.0
        %v993 = vadd.f32 %v965, 1.0
        %v994 = vadd.f32 %v967, 1.0
        %v995 = vadd.f32 %v969, 1.0
        %v996 = vadd.f32 %v971, 1.0
        %v997 = vadd.f32 %v973, 1.0
        %v998 = vadd.f32 %v975, 1.0
        %v999 = vadd.f32 %v977, 1.0
        %v1000 = vadd.f32 %v979, 1.0
        %v1001 = vadd.f32 %v981, 1.0
        %v1002 = vadd.f32 %v983, 1.0
        %v1003 = vadd.f32 %v985, 1.0
        %v1004 = vadd.f32 %v987, 1.0
        %v1005 = vadd.f32 %v989, 1.0
        %v1006 = vlog2.pop %v990
        %v1007 = vmul.f32 %v1006, 0.6931472
        %v1008 = vlog2.pop %v991
        %v1009 = vmul.f32 %v1008, 0.6931472
        %v1010 = vlog2.pop %v992
        %v1011 = vmul.f32 %v1010, 0.6931472
        %v1012 = vlog2.pop %v993
        %v1013 = vmul.f32 %v1012, 0.6931472
        %v1014 = vlog2.pop %v994
        %v1015 = vmul.f32 %v1014, 0.6931472
        %v1016 = vlog2.pop %v995
        %v1017 = vmul.f32 %v1016, 0.6931472
        %v1018 = vlog2.pop %v996
        %v1019 = vmul.f32 %v1018, 0.6931472
        %v1020 = vlog2.pop %v997
        %v1021 = vmul.f32 %v1020, 0.6931472
        %v1022 = vlog2.pop %v998
        %v1023 = vmul.f32 %v1022, 0.6931472
        %v1024 = vlog2.pop %v999
        %v1025 = vmul.f32 %v1024, 0.6931472
        %v1026 = vlog2.pop %v1000
        %v1027 = vmul.f32 %v1026, 0.6931472
        %v1028 = vlog2.pop %v1001
        %v1029 = vmul.f32 %v1028, 0.6931472
        %v1030 = vlog2.pop %v1002
        %v1031 = vmul.f32 %v1030, 0.6931472
        %v1032 = vlog2.pop %v1003
        %v1033 = vmul.f32 %v1032, 0.6931472
        %v1034 = vlog2.pop %v1004
        %v1035 = vmul.f32 %v1034, 0.6931472
        %v1036 = vlog2.pop %v1005
        %v1037 = vmul.f32 %v1036, 0.6931472
        %v1038 = vsub.f32 %v910, %v1007
        %v1039 = vsub.f32 %v911, %v1009
        %v1040 = vsub.f32 %v912, %v1011
        %v1041 = vsub.f32 %v913, %v1013
        %v1042 = vsub.f32 %v914, %v1015
        %v1043 = vsub.f32 %v915, %v1017
        %v1044 = vsub.f32 %v916, %v1019
        %v1045 = vsub.f32 %v917, %v1021
        %v1046 = vsub.f32 %v918, %v1023
        %v1047 = vsub.f32 %v919, %v1025
        %v1048 = vsub.f32 %v920, %v1027
        %v1049 = vsub.f32 %v921, %v1029
        %v1050 = vsub.f32 %v922, %v1031
        %v1051 = vsub.f32 %v923, %v1033
        %v1052 = vsub.f32 %v924, %v1035
        %v1053 = vsub.f32 %v925, %v1037
        %v1054 = vld [vmem:[#allocation2] sm:$0x1]
        %v1055 = vadd.f32 %v1038, %v1039
        %v1056 = vadd.f32 %v1055, %v1040
        %v1057 = vadd.f32 %v1056, %v1041
        %v1058 = vadd.f32 %v1057, %v1042
        %v1059 = vadd.f32 %v1058, %v1043
        %v1060 = vadd.f32 %v1059, %v1044
        %v1061 = vadd.f32 %v1060, %v1045
        %v1062 = vadd.f32 %v1061, %v1046
        %v1063 = vadd.f32 %v1062, %v1047
        %v1064 = vadd.f32 %v1063, %v1048
        %v1065 = vadd.f32 %v1064, %v1049
        %v1066 = vadd.f32 %v1065, %v1050
        %v1067 = vadd.f32 %v1066, %v1051
        %v1068 = vadd.f32 %v1067, %v1052
        %v1069 = vadd.f32 %v1068, %v1053
        %v1070 = vrot.slane %v1069, 4
        %v1071 = vadd.f32 %v1069, %v1070
        %v1072 = vrot.slane %v1071, 2
        %v1073 = vadd.f32 %v1071, %v1072
        %v1074 = vrot.slane %v1073, 1
        %v1075 = vadd.f32 %v1073, %v1074
        %v1076 = vadd.f32 %v1054, %v1075
        %1077 = vst [vmem:[#allocation2] sm:$0x1] %v1076
        %v1078 = vlaneseq
        %v1079 = vshrl.u32 %v1078, 7
        %v1080 = vsub.s32 3, %v1079
        %v1081 = vrot.slane %v308, %v1080
        %1083 = vbcast.lane.b32.xlu0 %v1081, 256
        %v1084 = vpop.permute.xlu0 %1083
        %s1086 = sor.u32 256, 8
        %1087 = vbcast.lane.b32.xlu0 %v1081, %s1086
        %v1088 = vpop.permute.xlu0 %1087
        %s1090 = sor.u32 256, 16
        %1091 = vbcast.lane.b32.xlu0 %v1081, %s1090
        %v1092 = vpop.permute.xlu0 %1091
        %s1094 = sor.u32 256, 24
        %1095 = vbcast.lane.b32.xlu0 %v1081, %s1094
        %v1096 = vpop.permute.xlu0 %1095
        %s1098 = sor.u32 256, 32
        %1099 = vbcast.lane.b32.xlu0 %v1081, %s1098
        %v1100 = vpop.permute.xlu0 %1099
        %s1102 = sor.u32 256, 40
        %1103 = vbcast.lane.b32.xlu0 %v1081, %s1102
        %v1104 = vpop.permute.xlu0 %1103
        %s1106 = sor.u32 256, 48
        %1107 = vbcast.lane.b32.xlu0 %v1081, %s1106
        %v1108 = vpop.permute.xlu0 %1107
        %s1110 = sor.u32 256, 56
        %1111 = vbcast.lane.b32.xlu0 %v1081, %s1110
        %v1112 = vpop.permute.xlu0 %1111
        %s1114 = sor.u32 256, 64
        %1115 = vbcast.lane.b32.xlu0 %v1081, %s1114
        %v1116 = vpop.permute.xlu0 %1115
        %s1118 = sor.u32 256, 72
        %1119 = vbcast.lane.b32.xlu0 %v1081, %s1118
        %v1120 = vpop.permute.xlu0 %1119
        %s1122 = sor.u32 256, 80
        %1123 = vbcast.lane.b32.xlu0 %v1081, %s1122
        %v1124 = vpop.permute.xlu0 %1123
        %s1126 = sor.u32 256, 88
        %1127 = vbcast.lane.b32.xlu0 %v1081, %s1126
        %v1128 = vpop.permute.xlu0 %1127
        %s1130 = sor.u32 256, 96
        %1131 = vbcast.lane.b32.xlu0 %v1081, %s1130
        %v1132 = vpop.permute.xlu0 %1131
        %s1134 = sor.u32 256, 104
        %1135 = vbcast.lane.b32.xlu0 %v1081, %s1134
        %v1136 = vpop.permute.xlu0 %1135
        %s1138 = sor.u32 256, 112
        %1139 = vbcast.lane.b32.xlu0 %v1081, %s1138
        %v1140 = vpop.permute.xlu0 %1139
        %s1142 = sor.u32 256, 120
        %1143 = vbcast.lane.b32.xlu0 %v1081, %s1142
        %v1144 = vpop.permute.xlu0 %1143
        %v1145 = vlaneseq
        %v1146 = vshrl.u32 %v1145, 7
        %v1147 = vsub.s32 3, %v1146
        %v1148 = vrot.slane %v310, %v1147
        %v1149 = vmul.f32 %v1084, %v1148
        %v1150 = vmul.f32 %v1088, %v1148
        %v1151 = vmul.f32 %v1092, %v1148
        %v1152 = vmul.f32 %v1096, %v1148
        %v1153 = vmul.f32 %v1100, %v1148
        %v1154 = vmul.f32 %v1104, %v1148
        %v1155 = vmul.f32 %v1108, %v1148
        %v1156 = vmul.f32 %v1112, %v1148
        %v1157 = vmul.f32 %v1116, %v1148
        %v1158 = vmul.f32 %v1120, %v1148
        %v1159 = vmul.f32 %v1124, %v1148
        %v1160 = vmul.f32 %v1128, %v1148
        %v1161 = vmul.f32 %v1132, %v1148
        %v1162 = vmul.f32 %v1136, %v1148
        %v1163 = vmul.f32 %v1140, %v1148
        %v1164 = vmul.f32 %v1144, %v1148
        %v1165 = vmin.f32 %v1149, 0.0
        %v1166 = vmin.f32 %v1150, 0.0
        %v1167 = vmin.f32 %v1151, 0.0
        %v1168 = vmin.f32 %v1152, 0.0
        %v1169 = vmin.f32 %v1153, 0.0
        %v1170 = vmin.f32 %v1154, 0.0
        %v1171 = vmin.f32 %v1155, 0.0
        %v1172 = vmin.f32 %v1156, 0.0
        %v1173 = vmin.f32 %v1157, 0.0
        %v1174 = vmin.f32 %v1158, 0.0
        %v1175 = vmin.f32 %v1159, 0.0
        %v1176 = vmin.f32 %v1160, 0.0
        %v1177 = vmin.f32 %v1161, 0.0
        %v1178 = vmin.f32 %v1162, 0.0
        %v1179 = vmin.f32 %v1163, 0.0
        %v1180 = vmin.f32 %v1164, 0.0
        %v1181 = vand.u32 2147483647, %v1149
        %v1182 = vand.u32 2147483647, %v1150
        %v1183 = vand.u32 2147483647, %v1151
        %v1184 = vand.u32 2147483647, %v1152
        %v1185 = vand.u32 2147483647, %v1153
        %v1186 = vand.u32 2147483647, %v1154
        %v1187 = vand.u32 2147483647, %v1155
        %v1188 = vand.u32 2147483647, %v1156
        %v1189 = vand.u32 2147483647, %v1157
        %v1190 = vand.u32 2147483647, %v1158
        %v1191 = vand.u32 2147483647, %v1159
        %v1192 = vand.u32 2147483647, %v1160
        %v1193 = vand.u32 2147483647, %v1161
        %v1194 = vand.u32 2147483647, %v1162
        %v1195 = vand.u32 2147483647, %v1163
        %v1196 = vand.u32 2147483647, %v1164
        %v1197 = vsub.f32 0.0, %v1181
        %v1198 = vsub.f32 0.0, %v1182
        %v1199 = vsub.f32 0.0, %v1183
        %v1200 = vsub.f32 0.0, %v1184
        %v1201 = vsub.f32 0.0, %v1185
        %v1202 = vsub.f32 0.0, %v1186
        %v1203 = vsub.f32 0.0, %v1187
        %v1204 = vsub.f32 0.0, %v1188
        %v1205 = vsub.f32 0.0, %v1189
        %v1206 = vsub.f32 0.0, %v1190
        %v1207 = vsub.f32 0.0, %v1191
        %v1208 = vsub.f32 0.0, %v1192
        %v1209 = vsub.f32 0.0, %v1193
        %v1210 = vsub.f32 0.0, %v1194
        %v1211 = vsub.f32 0.0, %v1195
        %v1212 = vsub.f32 0.0, %v1196
        %v1213 = vmul.f32 %v1197, 1.442695
        %v1214 = vpow.pop %v1213
        %v1215 = vmul.f32 %v1198, 1.442695
        %v1216 = vpow.pop %v1215
        %v1217 = vmul.f32 %v1199, 1.442695
        %v1218 = vpow.pop %v1217
        %v1219 = vmul.f32 %v1200, 1.442695
        %v1220 = vpow.pop %v1219
        %v1221 = vmul.f32 %v1201, 1.442695
        %v1222 = vpow.pop %v1221
        %v1223 = vmul.f32 %v1202, 1.442695
        %v1224 = vpow.pop %v1223
        %v1225 = vmul.f32 %v1203, 1.442695
        %v1226 = vpow.pop %v1225
        %v1227 = vmul.f32 %v1204, 1.442695
        %v1228 = vpow.pop %v1227
        %v1229 = vmul.f32 %v1205, 1.442695
        %v1230 = vpow.pop %v1229
        %v1231 = vmul.f32 %v1206, 1.442695
        %v1232 = vpow.pop %v1231
        %v1233 = vmul.f32 %v1207, 1.442695
        %v1234 = vpow.pop %v1233
        %v1235 = vmul.f32 %v1208, 1.442695
        %v1236 = vpow.pop %v1235
        %v1237 = vmul.f32 %v1209, 1.442695
        %v1238 = vpow.pop %v1237
        %v1239 = vmul.f32 %v1210, 1.442695
        %v1240 = vpow.pop %v1239
        %v1241 = vmul.f32 %v1211, 1.442695
        %v1242 = vpow.pop %v1241
        %v1243 = vmul.f32 %v1212, 1.442695
        %v1244 = vpow.pop %v1243
        %v1245 = vadd.f32 %v1214, 1.0
        %v1246 = vadd.f32 %v1216, 1.0
        %v1247 = vadd.f32 %v1218, 1.0
        %v1248 = vadd.f32 %v1220, 1.0
        %v1249 = vadd.f32 %v1222, 1.0
        %v1250 = vadd.f32 %v1224, 1.0
        %v1251 = vadd.f32 %v1226, 1.0
        %v1252 = vadd.f32 %v1228, 1.0
        %v1253 = vadd.f32 %v1230, 1.0
        %v1254 = vadd.f32 %v1232, 1.0
        %v1255 = vadd.f32 %v1234, 1.0
        %v1256 = vadd.f32 %v1236, 1.0
        %v1257 = vadd.f32 %v1238, 1.0
        %v1258 = vadd.f32 %v1240, 1.0
        %v1259 = vadd.f32 %v1242, 1.0
        %v1260 = vadd.f32 %v1244, 1.0
        %v1261 = vlog2.pop %v1245
        %v1262 = vmul.f32 %v1261, 0.6931472
        %v1263 = vlog2.pop %v1246
        %v1264 = vmul.f32 %v1263, 0.6931472
        %v1265 = vlog2.pop %v1247
        %v1266 = vmul.f32 %v1265, 0.6931472
        %v1267 = vlog2.pop %v1248
        %v1268 = vmul.f32 %v1267, 0.6931472
        %v1269 = vlog2.pop %v1249
        %v1270 = vmul.f32 %v1269, 0.6931472
        %v1271 = vlog2.pop %v1250
        %v1272 = vmul.f32 %v1271, 0.6931472
        %v1273 = vlog2.pop %v1251
        %v1274 = vmul.f32 %v1273, 0.6931472
        %v1275 = vlog2.pop %v1252
        %v1276 = vmul.f32 %v1275, 0.6931472
        %v1277 = vlog2.pop %v1253
        %v1278 = vmul.f32 %v1277, 0.6931472
        %v1279 = vlog2.pop %v1254
        %v1280 = vmul.f32 %v1279, 0.6931472
        %v1281 = vlog2.pop %v1255
        %v1282 = vmul.f32 %v1281, 0.6931472
        %v1283 = vlog2.pop %v1256
        %v1284 = vmul.f32 %v1283, 0.6931472
        %v1285 = vlog2.pop %v1257
        %v1286 = vmul.f32 %v1285, 0.6931472
        %v1287 = vlog2.pop %v1258
        %v1288 = vmul.f32 %v1287, 0.6931472
        %v1289 = vlog2.pop %v1259
        %v1290 = vmul.f32 %v1289, 0.6931472
        %v1291 = vlog2.pop %v1260
        %v1292 = vmul.f32 %v1291, 0.6931472
        %v1293 = vsub.f32 %v1165, %v1262
        %v1294 = vsub.f32 %v1166, %v1264
        %v1295 = vsub.f32 %v1167, %v1266
        %v1296 = vsub.f32 %v1168, %v1268
        %v1297 = vsub.f32 %v1169, %v1270
        %v1298 = vsub.f32 %v1170, %v1272
        %v1299 = vsub.f32 %v1171, %v1274
        %v1300 = vsub.f32 %v1172, %v1276
        %v1301 = vsub.f32 %v1173, %v1278
        %v1302 = vsub.f32 %v1174, %v1280
        %v1303 = vsub.f32 %v1175, %v1282
        %v1304 = vsub.f32 %v1176, %v1284
        %v1305 = vsub.f32 %v1177, %v1286
        %v1306 = vsub.f32 %v1178, %v1288
        %v1307 = vsub.f32 %v1179, %v1290
        %v1308 = vsub.f32 %v1180, %v1292
        %v1309 = vld [vmem:[#allocation2] sm:$0x1]
        %v1310 = vadd.f32 %v1293, %v1294
        %v1311 = vadd.f32 %v1310, %v1295
        %v1312 = vadd.f32 %v1311, %v1296
        %v1313 = vadd.f32 %v1312, %v1297
        %v1314 = vadd.f32 %v1313, %v1298
        %v1315 = vadd.f32 %v1314, %v1299
        %v1316 = vadd.f32 %v1315, %v1300
        %v1317 = vadd.f32 %v1316, %v1301
        %v1318 = vadd.f32 %v1317, %v1302
        %v1319 = vadd.f32 %v1318, %v1303
        %v1320 = vadd.f32 %v1319, %v1304
        %v1321 = vadd.f32 %v1320, %v1305
        %v1322 = vadd.f32 %v1321, %v1306
        %v1323 = vadd.f32 %v1322, %v1307
        %v1324 = vadd.f32 %v1323, %v1308
        %v1325 = vrot.slane %v1324, 4
        %v1326 = vadd.f32 %v1324, %v1325
        %v1327 = vrot.slane %v1326, 2
        %v1328 = vadd.f32 %v1326, %v1327
        %v1329 = vrot.slane %v1328, 1
        %v1330 = vadd.f32 %v1328, %v1329
        %v1331 = vadd.f32 %v1309, %v1330
        %1332 = vst [vmem:[#allocation2] sm:$0x1] %v1331
        %v1333 = vlaneseq
        %v1334 = vshrl.u32 %v1333, 7
        %v1335 = vsub.s32 4, %v1334
        %v1336 = vrot.slane %v308, %v1335
        %1338 = vbcast.lane.b32.xlu0 %v1336, 256
        %v1339 = vpop.permute.xlu0 %1338
        %s1341 = sor.u32 256, 8
        %1342 = vbcast.lane.b32.xlu0 %v1336, %s1341
        %v1343 = vpop.permute.xlu0 %1342
        %s1345 = sor.u32 256, 16
        %1346 = vbcast.lane.b32.xlu0 %v1336, %s1345
        %v1347 = vpop.permute.xlu0 %1346
        %s1349 = sor.u32 256, 24
        %1350 = vbcast.lane.b32.xlu0 %v1336, %s1349
        %v1351 = vpop.permute.xlu0 %1350
        %s1353 = sor.u32 256, 32
        %1354 = vbcast.lane.b32.xlu0 %v1336, %s1353
        %v1355 = vpop.permute.xlu0 %1354
        %s1357 = sor.u32 256, 40
        %1358 = vbcast.lane.b32.xlu0 %v1336, %s1357
        %v1359 = vpop.permute.xlu0 %1358
        %s1361 = sor.u32 256, 48
        %1362 = vbcast.lane.b32.xlu0 %v1336, %s1361
        %v1363 = vpop.permute.xlu0 %1362
        %s1365 = sor.u32 256, 56
        %1366 = vbcast.lane.b32.xlu0 %v1336, %s1365
        %v1367 = vpop.permute.xlu0 %1366
        %s1369 = sor.u32 256, 64
        %1370 = vbcast.lane.b32.xlu0 %v1336, %s1369
        %v1371 = vpop.permute.xlu0 %1370
        %s1373 = sor.u32 256, 72
        %1374 = vbcast.lane.b32.xlu0 %v1336, %s1373
        %v1375 = vpop.permute.xlu0 %1374
        %s1377 = sor.u32 256, 80
        %1378 = vbcast.lane.b32.xlu0 %v1336, %s1377
        %v1379 = vpop.permute.xlu0 %1378
        %s1381 = sor.u32 256, 88
        %1382 = vbcast.lane.b32.xlu0 %v1336, %s1381
        %v1383 = vpop.permute.xlu0 %1382
        %s1385 = sor.u32 256, 96
        %1386 = vbcast.lane.b32.xlu0 %v1336, %s1385
        %v1387 = vpop.permute.xlu0 %1386
        %s1389 = sor.u32 256, 104
        %1390 = vbcast.lane.b32.xlu0 %v1336, %s1389
        %v1391 = vpop.permute.xlu0 %1390
        %s1393 = sor.u32 256, 112
        %1394 = vbcast.lane.b32.xlu0 %v1336, %s1393
        %v1395 = vpop.permute.xlu0 %1394
        %s1397 = sor.u32 256, 120
        %1398 = vbcast.lane.b32.xlu0 %v1336, %s1397
        %v1399 = vpop.permute.xlu0 %1398
        %v1400 = vlaneseq
        %v1401 = vshrl.u32 %v1400, 7
        %v1402 = vsub.s32 4, %v1401
        %v1403 = vrot.slane %v310, %v1402
        %v1404 = vmul.f32 %v1339, %v1403
        %v1405 = vmul.f32 %v1343, %v1403
        %v1406 = vmul.f32 %v1347, %v1403
        %v1407 = vmul.f32 %v1351, %v1403
        %v1408 = vmul.f32 %v1355, %v1403
        %v1409 = vmul.f32 %v1359, %v1403
        %v1410 = vmul.f32 %v1363, %v1403
        %v1411 = vmul.f32 %v1367, %v1403
        %v1412 = vmul.f32 %v1371, %v1403
        %v1413 = vmul.f32 %v1375, %v1403
        %v1414 = vmul.f32 %v1379, %v1403
        %v1415 = vmul.f32 %v1383, %v1403
        %v1416 = vmul.f32 %v1387, %v1403
        %v1417 = vmul.f32 %v1391, %v1403
        %v1418 = vmul.f32 %v1395, %v1403
        %v1419 = vmul.f32 %v1399, %v1403
        %v1420 = vmin.f32 %v1404, 0.0
        %v1421 = vmin.f32 %v1405, 0.0
        %v1422 = vmin.f32 %v1406, 0.0
        %v1423 = vmin.f32 %v1407, 0.0
        %v1424 = vmin.f32 %v1408, 0.0
        %v1425 = vmin.f32 %v1409, 0.0
        %v1426 = vmin.f32 %v1410, 0.0
        %v1427 = vmin.f32 %v1411, 0.0
        %v1428 = vmin.f32 %v1412, 0.0
        %v1429 = vmin.f32 %v1413, 0.0
        %v1430 = vmin.f32 %v1414, 0.0
        %v1431 = vmin.f32 %v1415, 0.0
        %v1432 = vmin.f32 %v1416, 0.0
        %v1433 = vmin.f32 %v1417, 0.0
        %v1434 = vmin.f32 %v1418, 0.0
        %v1435 = vmin.f32 %v1419, 0.0
        %v1436 = vand.u32 2147483647, %v1404
        %v1437 = vand.u32 2147483647, %v1405
        %v1438 = vand.u32 2147483647, %v1406
        %v1439 = vand.u32 2147483647, %v1407
        %v1440 = vand.u32 2147483647, %v1408
        %v1441 = vand.u32 2147483647, %v1409
        %v1442 = vand.u32 2147483647, %v1410
        %v1443 = vand.u32 2147483647, %v1411
        %v1444 = vand.u32 2147483647, %v1412
        %v1445 = vand.u32 2147483647, %v1413
        %v1446 = vand.u32 2147483647, %v1414
        %v1447 = vand.u32 2147483647, %v1415
        %v1448 = vand.u32 2147483647, %v1416
        %v1449 = vand.u32 2147483647, %v1417
        %v1450 = vand.u32 2147483647, %v1418
        %v1451 = vand.u32 2147483647, %v1419
        %v1452 = vsub.f32 0.0, %v1436
        %v1453 = vsub.f32 0.0, %v1437
        %v1454 = vsub.f32 0.0, %v1438
        %v1455 = vsub.f32 0.0, %v1439
        %v1456 = vsub.f32 0.0, %v1440
        %v1457 = vsub.f32 0.0, %v1441
        %v1458 = vsub.f32 0.0, %v1442
        %v1459 = vsub.f32 0.0, %v1443
        %v1460 = vsub.f32 0.0, %v1444
        %v1461 = vsub.f32 0.0, %v1445
        %v1462 = vsub.f32 0.0, %v1446
        %v1463 = vsub.f32 0.0, %v1447
        %v1464 = vsub.f32 0.0, %v1448
        %v1465 = vsub.f32 0.0, %v1449
        %v1466 = vsub.f32 0.0, %v1450
        %v1467 = vsub.f32 0.0, %v1451
        %v1468 = vmul.f32 %v1452, 1.442695
        %v1469 = vpow.pop %v1468
        %v1470 = vmul.f32 %v1453, 1.442695
        %v1471 = vpow.pop %v1470
        %v1472 = vmul.f32 %v1454, 1.442695
        %v1473 = vpow.pop %v1472
        %v1474 = vmul.f32 %v1455, 1.442695
        %v1475 = vpow.pop %v1474
        %v1476 = vmul.f32 %v1456, 1.442695
        %v1477 = vpow.pop %v1476
        %v1478 = vmul.f32 %v1457, 1.442695
        %v1479 = vpow.pop %v1478
        %v1480 = vmul.f32 %v1458, 1.442695
        %v1481 = vpow.pop %v1480
        %v1482 = vmul.f32 %v1459, 1.442695
        %v1483 = vpow.pop %v1482
        %v1484 = vmul.f32 %v1460, 1.442695
        %v1485 = vpow.pop %v1484
        %v1486 = vmul.f32 %v1461, 1.442695
        %v1487 = vpow.pop %v1486
        %v1488 = vmul.f32 %v1462, 1.442695
        %v1489 = vpow.pop %v1488
        %v1490 = vmul.f32 %v1463, 1.442695
        %v1491 = vpow.pop %v1490
        %v1492 = vmul.f32 %v1464, 1.442695
        %v1493 = vpow.pop %v1492
        %v1494 = vmul.f32 %v1465, 1.442695
        %v1495 = vpow.pop %v1494
        %v1496 = vmul.f32 %v1466, 1.442695
        %v1497 = vpow.pop %v1496
        %v1498 = vmul.f32 %v1467, 1.442695
        %v1499 = vpow.pop %v1498
        %v1500 = vadd.f32 %v1469, 1.0
        %v1501 = vadd.f32 %v1471, 1.0
        %v1502 = vadd.f32 %v1473, 1.0
        %v1503 = vadd.f32 %v1475, 1.0
        %v1504 = vadd.f32 %v1477, 1.0
        %v1505 = vadd.f32 %v1479, 1.0
        %v1506 = vadd.f32 %v1481, 1.0
        %v1507 = vadd.f32 %v1483, 1.0
        %v1508 = vadd.f32 %v1485, 1.0
        %v1509 = vadd.f32 %v1487, 1.0
        %v1510 = vadd.f32 %v1489, 1.0
        %v1511 = vadd.f32 %v1491, 1.0
        %v1512 = vadd.f32 %v1493, 1.0
        %v1513 = vadd.f32 %v1495, 1.0
        %v1514 = vadd.f32 %v1497, 1.0
        %v1515 = vadd.f32 %v1499, 1.0
        %v1516 = vlog2.pop %v1500
        %v1517 = vmul.f32 %v1516, 0.6931472
        %v1518 = vlog2.pop %v1501
        %v1519 = vmul.f32 %v1518, 0.6931472
        %v1520 = vlog2.pop %v1502
        %v1521 = vmul.f32 %v1520, 0.6931472
        %v1522 = vlog2.pop %v1503
        %v1523 = vmul.f32 %v1522, 0.6931472
        %v1524 = vlog2.pop %v1504
        %v1525 = vmul.f32 %v1524, 0.6931472
        %v1526 = vlog2.pop %v1505
        %v1527 = vmul.f32 %v1526, 0.6931472
        %v1528 = vlog2.pop %v1506
        %v1529 = vmul.f32 %v1528, 0.6931472
        %v1530 = vlog2.pop %v1507
        %v1531 = vmul.f32 %v1530, 0.6931472
        %v1532 = vlog2.pop %v1508
        %v1533 = vmul.f32 %v1532, 0.6931472
        %v1534 = vlog2.pop %v1509
        %v1535 = vmul.f32 %v1534, 0.6931472
        %v1536 = vlog2.pop %v1510
        %v1537 = vmul.f32 %v1536, 0.6931472
        %v1538 = vlog2.pop %v1511
        %v1539 = vmul.f32 %v1538, 0.6931472
        %v1540 = vlog2.pop %v1512
        %v1541 = vmul.f32 %v1540, 0.6931472
        %v1542 = vlog2.pop %v1513
        %v1543 = vmul.f32 %v1542, 0.6931472
        %v1544 = vlog2.pop %v1514
        %v1545 = vmul.f32 %v1544, 0.6931472
        %v1546 = vlog2.pop %v1515
        %v1547 = vmul.f32 %v1546, 0.6931472
        %v1548 = vsub.f32 %v1420, %v1517
        %v1549 = vsub.f32 %v1421, %v1519
        %v1550 = vsub.f32 %v1422, %v1521
        %v1551 = vsub.f32 %v1423, %v1523
        %v1552 = vsub.f32 %v1424, %v1525
        %v1553 = vsub.f32 %v1425, %v1527
        %v1554 = vsub.f32 %v1426, %v1529
        %v1555 = vsub.f32 %v1427, %v1531
        %v1556 = vsub.f32 %v1428, %v1533
        %v1557 = vsub.f32 %v1429, %v1535
        %v1558 = vsub.f32 %v1430, %v1537
        %v1559 = vsub.f32 %v1431, %v1539
        %v1560 = vsub.f32 %v1432, %v1541
        %v1561 = vsub.f32 %v1433, %v1543
        %v1562 = vsub.f32 %v1434, %v1545
        %v1563 = vsub.f32 %v1435, %v1547
        %v1564 = vld [vmem:[#allocation2] sm:$0x1]
        %v1565 = vadd.f32 %v1548, %v1549
        %v1566 = vadd.f32 %v1565, %v1550
        %v1567 = vadd.f32 %v1566, %v1551
        %v1568 = vadd.f32 %v1567, %v1552
        %v1569 = vadd.f32 %v1568, %v1553
        %v1570 = vadd.f32 %v1569, %v1554
        %v1571 = vadd.f32 %v1570, %v1555
        %v1572 = vadd.f32 %v1571, %v1556
        %v1573 = vadd.f32 %v1572, %v1557
        %v1574 = vadd.f32 %v1573, %v1558
        %v1575 = vadd.f32 %v1574, %v1559
        %v1576 = vadd.f32 %v1575, %v1560
        %v1577 = vadd.f32 %v1576, %v1561
        %v1578 = vadd.f32 %v1577, %v1562
        %v1579 = vadd.f32 %v1578, %v1563
        %v1580 = vrot.slane %v1579, 4
        %v1581 = vadd.f32 %v1579, %v1580
        %v1582 = vrot.slane %v1581, 2
        %v1583 = vadd.f32 %v1581, %v1582
        %v1584 = vrot.slane %v1583, 1
        %v1585 = vadd.f32 %v1583, %v1584
        %v1586 = vadd.f32 %v1564, %v1585
        %1587 = vst [vmem:[#allocation2] sm:$0x1] %v1586
        %v1588 = vlaneseq
        %v1589 = vshrl.u32 %v1588, 7
        %v1590 = vsub.s32 5, %v1589
        %v1591 = vrot.slane %v308, %v1590
        %1593 = vbcast.lane.b32.xlu0 %v1591, 256
        %v1594 = vpop.permute.xlu0 %1593
        %s1596 = sor.u32 256, 8
        %1597 = vbcast.lane.b32.xlu0 %v1591, %s1596
        %v1598 = vpop.permute.xlu0 %1597
        %s1600 = sor.u32 256, 16
        %1601 = vbcast.lane.b32.xlu0 %v1591, %s1600
        %v1602 = vpop.permute.xlu0 %1601
        %s1604 = sor.u32 256, 24
        %1605 = vbcast.lane.b32.xlu0 %v1591, %s1604
        %v1606 = vpop.permute.xlu0 %1605
        %s1608 = sor.u32 256, 32
        %1609 = vbcast.lane.b32.xlu0 %v1591, %s1608
        %v1610 = vpop.permute.xlu0 %1609
        %s1612 = sor.u32 256, 40
        %1613 = vbcast.lane.b32.xlu0 %v1591, %s1612
        %v1614 = vpop.permute.xlu0 %1613
        %s1616 = sor.u32 256, 48
        %1617 = vbcast.lane.b32.xlu0 %v1591, %s1616
        %v1618 = vpop.permute.xlu0 %1617
        %s1620 = sor.u32 256, 56
        %1621 = vbcast.lane.b32.xlu0 %v1591, %s1620
        %v1622 = vpop.permute.xlu0 %1621
        %s1624 = sor.u32 256, 64
        %1625 = vbcast.lane.b32.xlu0 %v1591, %s1624
        %v1626 = vpop.permute.xlu0 %1625
        %s1628 = sor.u32 256, 72
        %1629 = vbcast.lane.b32.xlu0 %v1591, %s1628
        %v1630 = vpop.permute.xlu0 %1629
        %s1632 = sor.u32 256, 80
        %1633 = vbcast.lane.b32.xlu0 %v1591, %s1632
        %v1634 = vpop.permute.xlu0 %1633
        %s1636 = sor.u32 256, 88
        %1637 = vbcast.lane.b32.xlu0 %v1591, %s1636
        %v1638 = vpop.permute.xlu0 %1637
        %s1640 = sor.u32 256, 96
        %1641 = vbcast.lane.b32.xlu0 %v1591, %s1640
        %v1642 = vpop.permute.xlu0 %1641
        %s1644 = sor.u32 256, 104
        %1645 = vbcast.lane.b32.xlu0 %v1591, %s1644
        %v1646 = vpop.permute.xlu0 %1645
        %s1648 = sor.u32 256, 112
        %1649 = vbcast.lane.b32.xlu0 %v1591, %s1648
        %v1650 = vpop.permute.xlu0 %1649
        %s1652 = sor.u32 256, 120
        %1653 = vbcast.lane.b32.xlu0 %v1591, %s1652
        %v1654 = vpop.permute.xlu0 %1653
        %v1655 = vlaneseq
        %v1656 = vshrl.u32 %v1655, 7
        %v1657 = vsub.s32 5, %v1656
        %v1658 = vrot.slane %v310, %v1657
        %v1659 = vmul.f32 %v1594, %v1658
        %v1660 = vmul.f32 %v1598, %v1658
        %v1661 = vmul.f32 %v1602, %v1658
        %v1662 = vmul.f32 %v1606, %v1658
        %v1663 = vmul.f32 %v1610, %v1658
        %v1664 = vmul.f32 %v1614, %v1658
        %v1665 = vmul.f32 %v1618, %v1658
        %v1666 = vmul.f32 %v1622, %v1658
        %v1667 = vmul.f32 %v1626, %v1658
        %v1668 = vmul.f32 %v1630, %v1658
        %v1669 = vmul.f32 %v1634, %v1658
        %v1670 = vmul.f32 %v1638, %v1658
        %v1671 = vmul.f32 %v1642, %v1658
        %v1672 = vmul.f32 %v1646, %v1658
        %v1673 = vmul.f32 %v1650, %v1658
        %v1674 = vmul.f32 %v1654, %v1658
        %v1675 = vmin.f32 %v1659, 0.0
        %v1676 = vmin.f32 %v1660, 0.0
        %v1677 = vmin.f32 %v1661, 0.0
        %v1678 = vmin.f32 %v1662, 0.0
        %v1679 = vmin.f32 %v1663, 0.0
        %v1680 = vmin.f32 %v1664, 0.0
        %v1681 = vmin.f32 %v1665, 0.0
        %v1682 = vmin.f32 %v1666, 0.0
        %v1683 = vmin.f32 %v1667, 0.0
        %v1684 = vmin.f32 %v1668, 0.0
        %v1685 = vmin.f32 %v1669, 0.0
        %v1686 = vmin.f32 %v1670, 0.0
        %v1687 = vmin.f32 %v1671, 0.0
        %v1688 = vmin.f32 %v1672, 0.0
        %v1689 = vmin.f32 %v1673, 0.0
        %v1690 = vmin.f32 %v1674, 0.0
        %v1691 = vand.u32 2147483647, %v1659
        %v1692 = vand.u32 2147483647, %v1660
        %v1693 = vand.u32 2147483647, %v1661
        %v1694 = vand.u32 2147483647, %v1662
        %v1695 = vand.u32 2147483647, %v1663
        %v1696 = vand.u32 2147483647, %v1664
        %v1697 = vand.u32 2147483647, %v1665
        %v1698 = vand.u32 2147483647, %v1666
        %v1699 = vand.u32 2147483647, %v1667
        %v1700 = vand.u32 2147483647, %v1668
        %v1701 = vand.u32 2147483647, %v1669
        %v1702 = vand.u32 2147483647, %v1670
        %v1703 = vand.u32 2147483647, %v1671
        %v1704 = vand.u32 2147483647, %v1672
        %v1705 = vand.u32 2147483647, %v1673
        %v1706 = vand.u32 2147483647, %v1674
        %v1707 = vsub.f32 0.0, %v1691
        %v1708 = vsub.f32 0.0, %v1692
        %v1709 = vsub.f32 0.0, %v1693
        %v1710 = vsub.f32 0.0, %v1694
        %v1711 = vsub.f32 0.0, %v1695
        %v1712 = vsub.f32 0.0, %v1696
        %v1713 = vsub.f32 0.0, %v1697
        %v1714 = vsub.f32 0.0, %v1698
        %v1715 = vsub.f32 0.0, %v1699
        %v1716 = vsub.f32 0.0, %v1700
        %v1717 = vsub.f32 0.0, %v1701
        %v1718 = vsub.f32 0.0, %v1702
        %v1719 = vsub.f32 0.0, %v1703
        %v1720 = vsub.f32 0.0, %v1704
        %v1721 = vsub.f32 0.0, %v1705
        %v1722 = vsub.f32 0.0, %v1706
        %v1723 = vmul.f32 %v1707, 1.442695
        %v1724 = vpow.pop %v1723
        %v1725 = vmul.f32 %v1708, 1.442695
        %v1726 = vpow.pop %v1725
        %v1727 = vmul.f32 %v1709, 1.442695
        %v1728 = vpow.pop %v1727
        %v1729 = vmul.f32 %v1710, 1.442695
        %v1730 = vpow.pop %v1729
        %v1731 = vmul.f32 %v1711, 1.442695
        %v1732 = vpow.pop %v1731
        %v1733 = vmul.f32 %v1712, 1.442695
        %v1734 = vpow.pop %v1733
        %v1735 = vmul.f32 %v1713, 1.442695
        %v1736 = vpow.pop %v1735
        %v1737 = vmul.f32 %v1714, 1.442695
        %v1738 = vpow.pop %v1737
        %v1739 = vmul.f32 %v1715, 1.442695
        %v1740 = vpow.pop %v1739
        %v1741 = vmul.f32 %v1716, 1.442695
        %v1742 = vpow.pop %v1741
        %v1743 = vmul.f32 %v1717, 1.442695
        %v1744 = vpow.pop %v1743
        %v1745 = vmul.f32 %v1718, 1.442695
        %v1746 = vpow.pop %v1745
        %v1747 = vmul.f32 %v1719, 1.442695
        %v1748 = vpow.pop %v1747
        %v1749 = vmul.f32 %v1720, 1.442695
        %v1750 = vpow.pop %v1749
        %v1751 = vmul.f32 %v1721, 1.442695
        %v1752 = vpow.pop %v1751
        %v1753 = vmul.f32 %v1722, 1.442695
        %v1754 = vpow.pop %v1753
        %v1755 = vadd.f32 %v1724, 1.0
        %v1756 = vadd.f32 %v1726, 1.0
        %v1757 = vadd.f32 %v1728, 1.0
        %v1758 = vadd.f32 %v1730, 1.0
        %v1759 = vadd.f32 %v1732, 1.0
        %v1760 = vadd.f32 %v1734, 1.0
        %v1761 = vadd.f32 %v1736, 1.0
        %v1762 = vadd.f32 %v1738, 1.0
        %v1763 = vadd.f32 %v1740, 1.0
        %v1764 = vadd.f32 %v1742, 1.0
        %v1765 = vadd.f32 %v1744, 1.0
        %v1766 = vadd.f32 %v1746, 1.0
        %v1767 = vadd.f32 %v1748, 1.0
        %v1768 = vadd.f32 %v1750, 1.0
        %v1769 = vadd.f32 %v1752, 1.0
        %v1770 = vadd.f32 %v1754, 1.0
        %v1771 = vlog2.pop %v1755
        %v1772 = vmul.f32 %v1771, 0.6931472
        %v1773 = vlog2.pop %v1756
        %v1774 = vmul.f32 %v1773, 0.6931472
        %v1775 = vlog2.pop %v1757
        %v1776 = vmul.f32 %v1775, 0.6931472
        %v1777 = vlog2.pop %v1758
        %v1778 = vmul.f32 %v1777, 0.6931472
        %v1779 = vlog2.pop %v1759
        %v1780 = vmul.f32 %v1779, 0.6931472
        %v1781 = vlog2.pop %v1760
        %v1782 = vmul.f32 %v1781, 0.6931472
        %v1783 = vlog2.pop %v1761
        %v1784 = vmul.f32 %v1783, 0.6931472
        %v1785 = vlog2.pop %v1762
        %v1786 = vmul.f32 %v1785, 0.6931472
        %v1787 = vlog2.pop %v1763
        %v1788 = vmul.f32 %v1787, 0.6931472
        %v1789 = vlog2.pop %v1764
        %v1790 = vmul.f32 %v1789, 0.6931472
        %v1791 = vlog2.pop %v1765
        %v1792 = vmul.f32 %v1791, 0.6931472
        %v1793 = vlog2.pop %v1766
        %v1794 = vmul.f32 %v1793, 0.6931472
        %v1795 = vlog2.pop %v1767
        %v1796 = vmul.f32 %v1795, 0.6931472
        %v1797 = vlog2.pop %v1768
        %v1798 = vmul.f32 %v1797, 0.6931472
        %v1799 = vlog2.pop %v1769
        %v1800 = vmul.f32 %v1799, 0.6931472
        %v1801 = vlog2.pop %v1770
        %v1802 = vmul.f32 %v1801, 0.6931472
        %v1803 = vsub.f32 %v1675, %v1772
        %v1804 = vsub.f32 %v1676, %v1774
        %v1805 = vsub.f32 %v1677, %v1776
        %v1806 = vsub.f32 %v1678, %v1778
        %v1807 = vsub.f32 %v1679, %v1780
        %v1808 = vsub.f32 %v1680, %v1782
        %v1809 = vsub.f32 %v1681, %v1784
        %v1810 = vsub.f32 %v1682, %v1786
        %v1811 = vsub.f32 %v1683, %v1788
        %v1812 = vsub.f32 %v1684, %v1790
        %v1813 = vsub.f32 %v1685, %v1792
        %v1814 = vsub.f32 %v1686, %v1794
        %v1815 = vsub.f32 %v1687, %v1796
        %v1816 = vsub.f32 %v1688, %v1798
        %v1817 = vsub.f32 %v1689, %v1800
        %v1818 = vsub.f32 %v1690, %v1802
        %v1819 = vld [vmem:[#allocation2] sm:$0x1]
        %v1820 = vadd.f32 %v1803, %v1804
        %v1821 = vadd.f32 %v1820, %v1805
        %v1822 = vadd.f32 %v1821, %v1806
        %v1823 = vadd.f32 %v1822, %v1807
        %v1824 = vadd.f32 %v1823, %v1808
        %v1825 = vadd.f32 %v1824, %v1809
        %v1826 = vadd.f32 %v1825, %v1810
        %v1827 = vadd.f32 %v1826, %v1811
        %v1828 = vadd.f32 %v1827, %v1812
        %v1829 = vadd.f32 %v1828, %v1813
        %v1830 = vadd.f32 %v1829, %v1814
        %v1831 = vadd.f32 %v1830, %v1815
        %v1832 = vadd.f32 %v1831, %v1816
        %v1833 = vadd.f32 %v1832, %v1817
        %v1834 = vadd.f32 %v1833, %v1818
        %v1835 = vrot.slane %v1834, 4
        %v1836 = vadd.f32 %v1834, %v1835
        %v1837 = vrot.slane %v1836, 2
        %v1838 = vadd.f32 %v1836, %v1837
        %v1839 = vrot.slane %v1838, 1
        %v1840 = vadd.f32 %v1838, %v1839
        %v1841 = vadd.f32 %v1819, %v1840
        %1842 = vst [vmem:[#allocation2] sm:$0x1] %v1841
        %v1843 = vlaneseq
        %v1844 = vshrl.u32 %v1843, 7
        %v1845 = vsub.s32 6, %v1844
        %v1846 = vrot.slane %v308, %v1845
        %1848 = vbcast.lane.b32.xlu0 %v1846, 256
        %v1849 = vpop.permute.xlu0 %1848
        %s1851 = sor.u32 256, 8
        %1852 = vbcast.lane.b32.xlu0 %v1846, %s1851
        %v1853 = vpop.permute.xlu0 %1852
        %s1855 = sor.u32 256, 16
        %1856 = vbcast.lane.b32.xlu0 %v1846, %s1855
        %v1857 = vpop.permute.xlu0 %1856
        %s1859 = sor.u32 256, 24
        %1860 = vbcast.lane.b32.xlu0 %v1846, %s1859
        %v1861 = vpop.permute.xlu0 %1860
        %s1863 = sor.u32 256, 32
        %1864 = vbcast.lane.b32.xlu0 %v1846, %s1863
        %v1865 = vpop.permute.xlu0 %1864
        %s1867 = sor.u32 256, 40
        %1868 = vbcast.lane.b32.xlu0 %v1846, %s1867
        %v1869 = vpop.permute.xlu0 %1868
        %s1871 = sor.u32 256, 48
        %1872 = vbcast.lane.b32.xlu0 %v1846, %s1871
        %v1873 = vpop.permute.xlu0 %1872
        %s1875 = sor.u32 256, 56
        %1876 = vbcast.lane.b32.xlu0 %v1846, %s1875
        %v1877 = vpop.permute.xlu0 %1876
        %s1879 = sor.u32 256, 64
        %1880 = vbcast.lane.b32.xlu0 %v1846, %s1879
        %v1881 = vpop.permute.xlu0 %1880
        %s1883 = sor.u32 256, 72
        %1884 = vbcast.lane.b32.xlu0 %v1846, %s1883
        %v1885 = vpop.permute.xlu0 %1884
        %s1887 = sor.u32 256, 80
        %1888 = vbcast.lane.b32.xlu0 %v1846, %s1887
        %v1889 = vpop.permute.xlu0 %1888
        %s1891 = sor.u32 256, 88
        %1892 = vbcast.lane.b32.xlu0 %v1846, %s1891
        %v1893 = vpop.permute.xlu0 %1892
        %s1895 = sor.u32 256, 96
        %1896 = vbcast.lane.b32.xlu0 %v1846, %s1895
        %v1897 = vpop.permute.xlu0 %1896
        %s1899 = sor.u32 256, 104
        %1900 = vbcast.lane.b32.xlu0 %v1846, %s1899
        %v1901 = vpop.permute.xlu0 %1900
        %s1903 = sor.u32 256, 112
        %1904 = vbcast.lane.b32.xlu0 %v1846, %s1903
        %v1905 = vpop.permute.xlu0 %1904
        %s1907 = sor.u32 256, 120
        %1908 = vbcast.lane.b32.xlu0 %v1846, %s1907
        %v1909 = vpop.permute.xlu0 %1908
        %v1910 = vlaneseq
        %v1911 = vshrl.u32 %v1910, 7
        %v1912 = vsub.s32 6, %v1911
        %v1913 = vrot.slane %v310, %v1912
        %v1914 = vmul.f32 %v1849, %v1913
        %v1915 = vmul.f32 %v1853, %v1913
        %v1916 = vmul.f32 %v1857, %v1913
        %v1917 = vmul.f32 %v1861, %v1913
        %v1918 = vmul.f32 %v1865, %v1913
        %v1919 = vmul.f32 %v1869, %v1913
        %v1920 = vmul.f32 %v1873, %v1913
        %v1921 = vmul.f32 %v1877, %v1913
        %v1922 = vmul.f32 %v1881, %v1913
        %v1923 = vmul.f32 %v1885, %v1913
        %v1924 = vmul.f32 %v1889, %v1913
        %v1925 = vmul.f32 %v1893, %v1913
        %v1926 = vmul.f32 %v1897, %v1913
        %v1927 = vmul.f32 %v1901, %v1913
        %v1928 = vmul.f32 %v1905, %v1913
        %v1929 = vmul.f32 %v1909, %v1913
        %v1930 = vmin.f32 %v1914, 0.0
        %v1931 = vmin.f32 %v1915, 0.0
        %v1932 = vmin.f32 %v1916, 0.0
        %v1933 = vmin.f32 %v1917, 0.0
        %v1934 = vmin.f32 %v1918, 0.0
        %v1935 = vmin.f32 %v1919, 0.0
        %v1936 = vmin.f32 %v1920, 0.0
        %v1937 = vmin.f32 %v1921, 0.0
        %v1938 = vmin.f32 %v1922, 0.0
        %v1939 = vmin.f32 %v1923, 0.0
        %v1940 = vmin.f32 %v1924, 0.0
        %v1941 = vmin.f32 %v1925, 0.0
        %v1942 = vmin.f32 %v1926, 0.0
        %v1943 = vmin.f32 %v1927, 0.0
        %v1944 = vmin.f32 %v1928, 0.0
        %v1945 = vmin.f32 %v1929, 0.0
        %v1946 = vand.u32 2147483647, %v1914
        %v1947 = vand.u32 2147483647, %v1915
        %v1948 = vand.u32 2147483647, %v1916
        %v1949 = vand.u32 2147483647, %v1917
        %v1950 = vand.u32 2147483647, %v1918
        %v1951 = vand.u32 2147483647, %v1919
        %v1952 = vand.u32 2147483647, %v1920
        %v1953 = vand.u32 2147483647, %v1921
        %v1954 = vand.u32 2147483647, %v1922
        %v1955 = vand.u32 2147483647, %v1923
        %v1956 = vand.u32 2147483647, %v1924
        %v1957 = vand.u32 2147483647, %v1925
        %v1958 = vand.u32 2147483647, %v1926
        %v1959 = vand.u32 2147483647, %v1927
        %v1960 = vand.u32 2147483647, %v1928
        %v1961 = vand.u32 2147483647, %v1929
        %v1962 = vsub.f32 0.0, %v1946
        %v1963 = vsub.f32 0.0, %v1947
        %v1964 = vsub.f32 0.0, %v1948
        %v1965 = vsub.f32 0.0, %v1949
        %v1966 = vsub.f32 0.0, %v1950
        %v1967 = vsub.f32 0.0, %v1951
        %v1968 = vsub.f32 0.0, %v1952
        %v1969 = vsub.f32 0.0, %v1953
        %v1970 = vsub.f32 0.0, %v1954
        %v1971 = vsub.f32 0.0, %v1955
        %v1972 = vsub.f32 0.0, %v1956
        %v1973 = vsub.f32 0.0, %v1957
        %v1974 = vsub.f32 0.0, %v1958
        %v1975 = vsub.f32 0.0, %v1959
        %v1976 = vsub.f32 0.0, %v1960
        %v1977 = vsub.f32 0.0, %v1961
        %v1978 = vmul.f32 %v1962, 1.442695
        %v1979 = vpow.pop %v1978
        %v1980 = vmul.f32 %v1963, 1.442695
        %v1981 = vpow.pop %v1980
        %v1982 = vmul.f32 %v1964, 1.442695
        %v1983 = vpow.pop %v1982
        %v1984 = vmul.f32 %v1965, 1.442695
        %v1985 = vpow.pop %v1984
        %v1986 = vmul.f32 %v1966, 1.442695
        %v1987 = vpow.pop %v1986
        %v1988 = vmul.f32 %v1967, 1.442695
        %v1989 = vpow.pop %v1988
        %v1990 = vmul.f32 %v1968, 1.442695
        %v1991 = vpow.pop %v1990
        %v1992 = vmul.f32 %v1969, 1.442695
        %v1993 = vpow.pop %v1992
        %v1994 = vmul.f32 %v1970, 1.442695
        %v1995 = vpow.pop %v1994
        %v1996 = vmul.f32 %v1971, 1.442695
        %v1997 = vpow.pop %v1996
        %v1998 = vmul.f32 %v1972, 1.442695
        %v1999 = vpow.pop %v1998
        %v2000 = vmul.f32 %v1973, 1.442695
        %v2001 = vpow.pop %v2000
        %v2002 = vmul.f32 %v1974, 1.442695
        %v2003 = vpow.pop %v2002
        %v2004 = vmul.f32 %v1975, 1.442695
        %v2005 = vpow.pop %v2004
        %v2006 = vmul.f32 %v1976, 1.442695
        %v2007 = vpow.pop %v2006
        %v2008 = vmul.f32 %v1977, 1.442695
        %v2009 = vpow.pop %v2008
        %v2010 = vadd.f32 %v1979, 1.0
        %v2011 = vadd.f32 %v1981, 1.0
        %v2012 = vadd.f32 %v1983, 1.0
        %v2013 = vadd.f32 %v1985, 1.0
        %v2014 = vadd.f32 %v1987, 1.0
        %v2015 = vadd.f32 %v1989, 1.0
        %v2016 = vadd.f32 %v1991, 1.0
        %v2017 = vadd.f32 %v1993, 1.0
        %v2018 = vadd.f32 %v1995, 1.0
        %v2019 = vadd.f32 %v1997, 1.0
        %v2020 = vadd.f32 %v1999, 1.0
        %v2021 = vadd.f32 %v2001, 1.0
        %v2022 = vadd.f32 %v2003, 1.0
        %v2023 = vadd.f32 %v2005, 1.0
        %v2024 = vadd.f32 %v2007, 1.0
        %v2025 = vadd.f32 %v2009, 1.0
        %v2026 = vlog2.pop %v2010
        %v2027 = vmul.f32 %v2026, 0.6931472
        %v2028 = vlog2.pop %v2011
        %v2029 = vmul.f32 %v2028, 0.6931472
        %v2030 = vlog2.pop %v2012
        %v2031 = vmul.f32 %v2030, 0.6931472
        %v2032 = vlog2.pop %v2013
        %v2033 = vmul.f32 %v2032, 0.6931472
        %v2034 = vlog2.pop %v2014
        %v2035 = vmul.f32 %v2034, 0.6931472
        %v2036 = vlog2.pop %v2015
        %v2037 = vmul.f32 %v2036, 0.6931472
        %v2038 = vlog2.pop %v2016
        %v2039 = vmul.f32 %v2038, 0.6931472
        %v2040 = vlog2.pop %v2017
        %v2041 = vmul.f32 %v2040, 0.6931472
        %v2042 = vlog2.pop %v2018
        %v2043 = vmul.f32 %v2042, 0.6931472
        %v2044 = vlog2.pop %v2019
        %v2045 = vmul.f32 %v2044, 0.6931472
        %v2046 = vlog2.pop %v2020
        %v2047 = vmul.f32 %v2046, 0.6931472
        %v2048 = vlog2.pop %v2021
        %v2049 = vmul.f32 %v2048, 0.6931472
        %v2050 = vlog2.pop %v2022
        %v2051 = vmul.f32 %v2050, 0.6931472
        %v2052 = vlog2.pop %v2023
        %v2053 = vmul.f32 %v2052, 0.6931472
        %v2054 = vlog2.pop %v2024
        %v2055 = vmul.f32 %v2054, 0.6931472
        %v2056 = vlog2.pop %v2025
        %v2057 = vmul.f32 %v2056, 0.6931472
        %v2058 = vsub.f32 %v1930, %v2027
        %v2059 = vsub.f32 %v1931, %v2029
        %v2060 = vsub.f32 %v1932, %v2031
        %v2061 = vsub.f32 %v1933, %v2033
        %v2062 = vsub.f32 %v1934, %v2035
        %v2063 = vsub.f32 %v1935, %v2037
        %v2064 = vsub.f32 %v1936, %v2039
        %v2065 = vsub.f32 %v1937, %v2041
        %v2066 = vsub.f32 %v1938, %v2043
        %v2067 = vsub.f32 %v1939, %v2045
        %v2068 = vsub.f32 %v1940, %v2047
        %v2069 = vsub.f32 %v1941, %v2049
        %v2070 = vsub.f32 %v1942, %v2051
        %v2071 = vsub.f32 %v1943, %v2053
        %v2072 = vsub.f32 %v1944, %v2055
        %v2073 = vsub.f32 %v1945, %v2057
        %v2074 = vld [vmem:[#allocation2] sm:$0x1]
        %v2075 = vadd.f32 %v2058, %v2059
        %v2076 = vadd.f32 %v2075, %v2060
        %v2077 = vadd.f32 %v2076, %v2061
        %v2078 = vadd.f32 %v2077, %v2062
        %v2079 = vadd.f32 %v2078, %v2063
        %v2080 = vadd.f32 %v2079, %v2064
        %v2081 = vadd.f32 %v2080, %v2065
        %v2082 = vadd.f32 %v2081, %v2066
        %v2083 = vadd.f32 %v2082, %v2067
        %v2084 = vadd.f32 %v2083, %v2068
        %v2085 = vadd.f32 %v2084, %v2069
        %v2086 = vadd.f32 %v2085, %v2070
        %v2087 = vadd.f32 %v2086, %v2071
        %v2088 = vadd.f32 %v2087, %v2072
        %v2089 = vadd.f32 %v2088, %v2073
        %v2090 = vrot.slane %v2089, 4
        %v2091 = vadd.f32 %v2089, %v2090
        %v2092 = vrot.slane %v2091, 2
        %v2093 = vadd.f32 %v2091, %v2092
        %v2094 = vrot.slane %v2093, 1
        %v2095 = vadd.f32 %v2093, %v2094
        %v2096 = vadd.f32 %v2074, %v2095
        %2097 = vst [vmem:[#allocation2] sm:$0x1] %v2096
        %v2098 = vlaneseq
        %v2099 = vshrl.u32 %v2098, 7
        %v2100 = vsub.s32 7, %v2099
        %v2101 = vrot.slane %v308, %v2100
        %2103 = vbcast.lane.b32.xlu0 %v2101, 256
        %v2104 = vpop.permute.xlu0 %2103
        %s2106 = sor.u32 256, 8
        %2107 = vbcast.lane.b32.xlu0 %v2101, %s2106
        %v2108 = vpop.permute.xlu0 %2107
        %s2110 = sor.u32 256, 16
        %2111 = vbcast.lane.b32.xlu0 %v2101, %s2110
        %v2112 = vpop.permute.xlu0 %2111
        %s2114 = sor.u32 256, 24
        %2115 = vbcast.lane.b32.xlu0 %v2101, %s2114
        %v2116 = vpop.permute.xlu0 %2115
        %s2118 = sor.u32 256, 32
        %2119 = vbcast.lane.b32.xlu0 %v2101, %s2118
        %v2120 = vpop.permute.xlu0 %2119
        %s2122 = sor.u32 256, 40
        %2123 = vbcast.lane.b32.xlu0 %v2101, %s2122
        %v2124 = vpop.permute.xlu0 %2123
        %s2126 = sor.u32 256, 48
        %2127 = vbcast.lane.b32.xlu0 %v2101, %s2126
        %v2128 = vpop.permute.xlu0 %2127
        %s2130 = sor.u32 256, 56
        %2131 = vbcast.lane.b32.xlu0 %v2101, %s2130
        %v2132 = vpop.permute.xlu0 %2131
        %s2134 = sor.u32 256, 64
        %2135 = vbcast.lane.b32.xlu0 %v2101, %s2134
        %v2136 = vpop.permute.xlu0 %2135
        %s2138 = sor.u32 256, 72
        %2139 = vbcast.lane.b32.xlu0 %v2101, %s2138
        %v2140 = vpop.permute.xlu0 %2139
        %s2142 = sor.u32 256, 80
        %2143 = vbcast.lane.b32.xlu0 %v2101, %s2142
        %v2144 = vpop.permute.xlu0 %2143
        %s2146 = sor.u32 256, 88
        %2147 = vbcast.lane.b32.xlu0 %v2101, %s2146
        %v2148 = vpop.permute.xlu0 %2147
        %s2150 = sor.u32 256, 96
        %2151 = vbcast.lane.b32.xlu0 %v2101, %s2150
        %v2152 = vpop.permute.xlu0 %2151
        %s2154 = sor.u32 256, 104
        %2155 = vbcast.lane.b32.xlu0 %v2101, %s2154
        %v2156 = vpop.permute.xlu0 %2155
        %s2158 = sor.u32 256, 112
        %2159 = vbcast.lane.b32.xlu0 %v2101, %s2158
        %v2160 = vpop.permute.xlu0 %2159
        %s2162 = sor.u32 256, 120
        %2163 = vbcast.lane.b32.xlu0 %v2101, %s2162
        %v2164 = vpop.permute.xlu0 %2163
        %v2165 = vlaneseq
        %v2166 = vshrl.u32 %v2165, 7
        %v2167 = vsub.s32 7, %v2166
        %v2168 = vrot.slane %v310, %v2167
        %v2169 = vmul.f32 %v2104, %v2168
        %v2170 = vmul.f32 %v2108, %v2168
        %v2171 = vmul.f32 %v2112, %v2168
        %v2172 = vmul.f32 %v2116, %v2168
        %v2173 = vmul.f32 %v2120, %v2168
        %v2174 = vmul.f32 %v2124, %v2168
        %v2175 = vmul.f32 %v2128, %v2168
        %v2176 = vmul.f32 %v2132, %v2168
        %v2177 = vmul.f32 %v2136, %v2168
        %v2178 = vmul.f32 %v2140, %v2168
        %v2179 = vmul.f32 %v2144, %v2168
        %v2180 = vmul.f32 %v2148, %v2168
        %v2181 = vmul.f32 %v2152, %v2168
        %v2182 = vmul.f32 %v2156, %v2168
        %v2183 = vmul.f32 %v2160, %v2168
        %v2184 = vmul.f32 %v2164, %v2168
        %v2185 = vmin.f32 %v2169, 0.0
        %v2186 = vmin.f32 %v2170, 0.0
        %v2187 = vmin.f32 %v2171, 0.0
        %v2188 = vmin.f32 %v2172, 0.0
        %v2189 = vmin.f32 %v2173, 0.0
        %v2190 = vmin.f32 %v2174, 0.0
        %v2191 = vmin.f32 %v2175, 0.0
        %v2192 = vmin.f32 %v2176, 0.0
        %v2193 = vmin.f32 %v2177, 0.0
        %v2194 = vmin.f32 %v2178, 0.0
        %v2195 = vmin.f32 %v2179, 0.0
        %v2196 = vmin.f32 %v2180, 0.0
        %v2197 = vmin.f32 %v2181, 0.0
        %v2198 = vmin.f32 %v2182, 0.0
        %v2199 = vmin.f32 %v2183, 0.0
        %v2200 = vmin.f32 %v2184, 0.0
        %v2201 = vand.u32 2147483647, %v2169
        %v2202 = vand.u32 2147483647, %v2170
        %v2203 = vand.u32 2147483647, %v2171
        %v2204 = vand.u32 2147483647, %v2172
        %v2205 = vand.u32 2147483647, %v2173
        %v2206 = vand.u32 2147483647, %v2174
        %v2207 = vand.u32 2147483647, %v2175
        %v2208 = vand.u32 2147483647, %v2176
        %v2209 = vand.u32 2147483647, %v2177
        %v2210 = vand.u32 2147483647, %v2178
        %v2211 = vand.u32 2147483647, %v2179
        %v2212 = vand.u32 2147483647, %v2180
        %v2213 = vand.u32 2147483647, %v2181
        %v2214 = vand.u32 2147483647, %v2182
        %v2215 = vand.u32 2147483647, %v2183
        %v2216 = vand.u32 2147483647, %v2184
        %v2217 = vsub.f32 0.0, %v2201
        %v2218 = vsub.f32 0.0, %v2202
        %v2219 = vsub.f32 0.0, %v2203
        %v2220 = vsub.f32 0.0, %v2204
        %v2221 = vsub.f32 0.0, %v2205
        %v2222 = vsub.f32 0.0, %v2206
        %v2223 = vsub.f32 0.0, %v2207
        %v2224 = vsub.f32 0.0, %v2208
        %v2225 = vsub.f32 0.0, %v2209
        %v2226 = vsub.f32 0.0, %v2210
        %v2227 = vsub.f32 0.0, %v2211
        %v2228 = vsub.f32 0.0, %v2212
        %v2229 = vsub.f32 0.0, %v2213
        %v2230 = vsub.f32 0.0, %v2214
        %v2231 = vsub.f32 0.0, %v2215
        %v2232 = vsub.f32 0.0, %v2216
        %v2233 = vmul.f32 %v2217, 1.442695
        %v2234 = vpow.pop %v2233
        %v2235 = vmul.f32 %v2218, 1.442695
        %v2236 = vpow.pop %v2235
        %v2237 = vmul.f32 %v2219, 1.442695
        %v2238 = vpow.pop %v2237
        %v2239 = vmul.f32 %v2220, 1.442695
        %v2240 = vpow.pop %v2239
        %v2241 = vmul.f32 %v2221, 1.442695
        %v2242 = vpow.pop %v2241
        %v2243 = vmul.f32 %v2222, 1.442695
        %v2244 = vpow.pop %v2243
        %v2245 = vmul.f32 %v2223, 1.442695
        %v2246 = vpow.pop %v2245
        %v2247 = vmul.f32 %v2224, 1.442695
        %v2248 = vpow.pop %v2247
        %v2249 = vmul.f32 %v2225, 1.442695
        %v2250 = vpow.pop %v2249
        %v2251 = vmul.f32 %v2226, 1.442695
        %v2252 = vpow.pop %v2251
        %v2253 = vmul.f32 %v2227, 1.442695
        %v2254 = vpow.pop %v2253
        %v2255 = vmul.f32 %v2228, 1.442695
        %v2256 = vpow.pop %v2255
        %v2257 = vmul.f32 %v2229, 1.442695
        %v2258 = vpow.pop %v2257
        %v2259 = vmul.f32 %v2230, 1.442695
        %v2260 = vpow.pop %v2259
        %v2261 = vmul.f32 %v2231, 1.442695
        %v2262 = vpow.pop %v2261
        %v2263 = vmul.f32 %v2232, 1.442695
        %v2264 = vpow.pop %v2263
        %v2265 = vadd.f32 %v2234, 1.0
        %v2266 = vadd.f32 %v2236, 1.0
        %v2267 = vadd.f32 %v2238, 1.0
        %v2268 = vadd.f32 %v2240, 1.0
        %v2269 = vadd.f32 %v2242, 1.0
        %v2270 = vadd.f32 %v2244, 1.0
        %v2271 = vadd.f32 %v2246, 1.0
        %v2272 = vadd.f32 %v2248, 1.0
        %v2273 = vadd.f32 %v2250, 1.0
        %v2274 = vadd.f32 %v2252, 1.0
        %v2275 = vadd.f32 %v2254, 1.0
        %v2276 = vadd.f32 %v2256, 1.0
        %v2277 = vadd.f32 %v2258, 1.0
        %v2278 = vadd.f32 %v2260, 1.0
        %v2279 = vadd.f32 %v2262, 1.0
        %v2280 = vadd.f32 %v2264, 1.0
        %v2281 = vlog2.pop %v2265
        %v2282 = vmul.f32 %v2281, 0.6931472
        %v2283 = vlog2.pop %v2266
        %v2284 = vmul.f32 %v2283, 0.6931472
        %v2285 = vlog2.pop %v2267
        %v2286 = vmul.f32 %v2285, 0.6931472
        %v2287 = vlog2.pop %v2268
        %v2288 = vmul.f32 %v2287, 0.6931472
        %v2289 = vlog2.pop %v2269
        %v2290 = vmul.f32 %v2289, 0.6931472
        %v2291 = vlog2.pop %v2270
        %v2292 = vmul.f32 %v2291, 0.6931472
        %v2293 = vlog2.pop %v2271
        %v2294 = vmul.f32 %v2293, 0.6931472
        %v2295 = vlog2.pop %v2272
        %v2296 = vmul.f32 %v2295, 0.6931472
        %v2297 = vlog2.pop %v2273
        %v2298 = vmul.f32 %v2297, 0.6931472
        %v2299 = vlog2.pop %v2274
        %v2300 = vmul.f32 %v2299, 0.6931472
        %v2301 = vlog2.pop %v2275
        %v2302 = vmul.f32 %v2301, 0.6931472
        %v2303 = vlog2.pop %v2276
        %v2304 = vmul.f32 %v2303, 0.6931472
        %v2305 = vlog2.pop %v2277
        %v2306 = vmul.f32 %v2305, 0.6931472
        %v2307 = vlog2.pop %v2278
        %v2308 = vmul.f32 %v2307, 0.6931472
        %v2309 = vlog2.pop %v2279
        %v2310 = vmul.f32 %v2309, 0.6931472
        %v2311 = vlog2.pop %v2280
        %v2312 = vmul.f32 %v2311, 0.6931472
        %v2313 = vsub.f32 %v2185, %v2282
        %v2314 = vsub.f32 %v2186, %v2284
        %v2315 = vsub.f32 %v2187, %v2286
        %v2316 = vsub.f32 %v2188, %v2288
        %v2317 = vsub.f32 %v2189, %v2290
        %v2318 = vsub.f32 %v2190, %v2292
        %v2319 = vsub.f32 %v2191, %v2294
        %v2320 = vsub.f32 %v2192, %v2296
        %v2321 = vsub.f32 %v2193, %v2298
        %v2322 = vsub.f32 %v2194, %v2300
        %v2323 = vsub.f32 %v2195, %v2302
        %v2324 = vsub.f32 %v2196, %v2304
        %v2325 = vsub.f32 %v2197, %v2306
        %v2326 = vsub.f32 %v2198, %v2308
        %v2327 = vsub.f32 %v2199, %v2310
        %v2328 = vsub.f32 %v2200, %v2312
        %v2329 = vld [vmem:[#allocation2] sm:$0x1]
        %v2330 = vadd.f32 %v2313, %v2314
        %v2331 = vadd.f32 %v2330, %v2315
        %v2332 = vadd.f32 %v2331, %v2316
        %v2333 = vadd.f32 %v2332, %v2317
        %v2334 = vadd.f32 %v2333, %v2318
        %v2335 = vadd.f32 %v2334, %v2319
        %v2336 = vadd.f32 %v2335, %v2320
        %v2337 = vadd.f32 %v2336, %v2321
        %v2338 = vadd.f32 %v2337, %v2322
        %v2339 = vadd.f32 %v2338, %v2323
        %v2340 = vadd.f32 %v2339, %v2324
        %v2341 = vadd.f32 %v2340, %v2325
        %v2342 = vadd.f32 %v2341, %v2326
        %v2343 = vadd.f32 %v2342, %v2327
        %v2344 = vadd.f32 %v2343, %v2328
        %v2345 = vrot.slane %v2344, 4
        %v2346 = vadd.f32 %v2344, %v2345
        %v2347 = vrot.slane %v2346, 2
        %v2348 = vadd.f32 %v2346, %v2347
        %v2349 = vrot.slane %v2348, 1
        %v2350 = vadd.f32 %v2348, %v2349
        %v2351 = vadd.f32 %v2329, %v2350
        %2352 = vst [vmem:[#allocation2] sm:$0x1] %v2351
        %v2353 = vlaneseq
        %v2354 = vshrl.u32 %v2353, 7
        %v2355 = vsub.s32 0, %v2354
        %v2356 = vrot.slane %v309, %v2355
        %2358 = vbcast.lane.b32.xlu0 %v2356, 256
        %v2359 = vpop.permute.xlu0 %2358
        %s2361 = sor.u32 256, 8
        %2362 = vbcast.lane.b32.xlu0 %v2356, %s2361
        %v2363 = vpop.permute.xlu0 %2362
        %s2365 = sor.u32 256, 16
        %2366 = vbcast.lane.b32.xlu0 %v2356, %s2365
        %v2367 = vpop.permute.xlu0 %2366
        %s2369 = sor.u32 256, 24
        %2370 = vbcast.lane.b32.xlu0 %v2356, %s2369
        %v2371 = vpop.permute.xlu0 %2370
        %s2373 = sor.u32 256, 32
        %2374 = vbcast.lane.b32.xlu0 %v2356, %s2373
        %v2375 = vpop.permute.xlu0 %2374
        %s2377 = sor.u32 256, 40
        %2378 = vbcast.lane.b32.xlu0 %v2356, %s2377
        %v2379 = vpop.permute.xlu0 %2378
        %s2381 = sor.u32 256, 48
        %2382 = vbcast.lane.b32.xlu0 %v2356, %s2381
        %v2383 = vpop.permute.xlu0 %2382
        %s2385 = sor.u32 256, 56
        %2386 = vbcast.lane.b32.xlu0 %v2356, %s2385
        %v2387 = vpop.permute.xlu0 %2386
        %s2389 = sor.u32 256, 64
        %2390 = vbcast.lane.b32.xlu0 %v2356, %s2389
        %v2391 = vpop.permute.xlu0 %2390
        %s2393 = sor.u32 256, 72
        %2394 = vbcast.lane.b32.xlu0 %v2356, %s2393
        %v2395 = vpop.permute.xlu0 %2394
        %s2397 = sor.u32 256, 80
        %2398 = vbcast.lane.b32.xlu0 %v2356, %s2397
        %v2399 = vpop.permute.xlu0 %2398
        %s2401 = sor.u32 256, 88
        %2402 = vbcast.lane.b32.xlu0 %v2356, %s2401
        %v2403 = vpop.permute.xlu0 %2402
        %s2405 = sor.u32 256, 96
        %2406 = vbcast.lane.b32.xlu0 %v2356, %s2405
        %v2407 = vpop.permute.xlu0 %2406
        %s2409 = sor.u32 256, 104
        %2410 = vbcast.lane.b32.xlu0 %v2356, %s2409
        %v2411 = vpop.permute.xlu0 %2410
        %s2413 = sor.u32 256, 112
        %2414 = vbcast.lane.b32.xlu0 %v2356, %s2413
        %v2415 = vpop.permute.xlu0 %2414
        %s2417 = sor.u32 256, 120
        %2418 = vbcast.lane.b32.xlu0 %v2356, %s2417
        %v2419 = vpop.permute.xlu0 %2418
        %v2420 = vlaneseq
        %v2421 = vshrl.u32 %v2420, 7
        %v2422 = vsub.s32 0, %v2421
        %v2423 = vrot.slane %v311, %v2422
        %v2424 = vmul.f32 %v2359, %v2423
        %v2425 = vmul.f32 %v2363, %v2423
        %v2426 = vmul.f32 %v2367, %v2423
        %v2427 = vmul.f32 %v2371, %v2423
        %v2428 = vmul.f32 %v2375, %v2423
        %v2429 = vmul.f32 %v2379, %v2423
        %v2430 = vmul.f32 %v2383, %v2423
        %v2431 = vmul.f32 %v2387, %v2423
        %v2432 = vmul.f32 %v2391, %v2423
        %v2433 = vmul.f32 %v2395, %v2423
        %v2434 = vmul.f32 %v2399, %v2423
        %v2435 = vmul.f32 %v2403, %v2423
        %v2436 = vmul.f32 %v2407, %v2423
        %v2437 = vmul.f32 %v2411, %v2423
        %v2438 = vmul.f32 %v2415, %v2423
        %v2439 = vmul.f32 %v2419, %v2423
        %v2440 = vmin.f32 %v2424, 0.0
        %v2441 = vmin.f32 %v2425, 0.0
        %v2442 = vmin.f32 %v2426, 0.0
        %v2443 = vmin.f32 %v2427, 0.0
        %v2444 = vmin.f32 %v2428, 0.0
        %v2445 = vmin.f32 %v2429, 0.0
        %v2446 = vmin.f32 %v2430, 0.0
        %v2447 = vmin.f32 %v2431, 0.0
        %v2448 = vmin.f32 %v2432, 0.0
        %v2449 = vmin.f32 %v2433, 0.0
        %v2450 = vmin.f32 %v2434, 0.0
        %v2451 = vmin.f32 %v2435, 0.0
        %v2452 = vmin.f32 %v2436, 0.0
        %v2453 = vmin.f32 %v2437, 0.0
        %v2454 = vmin.f32 %v2438, 0.0
        %v2455 = vmin.f32 %v2439, 0.0
        %v2456 = vand.u32 2147483647, %v2424
        %v2457 = vand.u32 2147483647, %v2425
        %v2458 = vand.u32 2147483647, %v2426
        %v2459 = vand.u32 2147483647, %v2427
        %v2460 = vand.u32 2147483647, %v2428
        %v2461 = vand.u32 2147483647, %v2429
        %v2462 = vand.u32 2147483647, %v2430
        %v2463 = vand.u32 2147483647, %v2431
        %v2464 = vand.u32 2147483647, %v2432
        %v2465 = vand.u32 2147483647, %v2433
        %v2466 = vand.u32 2147483647, %v2434
        %v2467 = vand.u32 2147483647, %v2435
        %v2468 = vand.u32 2147483647, %v2436
        %v2469 = vand.u32 2147483647, %v2437
        %v2470 = vand.u32 2147483647, %v2438
        %v2471 = vand.u32 2147483647, %v2439
        %v2472 = vsub.f32 0.0, %v2456
        %v2473 = vsub.f32 0.0, %v2457
        %v2474 = vsub.f32 0.0, %v2458
        %v2475 = vsub.f32 0.0, %v2459
        %v2476 = vsub.f32 0.0, %v2460
        %v2477 = vsub.f32 0.0, %v2461
        %v2478 = vsub.f32 0.0, %v2462
        %v2479 = vsub.f32 0.0, %v2463
        %v2480 = vsub.f32 0.0, %v2464
        %v2481 = vsub.f32 0.0, %v2465
        %v2482 = vsub.f32 0.0, %v2466
        %v2483 = vsub.f32 0.0, %v2467
        %v2484 = vsub.f32 0.0, %v2468
        %v2485 = vsub.f32 0.0, %v2469
        %v2486 = vsub.f32 0.0, %v2470
        %v2487 = vsub.f32 0.0, %v2471
        %v2488 = vmul.f32 %v2472, 1.442695
        %v2489 = vpow.pop %v2488
        %v2490 = vmul.f32 %v2473, 1.442695
        %v2491 = vpow.pop %v2490
        %v2492 = vmul.f32 %v2474, 1.442695
        %v2493 = vpow.pop %v2492
        %v2494 = vmul.f32 %v2475, 1.442695
        %v2495 = vpow.pop %v2494
        %v2496 = vmul.f32 %v2476, 1.442695
        %v2497 = vpow.pop %v2496
        %v2498 = vmul.f32 %v2477, 1.442695
        %v2499 = vpow.pop %v2498
        %v2500 = vmul.f32 %v2478, 1.442695
        %v2501 = vpow.pop %v2500
        %v2502 = vmul.f32 %v2479, 1.442695
        %v2503 = vpow.pop %v2502
        %v2504 = vmul.f32 %v2480, 1.442695
        %v2505 = vpow.pop %v2504
        %v2506 = vmul.f32 %v2481, 1.442695
        %v2507 = vpow.pop %v2506
        %v2508 = vmul.f32 %v2482, 1.442695
        %v2509 = vpow.pop %v2508
        %v2510 = vmul.f32 %v2483, 1.442695
        %v2511 = vpow.pop %v2510
        %v2512 = vmul.f32 %v2484, 1.442695
        %v2513 = vpow.pop %v2512
        %v2514 = vmul.f32 %v2485, 1.442695
        %v2515 = vpow.pop %v2514
        %v2516 = vmul.f32 %v2486, 1.442695
        %v2517 = vpow.pop %v2516
        %v2518 = vmul.f32 %v2487, 1.442695
        %v2519 = vpow.pop %v2518
        %v2520 = vadd.f32 %v2489, 1.0
        %v2521 = vadd.f32 %v2491, 1.0
        %v2522 = vadd.f32 %v2493, 1.0
        %v2523 = vadd.f32 %v2495, 1.0
        %v2524 = vadd.f32 %v2497, 1.0
        %v2525 = vadd.f32 %v2499, 1.0
        %v2526 = vadd.f32 %v2501, 1.0
        %v2527 = vadd.f32 %v2503, 1.0
        %v2528 = vadd.f32 %v2505, 1.0
        %v2529 = vadd.f32 %v2507, 1.0
        %v2530 = vadd.f32 %v2509, 1.0
        %v2531 = vadd.f32 %v2511, 1.0
        %v2532 = vadd.f32 %v2513, 1.0
        %v2533 = vadd.f32 %v2515, 1.0
        %v2534 = vadd.f32 %v2517, 1.0
        %v2535 = vadd.f32 %v2519, 1.0
        %v2536 = vlog2.pop %v2520
        %v2537 = vmul.f32 %v2536, 0.6931472
        %v2538 = vlog2.pop %v2521
        %v2539 = vmul.f32 %v2538, 0.6931472
        %v2540 = vlog2.pop %v2522
        %v2541 = vmul.f32 %v2540, 0.6931472
        %v2542 = vlog2.pop %v2523
        %v2543 = vmul.f32 %v2542, 0.6931472
        %v2544 = vlog2.pop %v2524
        %v2545 = vmul.f32 %v2544, 0.6931472
        %v2546 = vlog2.pop %v2525
        %v2547 = vmul.f32 %v2546, 0.6931472
        %v2548 = vlog2.pop %v2526
        %v2549 = vmul.f32 %v2548, 0.6931472
        %v2550 = vlog2.pop %v2527
        %v2551 = vmul.f32 %v2550, 0.6931472
        %v2552 = vlog2.pop %v2528
        %v2553 = vmul.f32 %v2552, 0.6931472
        %v2554 = vlog2.pop %v2529
        %v2555 = vmul.f32 %v2554, 0.6931472
        %v2556 = vlog2.pop %v2530
        %v2557 = vmul.f32 %v2556, 0.6931472
        %v2558 = vlog2.pop %v2531
        %v2559 = vmul.f32 %v2558, 0.6931472
        %v2560 = vlog2.pop %v2532
        %v2561 = vmul.f32 %v2560, 0.6931472
        %v2562 = vlog2.pop %v2533
        %v2563 = vmul.f32 %v2562, 0.6931472
        %v2564 = vlog2.pop %v2534
        %v2565 = vmul.f32 %v2564, 0.6931472
        %v2566 = vlog2.pop %v2535
        %v2567 = vmul.f32 %v2566, 0.6931472
        %v2568 = vsub.f32 %v2440, %v2537
        %v2569 = vsub.f32 %v2441, %v2539
        %v2570 = vsub.f32 %v2442, %v2541
        %v2571 = vsub.f32 %v2443, %v2543
        %v2572 = vsub.f32 %v2444, %v2545
        %v2573 = vsub.f32 %v2445, %v2547
        %v2574 = vsub.f32 %v2446, %v2549
        %v2575 = vsub.f32 %v2447, %v2551
        %v2576 = vsub.f32 %v2448, %v2553
        %v2577 = vsub.f32 %v2449, %v2555
        %v2578 = vsub.f32 %v2450, %v2557
        %v2579 = vsub.f32 %v2451, %v2559
        %v2580 = vsub.f32 %v2452, %v2561
        %v2581 = vsub.f32 %v2453, %v2563
        %v2582 = vsub.f32 %v2454, %v2565
        %v2583 = vsub.f32 %v2455, %v2567
        %v2584 = vld [vmem:[#allocation2] sm:$0x1]
        %v2585 = vadd.f32 %v2568, %v2569
        %v2586 = vadd.f32 %v2585, %v2570
        %v2587 = vadd.f32 %v2586, %v2571
        %v2588 = vadd.f32 %v2587, %v2572
        %v2589 = vadd.f32 %v2588, %v2573
        %v2590 = vadd.f32 %v2589, %v2574
        %v2591 = vadd.f32 %v2590, %v2575
        %v2592 = vadd.f32 %v2591, %v2576
        %v2593 = vadd.f32 %v2592, %v2577
        %v2594 = vadd.f32 %v2593, %v2578
        %v2595 = vadd.f32 %v2594, %v2579
        %v2596 = vadd.f32 %v2595, %v2580
        %v2597 = vadd.f32 %v2596, %v2581
        %v2598 = vadd.f32 %v2597, %v2582
        %v2599 = vadd.f32 %v2598, %v2583
        %v2600 = vrot.slane %v2599, 4
        %v2601 = vadd.f32 %v2599, %v2600
        %v2602 = vrot.slane %v2601, 2
        %v2603 = vadd.f32 %v2601, %v2602
        %v2604 = vrot.slane %v2603, 1
        %v2605 = vadd.f32 %v2603, %v2604
        %v2606 = vadd.f32 %v2584, %v2605
        %2607 = vst [vmem:[#allocation2] sm:$0x1] %v2606
        %v2608 = vlaneseq
        %v2609 = vshrl.u32 %v2608, 7
        %v2610 = vsub.s32 1, %v2609
        %v2611 = vrot.slane %v309, %v2610
        %2613 = vbcast.lane.b32.xlu0 %v2611, 256
        %v2614 = vpop.permute.xlu0 %2613
        %s2616 = sor.u32 256, 8
        %2617 = vbcast.lane.b32.xlu0 %v2611, %s2616
        %v2618 = vpop.permute.xlu0 %2617
        %s2620 = sor.u32 256, 16
        %2621 = vbcast.lane.b32.xlu0 %v2611, %s2620
        %v2622 = vpop.permute.xlu0 %2621
        %s2624 = sor.u32 256, 24
        %2625 = vbcast.lane.b32.xlu0 %v2611, %s2624
        %v2626 = vpop.permute.xlu0 %2625
        %s2628 = sor.u32 256, 32
        %2629 = vbcast.lane.b32.xlu0 %v2611, %s2628
        %v2630 = vpop.permute.xlu0 %2629
        %s2632 = sor.u32 256, 40
        %2633 = vbcast.lane.b32.xlu0 %v2611, %s2632
        %v2634 = vpop.permute.xlu0 %2633
        %s2636 = sor.u32 256, 48
        %2637 = vbcast.lane.b32.xlu0 %v2611, %s2636
        %v2638 = vpop.permute.xlu0 %2637
        %s2640 = sor.u32 256, 56
        %2641 = vbcast.lane.b32.xlu0 %v2611, %s2640
        %v2642 = vpop.permute.xlu0 %2641
        %s2644 = sor.u32 256, 64
        %2645 = vbcast.lane.b32.xlu0 %v2611, %s2644
        %v2646 = vpop.permute.xlu0 %2645
        %s2648 = sor.u32 256, 72
        %2649 = vbcast.lane.b32.xlu0 %v2611, %s2648
        %v2650 = vpop.permute.xlu0 %2649
        %s2652 = sor.u32 256, 80
        %2653 = vbcast.lane.b32.xlu0 %v2611, %s2652
        %v2654 = vpop.permute.xlu0 %2653
        %s2656 = sor.u32 256, 88
        %2657 = vbcast.lane.b32.xlu0 %v2611, %s2656
        %v2658 = vpop.permute.xlu0 %2657
        %s2660 = sor.u32 256, 96
        %2661 = vbcast.lane.b32.xlu0 %v2611, %s2660
        %v2662 = vpop.permute.xlu0 %2661
        %s2664 = sor.u32 256, 104
        %2665 = vbcast.lane.b32.xlu0 %v2611, %s2664
        %v2666 = vpop.permute.xlu0 %2665
        %s2668 = sor.u32 256, 112
        %2669 = vbcast.lane.b32.xlu0 %v2611, %s2668
        %v2670 = vpop.permute.xlu0 %2669
        %s2672 = sor.u32 256, 120
        %2673 = vbcast.lane.b32.xlu0 %v2611, %s2672
        %v2674 = vpop.permute.xlu0 %2673
        %v2675 = vlaneseq
        %v2676 = vshrl.u32 %v2675, 7
        %v2677 = vsub.s32 1, %v2676
        %v2678 = vrot.slane %v311, %v2677
        %v2679 = vmul.f32 %v2614, %v2678
        %v2680 = vmul.f32 %v2618, %v2678
        %v2681 = vmul.f32 %v2622, %v2678
        %v2682 = vmul.f32 %v2626, %v2678
        %v2683 = vmul.f32 %v2630, %v2678
        %v2684 = vmul.f32 %v2634, %v2678
        %v2685 = vmul.f32 %v2638, %v2678
        %v2686 = vmul.f32 %v2642, %v2678
        %v2687 = vmul.f32 %v2646, %v2678
        %v2688 = vmul.f32 %v2650, %v2678
        %v2689 = vmul.f32 %v2654, %v2678
        %v2690 = vmul.f32 %v2658, %v2678
        %v2691 = vmul.f32 %v2662, %v2678
        %v2692 = vmul.f32 %v2666, %v2678
        %v2693 = vmul.f32 %v2670, %v2678
        %v2694 = vmul.f32 %v2674, %v2678
        %v2695 = vmin.f32 %v2679, 0.0
        %v2696 = vmin.f32 %v2680, 0.0
        %v2697 = vmin.f32 %v2681, 0.0
        %v2698 = vmin.f32 %v2682, 0.0
        %v2699 = vmin.f32 %v2683, 0.0
        %v2700 = vmin.f32 %v2684, 0.0
        %v2701 = vmin.f32 %v2685, 0.0
        %v2702 = vmin.f32 %v2686, 0.0
        %v2703 = vmin.f32 %v2687, 0.0
        %v2704 = vmin.f32 %v2688, 0.0
        %v2705 = vmin.f32 %v2689, 0.0
        %v2706 = vmin.f32 %v2690, 0.0
        %v2707 = vmin.f32 %v2691, 0.0
        %v2708 = vmin.f32 %v2692, 0.0
        %v2709 = vmin.f32 %v2693, 0.0
        %v2710 = vmin.f32 %v2694, 0.0
        %v2711 = vand.u32 2147483647, %v2679
        %v2712 = vand.u32 2147483647, %v2680
        %v2713 = vand.u32 2147483647, %v2681
        %v2714 = vand.u32 2147483647, %v2682
        %v2715 = vand.u32 2147483647, %v2683
        %v2716 = vand.u32 2147483647, %v2684
        %v2717 = vand.u32 2147483647, %v2685
        %v2718 = vand.u32 2147483647, %v2686
        %v2719 = vand.u32 2147483647, %v2687
        %v2720 = vand.u32 2147483647, %v2688
        %v2721 = vand.u32 2147483647, %v2689
        %v2722 = vand.u32 2147483647, %v2690
        %v2723 = vand.u32 2147483647, %v2691
        %v2724 = vand.u32 2147483647, %v2692
        %v2725 = vand.u32 2147483647, %v2693
        %v2726 = vand.u32 2147483647, %v2694
        %v2727 = vsub.f32 0.0, %v2711
        %v2728 = vsub.f32 0.0, %v2712
        %v2729 = vsub.f32 0.0, %v2713
        %v2730 = vsub.f32 0.0, %v2714
        %v2731 = vsub.f32 0.0, %v2715
        %v2732 = vsub.f32 0.0, %v2716
        %v2733 = vsub.f32 0.0, %v2717
        %v2734 = vsub.f32 0.0, %v2718
        %v2735 = vsub.f32 0.0, %v2719
        %v2736 = vsub.f32 0.0, %v2720
        %v2737 = vsub.f32 0.0, %v2721
        %v2738 = vsub.f32 0.0, %v2722
        %v2739 = vsub.f32 0.0, %v2723
        %v2740 = vsub.f32 0.0, %v2724
        %v2741 = vsub.f32 0.0, %v2725
        %v2742 = vsub.f32 0.0, %v2726
        %v2743 = vmul.f32 %v2727, 1.442695
        %v2744 = vpow.pop %v2743
        %v2745 = vmul.f32 %v2728, 1.442695
        %v2746 = vpow.pop %v2745
        %v2747 = vmul.f32 %v2729, 1.442695
        %v2748 = vpow.pop %v2747
        %v2749 = vmul.f32 %v2730, 1.442695
        %v2750 = vpow.pop %v2749
        %v2751 = vmul.f32 %v2731, 1.442695
        %v2752 = vpow.pop %v2751
        %v2753 = vmul.f32 %v2732, 1.442695
        %v2754 = vpow.pop %v2753
        %v2755 = vmul.f32 %v2733, 1.442695
        %v2756 = vpow.pop %v2755
        %v2757 = vmul.f32 %v2734, 1.442695
        %v2758 = vpow.pop %v2757
        %v2759 = vmul.f32 %v2735, 1.442695
        %v2760 = vpow.pop %v2759
        %v2761 = vmul.f32 %v2736, 1.442695
        %v2762 = vpow.pop %v2761
        %v2763 = vmul.f32 %v2737, 1.442695
        %v2764 = vpow.pop %v2763
        %v2765 = vmul.f32 %v2738, 1.442695
        %v2766 = vpow.pop %v2765
        %v2767 = vmul.f32 %v2739, 1.442695
        %v2768 = vpow.pop %v2767
        %v2769 = vmul.f32 %v2740, 1.442695
        %v2770 = vpow.pop %v2769
        %v2771 = vmul.f32 %v2741, 1.442695
        %v2772 = vpow.pop %v2771
        %v2773 = vmul.f32 %v2742, 1.442695
        %v2774 = vpow.pop %v2773
        %v2775 = vadd.f32 %v2744, 1.0
        %v2776 = vadd.f32 %v2746, 1.0
        %v2777 = vadd.f32 %v2748, 1.0
        %v2778 = vadd.f32 %v2750, 1.0
        %v2779 = vadd.f32 %v2752, 1.0
        %v2780 = vadd.f32 %v2754, 1.0
        %v2781 = vadd.f32 %v2756, 1.0
        %v2782 = vadd.f32 %v2758, 1.0
        %v2783 = vadd.f32 %v2760, 1.0
        %v2784 = vadd.f32 %v2762, 1.0
        %v2785 = vadd.f32 %v2764, 1.0
        %v2786 = vadd.f32 %v2766, 1.0
        %v2787 = vadd.f32 %v2768, 1.0
        %v2788 = vadd.f32 %v2770, 1.0
        %v2789 = vadd.f32 %v2772, 1.0
        %v2790 = vadd.f32 %v2774, 1.0
        %v2791 = vlog2.pop %v2775
        %v2792 = vmul.f32 %v2791, 0.6931472
        %v2793 = vlog2.pop %v2776
        %v2794 = vmul.f32 %v2793, 0.6931472
        %v2795 = vlog2.pop %v2777
        %v2796 = vmul.f32 %v2795, 0.6931472
        %v2797 = vlog2.pop %v2778
        %v2798 = vmul.f32 %v2797, 0.6931472
        %v2799 = vlog2.pop %v2779
        %v2800 = vmul.f32 %v2799, 0.6931472
        %v2801 = vlog2.pop %v2780
        %v2802 = vmul.f32 %v2801, 0.6931472
        %v2803 = vlog2.pop %v2781
        %v2804 = vmul.f32 %v2803, 0.6931472
        %v2805 = vlog2.pop %v2782
        %v2806 = vmul.f32 %v2805, 0.6931472
        %v2807 = vlog2.pop %v2783
        %v2808 = vmul.f32 %v2807, 0.6931472
        %v2809 = vlog2.pop %v2784
        %v2810 = vmul.f32 %v2809, 0.6931472
        %v2811 = vlog2.pop %v2785
        %v2812 = vmul.f32 %v2811, 0.6931472
        %v2813 = vlog2.pop %v2786
        %v2814 = vmul.f32 %v2813, 0.6931472
        %v2815 = vlog2.pop %v2787
        %v2816 = vmul.f32 %v2815, 0.6931472
        %v2817 = vlog2.pop %v2788
        %v2818 = vmul.f32 %v2817, 0.6931472
        %v2819 = vlog2.pop %v2789
        %v2820 = vmul.f32 %v2819, 0.6931472
        %v2821 = vlog2.pop %v2790
        %v2822 = vmul.f32 %v2821, 0.6931472
        %v2823 = vsub.f32 %v2695, %v2792
        %v2824 = vsub.f32 %v2696, %v2794
        %v2825 = vsub.f32 %v2697, %v2796
        %v2826 = vsub.f32 %v2698, %v2798
        %v2827 = vsub.f32 %v2699, %v2800
        %v2828 = vsub.f32 %v2700, %v2802
        %v2829 = vsub.f32 %v2701, %v2804
        %v2830 = vsub.f32 %v2702, %v2806
        %v2831 = vsub.f32 %v2703, %v2808
        %v2832 = vsub.f32 %v2704, %v2810
        %v2833 = vsub.f32 %v2705, %v2812
        %v2834 = vsub.f32 %v2706, %v2814
        %v2835 = vsub.f32 %v2707, %v2816
        %v2836 = vsub.f32 %v2708, %v2818
        %v2837 = vsub.f32 %v2709, %v2820
        %v2838 = vsub.f32 %v2710, %v2822
        %v2839 = vld [vmem:[#allocation2] sm:$0x1]
        %v2840 = vadd.f32 %v2823, %v2824
        %v2841 = vadd.f32 %v2840, %v2825
        %v2842 = vadd.f32 %v2841, %v2826
        %v2843 = vadd.f32 %v2842, %v2827
        %v2844 = vadd.f32 %v2843, %v2828
        %v2845 = vadd.f32 %v2844, %v2829
        %v2846 = vadd.f32 %v2845, %v2830
        %v2847 = vadd.f32 %v2846, %v2831
        %v2848 = vadd.f32 %v2847, %v2832
        %v2849 = vadd.f32 %v2848, %v2833
        %v2850 = vadd.f32 %v2849, %v2834
        %v2851 = vadd.f32 %v2850, %v2835
        %v2852 = vadd.f32 %v2851, %v2836
        %v2853 = vadd.f32 %v2852, %v2837
        %v2854 = vadd.f32 %v2853, %v2838
        %v2855 = vrot.slane %v2854, 4
        %v2856 = vadd.f32 %v2854, %v2855
        %v2857 = vrot.slane %v2856, 2
        %v2858 = vadd.f32 %v2856, %v2857
        %v2859 = vrot.slane %v2858, 1
        %v2860 = vadd.f32 %v2858, %v2859
        %v2861 = vadd.f32 %v2839, %v2860
        %2862 = vst [vmem:[#allocation2] sm:$0x1] %v2861
        %v2863 = vlaneseq
        %v2864 = vshrl.u32 %v2863, 7
        %v2865 = vsub.s32 2, %v2864
        %v2866 = vrot.slane %v309, %v2865
        %2868 = vbcast.lane.b32.xlu0 %v2866, 256
        %v2869 = vpop.permute.xlu0 %2868
        %s2871 = sor.u32 256, 8
        %2872 = vbcast.lane.b32.xlu0 %v2866, %s2871
        %v2873 = vpop.permute.xlu0 %2872
        %s2875 = sor.u32 256, 16
        %2876 = vbcast.lane.b32.xlu0 %v2866, %s2875
        %v2877 = vpop.permute.xlu0 %2876
        %s2879 = sor.u32 256, 24
        %2880 = vbcast.lane.b32.xlu0 %v2866, %s2879
        %v2881 = vpop.permute.xlu0 %2880
        %s2883 = sor.u32 256, 32
        %2884 = vbcast.lane.b32.xlu0 %v2866, %s2883
        %v2885 = vpop.permute.xlu0 %2884
        %s2887 = sor.u32 256, 40
        %2888 = vbcast.lane.b32.xlu0 %v2866, %s2887
        %v2889 = vpop.permute.xlu0 %2888
        %s2891 = sor.u32 256, 48
        %2892 = vbcast.lane.b32.xlu0 %v2866, %s2891
        %v2893 = vpop.permute.xlu0 %2892
        %s2895 = sor.u32 256, 56
        %2896 = vbcast.lane.b32.xlu0 %v2866, %s2895
        %v2897 = vpop.permute.xlu0 %2896
        %s2899 = sor.u32 256, 64
        %2900 = vbcast.lane.b32.xlu0 %v2866, %s2899
        %v2901 = vpop.permute.xlu0 %2900
        %s2903 = sor.u32 256, 72
        %2904 = vbcast.lane.b32.xlu0 %v2866, %s2903
        %v2905 = vpop.permute.xlu0 %2904
        %s2907 = sor.u32 256, 80
        %2908 = vbcast.lane.b32.xlu0 %v2866, %s2907
        %v2909 = vpop.permute.xlu0 %2908
        %s2911 = sor.u32 256, 88
        %2912 = vbcast.lane.b32.xlu0 %v2866, %s2911
        %v2913 = vpop.permute.xlu0 %2912
        %s2915 = sor.u32 256, 96
        %2916 = vbcast.lane.b32.xlu0 %v2866, %s2915
        %v2917 = vpop.permute.xlu0 %2916
        %s2919 = sor.u32 256, 104
        %2920 = vbcast.lane.b32.xlu0 %v2866, %s2919
        %v2921 = vpop.permute.xlu0 %2920
        %s2923 = sor.u32 256, 112
        %2924 = vbcast.lane.b32.xlu0 %v2866, %s2923
        %v2925 = vpop.permute.xlu0 %2924
        %s2927 = sor.u32 256, 120
        %2928 = vbcast.lane.b32.xlu0 %v2866, %s2927
        %v2929 = vpop.permute.xlu0 %2928
        %v2930 = vlaneseq
        %v2931 = vshrl.u32 %v2930, 7
        %v2932 = vsub.s32 2, %v2931
        %v2933 = vrot.slane %v311, %v2932
        %v2934 = vmul.f32 %v2869, %v2933
        %v2935 = vmul.f32 %v2873, %v2933
        %v2936 = vmul.f32 %v2877, %v2933
        %v2937 = vmul.f32 %v2881, %v2933
        %v2938 = vmul.f32 %v2885, %v2933
        %v2939 = vmul.f32 %v2889, %v2933
        %v2940 = vmul.f32 %v2893, %v2933
        %v2941 = vmul.f32 %v2897, %v2933
        %v2942 = vmul.f32 %v2901, %v2933
        %v2943 = vmul.f32 %v2905, %v2933
        %v2944 = vmul.f32 %v2909, %v2933
        %v2945 = vmul.f32 %v2913, %v2933
        %v2946 = vmul.f32 %v2917, %v2933
        %v2947 = vmul.f32 %v2921, %v2933
        %v2948 = vmul.f32 %v2925, %v2933
        %v2949 = vmul.f32 %v2929, %v2933
        %v2950 = vmin.f32 %v2934, 0.0
        %v2951 = vmin.f32 %v2935, 0.0
        %v2952 = vmin.f32 %v2936, 0.0
        %v2953 = vmin.f32 %v2937, 0.0
        %v2954 = vmin.f32 %v2938, 0.0
        %v2955 = vmin.f32 %v2939, 0.0
        %v2956 = vmin.f32 %v2940, 0.0
        %v2957 = vmin.f32 %v2941, 0.0
        %v2958 = vmin.f32 %v2942, 0.0
        %v2959 = vmin.f32 %v2943, 0.0
        %v2960 = vmin.f32 %v2944, 0.0
        %v2961 = vmin.f32 %v2945, 0.0
        %v2962 = vmin.f32 %v2946, 0.0
        %v2963 = vmin.f32 %v2947, 0.0
        %v2964 = vmin.f32 %v2948, 0.0
        %v2965 = vmin.f32 %v2949, 0.0
        %v2966 = vand.u32 2147483647, %v2934
        %v2967 = vand.u32 2147483647, %v2935
        %v2968 = vand.u32 2147483647, %v2936
        %v2969 = vand.u32 2147483647, %v2937
        %v2970 = vand.u32 2147483647, %v2938
        %v2971 = vand.u32 2147483647, %v2939
        %v2972 = vand.u32 2147483647, %v2940
        %v2973 = vand.u32 2147483647, %v2941
        %v2974 = vand.u32 2147483647, %v2942
        %v2975 = vand.u32 2147483647, %v2943
        %v2976 = vand.u32 2147483647, %v2944
        %v2977 = vand.u32 2147483647, %v2945
        %v2978 = vand.u32 2147483647, %v2946
        %v2979 = vand.u32 2147483647, %v2947
        %v2980 = vand.u32 2147483647, %v2948
        %v2981 = vand.u32 2147483647, %v2949
        %v2982 = vsub.f32 0.0, %v2966
        %v2983 = vsub.f32 0.0, %v2967
        %v2984 = vsub.f32 0.0, %v2968
        %v2985 = vsub.f32 0.0, %v2969
        %v2986 = vsub.f32 0.0, %v2970
        %v2987 = vsub.f32 0.0, %v2971
        %v2988 = vsub.f32 0.0, %v2972
        %v2989 = vsub.f32 0.0, %v2973
        %v2990 = vsub.f32 0.0, %v2974
        %v2991 = vsub.f32 0.0, %v2975
        %v2992 = vsub.f32 0.0, %v2976
        %v2993 = vsub.f32 0.0, %v2977
        %v2994 = vsub.f32 0.0, %v2978
        %v2995 = vsub.f32 0.0, %v2979
        %v2996 = vsub.f32 0.0, %v2980
        %v2997 = vsub.f32 0.0, %v2981
        %v2998 = vmul.f32 %v2982, 1.442695
        %v2999 = vpow.pop %v2998
        %v3000 = vmul.f32 %v2983, 1.442695
        %v3001 = vpow.pop %v3000
        %v3002 = vmul.f32 %v2984, 1.442695
        %v3003 = vpow.pop %v3002
        %v3004 = vmul.f32 %v2985, 1.442695
        %v3005 = vpow.pop %v3004
        %v3006 = vmul.f32 %v2986, 1.442695
        %v3007 = vpow.pop %v3006
        %v3008 = vmul.f32 %v2987, 1.442695
        %v3009 = vpow.pop %v3008
        %v3010 = vmul.f32 %v2988, 1.442695
        %v3011 = vpow.pop %v3010
        %v3012 = vmul.f32 %v2989, 1.442695
        %v3013 = vpow.pop %v3012
        %v3014 = vmul.f32 %v2990, 1.442695
        %v3015 = vpow.pop %v3014
        %v3016 = vmul.f32 %v2991, 1.442695
        %v3017 = vpow.pop %v3016
        %v3018 = vmul.f32 %v2992, 1.442695
        %v3019 = vpow.pop %v3018
        %v3020 = vmul.f32 %v2993, 1.442695
        %v3021 = vpow.pop %v3020
        %v3022 = vmul.f32 %v2994, 1.442695
        %v3023 = vpow.pop %v3022
        %v3024 = vmul.f32 %v2995, 1.442695
        %v3025 = vpow.pop %v3024
        %v3026 = vmul.f32 %v2996, 1.442695
        %v3027 = vpow.pop %v3026
        %v3028 = vmul.f32 %v2997, 1.442695
        %v3029 = vpow.pop %v3028
        %v3030 = vadd.f32 %v2999, 1.0
        %v3031 = vadd.f32 %v3001, 1.0
        %v3032 = vadd.f32 %v3003, 1.0
        %v3033 = vadd.f32 %v3005, 1.0
        %v3034 = vadd.f32 %v3007, 1.0
        %v3035 = vadd.f32 %v3009, 1.0
        %v3036 = vadd.f32 %v3011, 1.0
        %v3037 = vadd.f32 %v3013, 1.0
        %v3038 = vadd.f32 %v3015, 1.0
        %v3039 = vadd.f32 %v3017, 1.0
        %v3040 = vadd.f32 %v3019, 1.0
        %v3041 = vadd.f32 %v3021, 1.0
        %v3042 = vadd.f32 %v3023, 1.0
        %v3043 = vadd.f32 %v3025, 1.0
        %v3044 = vadd.f32 %v3027, 1.0
        %v3045 = vadd.f32 %v3029, 1.0
        %v3046 = vlog2.pop %v3030
        %v3047 = vmul.f32 %v3046, 0.6931472
        %v3048 = vlog2.pop %v3031
        %v3049 = vmul.f32 %v3048, 0.6931472
        %v3050 = vlog2.pop %v3032
        %v3051 = vmul.f32 %v3050, 0.6931472
        %v3052 = vlog2.pop %v3033
        %v3053 = vmul.f32 %v3052, 0.6931472
        %v3054 = vlog2.pop %v3034
        %v3055 = vmul.f32 %v3054, 0.6931472
        %v3056 = vlog2.pop %v3035
        %v3057 = vmul.f32 %v3056, 0.6931472
        %v3058 = vlog2.pop %v3036
        %v3059 = vmul.f32 %v3058, 0.6931472
        %v3060 = vlog2.pop %v3037
        %v3061 = vmul.f32 %v3060, 0.6931472
        %v3062 = vlog2.pop %v3038
        %v3063 = vmul.f32 %v3062, 0.6931472
        %v3064 = vlog2.pop %v3039
        %v3065 = vmul.f32 %v3064, 0.6931472
        %v3066 = vlog2.pop %v3040
        %v3067 = vmul.f32 %v3066, 0.6931472
        %v3068 = vlog2.pop %v3041
        %v3069 = vmul.f32 %v3068, 0.6931472
        %v3070 = vlog2.pop %v3042
        %v3071 = vmul.f32 %v3070, 0.6931472
        %v3072 = vlog2.pop %v3043
        %v3073 = vmul.f32 %v3072, 0.6931472
        %v3074 = vlog2.pop %v3044
        %v3075 = vmul.f32 %v3074, 0.6931472
        %v3076 = vlog2.pop %v3045
        %v3077 = vmul.f32 %v3076, 0.6931472
        %v3078 = vsub.f32 %v2950, %v3047
        %v3079 = vsub.f32 %v2951, %v3049
        %v3080 = vsub.f32 %v2952, %v3051
        %v3081 = vsub.f32 %v2953, %v3053
        %v3082 = vsub.f32 %v2954, %v3055
        %v3083 = vsub.f32 %v2955, %v3057
        %v3084 = vsub.f32 %v2956, %v3059
        %v3085 = vsub.f32 %v2957, %v3061
        %v3086 = vsub.f32 %v2958, %v3063
        %v3087 = vsub.f32 %v2959, %v3065
        %v3088 = vsub.f32 %v2960, %v3067
        %v3089 = vsub.f32 %v2961, %v3069
        %v3090 = vsub.f32 %v2962, %v3071
        %v3091 = vsub.f32 %v2963, %v3073
        %v3092 = vsub.f32 %v2964, %v3075
        %v3093 = vsub.f32 %v2965, %v3077
        %v3094 = vld [vmem:[#allocation2] sm:$0x1]
        %v3095 = vadd.f32 %v3078, %v3079
        %v3096 = vadd.f32 %v3095, %v3080
        %v3097 = vadd.f32 %v3096, %v3081
        %v3098 = vadd.f32 %v3097, %v3082
        %v3099 = vadd.f32 %v3098, %v3083
        %v3100 = vadd.f32 %v3099, %v3084
        %v3101 = vadd.f32 %v3100, %v3085
        %v3102 = vadd.f32 %v3101, %v3086
        %v3103 = vadd.f32 %v3102, %v3087
        %v3104 = vadd.f32 %v3103, %v3088
        %v3105 = vadd.f32 %v3104, %v3089
        %v3106 = vadd.f32 %v3105, %v3090
        %v3107 = vadd.f32 %v3106, %v3091
        %v3108 = vadd.f32 %v3107, %v3092
        %v3109 = vadd.f32 %v3108, %v3093
        %v3110 = vrot.slane %v3109, 4
        %v3111 = vadd.f32 %v3109, %v3110
        %v3112 = vrot.slane %v3111, 2
        %v3113 = vadd.f32 %v3111, %v3112
        %v3114 = vrot.slane %v3113, 1
        %v3115 = vadd.f32 %v3113, %v3114
        %v3116 = vadd.f32 %v3094, %v3115
        %3117 = vst [vmem:[#allocation2] sm:$0x1] %v3116
        %v3118 = vlaneseq
        %v3119 = vshrl.u32 %v3118, 7
        %v3120 = vsub.s32 3, %v3119
        %v3121 = vrot.slane %v309, %v3120
        %3123 = vbcast.lane.b32.xlu0 %v3121, 256
        %v3124 = vpop.permute.xlu0 %3123
        %s3126 = sor.u32 256, 8
        %3127 = vbcast.lane.b32.xlu0 %v3121, %s3126
        %v3128 = vpop.permute.xlu0 %3127
        %s3130 = sor.u32 256, 16
        %3131 = vbcast.lane.b32.xlu0 %v3121, %s3130
        %v3132 = vpop.permute.xlu0 %3131
        %s3134 = sor.u32 256, 24
        %3135 = vbcast.lane.b32.xlu0 %v3121, %s3134
        %v3136 = vpop.permute.xlu0 %3135
        %s3138 = sor.u32 256, 32
        %3139 = vbcast.lane.b32.xlu0 %v3121, %s3138
        %v3140 = vpop.permute.xlu0 %3139
        %s3142 = sor.u32 256, 40
        %3143 = vbcast.lane.b32.xlu0 %v3121, %s3142
        %v3144 = vpop.permute.xlu0 %3143
        %s3146 = sor.u32 256, 48
        %3147 = vbcast.lane.b32.xlu0 %v3121, %s3146
        %v3148 = vpop.permute.xlu0 %3147
        %s3150 = sor.u32 256, 56
        %3151 = vbcast.lane.b32.xlu0 %v3121, %s3150
        %v3152 = vpop.permute.xlu0 %3151
        %s3154 = sor.u32 256, 64
        %3155 = vbcast.lane.b32.xlu0 %v3121, %s3154
        %v3156 = vpop.permute.xlu0 %3155
        %s3158 = sor.u32 256, 72
        %3159 = vbcast.lane.b32.xlu0 %v3121, %s3158
        %v3160 = vpop.permute.xlu0 %3159
        %s3162 = sor.u32 256, 80
        %3163 = vbcast.lane.b32.xlu0 %v3121, %s3162
        %v3164 = vpop.permute.xlu0 %3163
        %s3166 = sor.u32 256, 88
        %3167 = vbcast.lane.b32.xlu0 %v3121, %s3166
        %v3168 = vpop.permute.xlu0 %3167
        %s3170 = sor.u32 256, 96
        %3171 = vbcast.lane.b32.xlu0 %v3121, %s3170
        %v3172 = vpop.permute.xlu0 %3171
        %s3174 = sor.u32 256, 104
        %3175 = vbcast.lane.b32.xlu0 %v3121, %s3174
        %v3176 = vpop.permute.xlu0 %3175
        %s3178 = sor.u32 256, 112
        %3179 = vbcast.lane.b32.xlu0 %v3121, %s3178
        %v3180 = vpop.permute.xlu0 %3179
        %s3182 = sor.u32 256, 120
        %3183 = vbcast.lane.b32.xlu0 %v3121, %s3182
        %v3184 = vpop.permute.xlu0 %3183
        %v3185 = vlaneseq
        %v3186 = vshrl.u32 %v3185, 7
        %v3187 = vsub.s32 3, %v3186
        %v3188 = vrot.slane %v311, %v3187
        %v3189 = vmul.f32 %v3124, %v3188
        %v3190 = vmul.f32 %v3128, %v3188
        %v3191 = vmul.f32 %v3132, %v3188
        %v3192 = vmul.f32 %v3136, %v3188
        %v3193 = vmul.f32 %v3140, %v3188
        %v3194 = vmul.f32 %v3144, %v3188
        %v3195 = vmul.f32 %v3148, %v3188
        %v3196 = vmul.f32 %v3152, %v3188
        %v3197 = vmul.f32 %v3156, %v3188
        %v3198 = vmul.f32 %v3160, %v3188
        %v3199 = vmul.f32 %v3164, %v3188
        %v3200 = vmul.f32 %v3168, %v3188
        %v3201 = vmul.f32 %v3172, %v3188
        %v3202 = vmul.f32 %v3176, %v3188
        %v3203 = vmul.f32 %v3180, %v3188
        %v3204 = vmul.f32 %v3184, %v3188
        %v3205 = vmin.f32 %v3189, 0.0
        %v3206 = vmin.f32 %v3190, 0.0
        %v3207 = vmin.f32 %v3191, 0.0
        %v3208 = vmin.f32 %v3192, 0.0
        %v3209 = vmin.f32 %v3193, 0.0
        %v3210 = vmin.f32 %v3194, 0.0
        %v3211 = vmin.f32 %v3195, 0.0
        %v3212 = vmin.f32 %v3196, 0.0
        %v3213 = vmin.f32 %v3197, 0.0
        %v3214 = vmin.f32 %v3198, 0.0
        %v3215 = vmin.f32 %v3199, 0.0
        %v3216 = vmin.f32 %v3200, 0.0
        %v3217 = vmin.f32 %v3201, 0.0
        %v3218 = vmin.f32 %v3202, 0.0
        %v3219 = vmin.f32 %v3203, 0.0
        %v3220 = vmin.f32 %v3204, 0.0
        %v3221 = vand.u32 2147483647, %v3189
        %v3222 = vand.u32 2147483647, %v3190
        %v3223 = vand.u32 2147483647, %v3191
        %v3224 = vand.u32 2147483647, %v3192
        %v3225 = vand.u32 2147483647, %v3193
        %v3226 = vand.u32 2147483647, %v3194
        %v3227 = vand.u32 2147483647, %v3195
        %v3228 = vand.u32 2147483647, %v3196
        %v3229 = vand.u32 2147483647, %v3197
        %v3230 = vand.u32 2147483647, %v3198
        %v3231 = vand.u32 2147483647, %v3199
        %v3232 = vand.u32 2147483647, %v3200
        %v3233 = vand.u32 2147483647, %v3201
        %v3234 = vand.u32 2147483647, %v3202
        %v3235 = vand.u32 2147483647, %v3203
        %v3236 = vand.u32 2147483647, %v3204
        %v3237 = vsub.f32 0.0, %v3221
        %v3238 = vsub.f32 0.0, %v3222
        %v3239 = vsub.f32 0.0, %v3223
        %v3240 = vsub.f32 0.0, %v3224
        %v3241 = vsub.f32 0.0, %v3225
        %v3242 = vsub.f32 0.0, %v3226
        %v3243 = vsub.f32 0.0, %v3227
        %v3244 = vsub.f32 0.0, %v3228
        %v3245 = vsub.f32 0.0, %v3229
        %v3246 = vsub.f32 0.0, %v3230
        %v3247 = vsub.f32 0.0, %v3231
        %v3248 = vsub.f32 0.0, %v3232
        %v3249 = vsub.f32 0.0, %v3233
        %v3250 = vsub.f32 0.0, %v3234
        %v3251 = vsub.f32 0.0, %v3235
        %v3252 = vsub.f32 0.0, %v3236
        %v3253 = vmul.f32 %v3237, 1.442695
        %v3254 = vpow.pop %v3253
        %v3255 = vmul.f32 %v3238, 1.442695
        %v3256 = vpow.pop %v3255
        %v3257 = vmul.f32 %v3239, 1.442695
        %v3258 = vpow.pop %v3257
        %v3259 = vmul.f32 %v3240, 1.442695
        %v3260 = vpow.pop %v3259
        %v3261 = vmul.f32 %v3241, 1.442695
        %v3262 = vpow.pop %v3261
        %v3263 = vmul.f32 %v3242, 1.442695
        %v3264 = vpow.pop %v3263
        %v3265 = vmul.f32 %v3243, 1.442695
        %v3266 = vpow.pop %v3265
        %v3267 = vmul.f32 %v3244, 1.442695
        %v3268 = vpow.pop %v3267
        %v3269 = vmul.f32 %v3245, 1.442695
        %v3270 = vpow.pop %v3269
        %v3271 = vmul.f32 %v3246, 1.442695
        %v3272 = vpow.pop %v3271
        %v3273 = vmul.f32 %v3247, 1.442695
        %v3274 = vpow.pop %v3273
        %v3275 = vmul.f32 %v3248, 1.442695
        %v3276 = vpow.pop %v3275
        %v3277 = vmul.f32 %v3249, 1.442695
        %v3278 = vpow.pop %v3277
        %v3279 = vmul.f32 %v3250, 1.442695
        %v3280 = vpow.pop %v3279
        %v3281 = vmul.f32 %v3251, 1.442695
        %v3282 = vpow.pop %v3281
        %v3283 = vmul.f32 %v3252, 1.442695
        %v3284 = vpow.pop %v3283
        %v3285 = vadd.f32 %v3254, 1.0
        %v3286 = vadd.f32 %v3256, 1.0
        %v3287 = vadd.f32 %v3258, 1.0
        %v3288 = vadd.f32 %v3260, 1.0
        %v3289 = vadd.f32 %v3262, 1.0
        %v3290 = vadd.f32 %v3264, 1.0
        %v3291 = vadd.f32 %v3266, 1.0
        %v3292 = vadd.f32 %v3268, 1.0
        %v3293 = vadd.f32 %v3270, 1.0
        %v3294 = vadd.f32 %v3272, 1.0
        %v3295 = vadd.f32 %v3274, 1.0
        %v3296 = vadd.f32 %v3276, 1.0
        %v3297 = vadd.f32 %v3278, 1.0
        %v3298 = vadd.f32 %v3280, 1.0
        %v3299 = vadd.f32 %v3282, 1.0
        %v3300 = vadd.f32 %v3284, 1.0
        %v3301 = vlog2.pop %v3285
        %v3302 = vmul.f32 %v3301, 0.6931472
        %v3303 = vlog2.pop %v3286
        %v3304 = vmul.f32 %v3303, 0.6931472
        %v3305 = vlog2.pop %v3287
        %v3306 = vmul.f32 %v3305, 0.6931472
        %v3307 = vlog2.pop %v3288
        %v3308 = vmul.f32 %v3307, 0.6931472
        %v3309 = vlog2.pop %v3289
        %v3310 = vmul.f32 %v3309, 0.6931472
        %v3311 = vlog2.pop %v3290
        %v3312 = vmul.f32 %v3311, 0.6931472
        %v3313 = vlog2.pop %v3291
        %v3314 = vmul.f32 %v3313, 0.6931472
        %v3315 = vlog2.pop %v3292
        %v3316 = vmul.f32 %v3315, 0.6931472
        %v3317 = vlog2.pop %v3293
        %v3318 = vmul.f32 %v3317, 0.6931472
        %v3319 = vlog2.pop %v3294
        %v3320 = vmul.f32 %v3319, 0.6931472
        %v3321 = vlog2.pop %v3295
        %v3322 = vmul.f32 %v3321, 0.6931472
        %v3323 = vlog2.pop %v3296
        %v3324 = vmul.f32 %v3323, 0.6931472
        %v3325 = vlog2.pop %v3297
        %v3326 = vmul.f32 %v3325, 0.6931472
        %v3327 = vlog2.pop %v3298
        %v3328 = vmul.f32 %v3327, 0.6931472
        %v3329 = vlog2.pop %v3299
        %v3330 = vmul.f32 %v3329, 0.6931472
        %v3331 = vlog2.pop %v3300
        %v3332 = vmul.f32 %v3331, 0.6931472
        %v3333 = vsub.f32 %v3205, %v3302
        %v3334 = vsub.f32 %v3206, %v3304
        %v3335 = vsub.f32 %v3207, %v3306
        %v3336 = vsub.f32 %v3208, %v3308
        %v3337 = vsub.f32 %v3209, %v3310
        %v3338 = vsub.f32 %v3210, %v3312
        %v3339 = vsub.f32 %v3211, %v3314
        %v3340 = vsub.f32 %v3212, %v3316
        %v3341 = vsub.f32 %v3213, %v3318
        %v3342 = vsub.f32 %v3214, %v3320
        %v3343 = vsub.f32 %v3215, %v3322
        %v3344 = vsub.f32 %v3216, %v3324
        %v3345 = vsub.f32 %v3217, %v3326
        %v3346 = vsub.f32 %v3218, %v3328
        %v3347 = vsub.f32 %v3219, %v3330
        %v3348 = vsub.f32 %v3220, %v3332
        %v3349 = vld [vmem:[#allocation2] sm:$0x1]
        %v3350 = vadd.f32 %v3333, %v3334
        %v3351 = vadd.f32 %v3350, %v3335
        %v3352 = vadd.f32 %v3351, %v3336
        %v3353 = vadd.f32 %v3352, %v3337
        %v3354 = vadd.f32 %v3353, %v3338
        %v3355 = vadd.f32 %v3354, %v3339
        %v3356 = vadd.f32 %v3355, %v3340
        %v3357 = vadd.f32 %v3356, %v3341
        %v3358 = vadd.f32 %v3357, %v3342
        %v3359 = vadd.f32 %v3358, %v3343
        %v3360 = vadd.f32 %v3359, %v3344
        %v3361 = vadd.f32 %v3360, %v3345
        %v3362 = vadd.f32 %v3361, %v3346
        %v3363 = vadd.f32 %v3362, %v3347
        %v3364 = vadd.f32 %v3363, %v3348
        %v3365 = vrot.slane %v3364, 4
        %v3366 = vadd.f32 %v3364, %v3365
        %v3367 = vrot.slane %v3366, 2
        %v3368 = vadd.f32 %v3366, %v3367
        %v3369 = vrot.slane %v3368, 1
        %v3370 = vadd.f32 %v3368, %v3369
        %v3371 = vadd.f32 %v3349, %v3370
        %3372 = vst [vmem:[#allocation2] sm:$0x1] %v3371
        %v3373 = vlaneseq
        %v3374 = vshrl.u32 %v3373, 7
        %v3375 = vsub.s32 4, %v3374
        %v3376 = vrot.slane %v309, %v3375
        %3378 = vbcast.lane.b32.xlu0 %v3376, 256
        %v3379 = vpop.permute.xlu0 %3378
        %s3381 = sor.u32 256, 8
        %3382 = vbcast.lane.b32.xlu0 %v3376, %s3381
        %v3383 = vpop.permute.xlu0 %3382
        %s3385 = sor.u32 256, 16
        %3386 = vbcast.lane.b32.xlu0 %v3376, %s3385
        %v3387 = vpop.permute.xlu0 %3386
        %s3389 = sor.u32 256, 24
        %3390 = vbcast.lane.b32.xlu0 %v3376, %s3389
        %v3391 = vpop.permute.xlu0 %3390
        %s3393 = sor.u32 256, 32
        %3394 = vbcast.lane.b32.xlu0 %v3376, %s3393
        %v3395 = vpop.permute.xlu0 %3394
        %s3397 = sor.u32 256, 40
        %3398 = vbcast.lane.b32.xlu0 %v3376, %s3397
        %v3399 = vpop.permute.xlu0 %3398
        %s3401 = sor.u32 256, 48
        %3402 = vbcast.lane.b32.xlu0 %v3376, %s3401
        %v3403 = vpop.permute.xlu0 %3402
        %s3405 = sor.u32 256, 56
        %3406 = vbcast.lane.b32.xlu0 %v3376, %s3405
        %v3407 = vpop.permute.xlu0 %3406
        %s3409 = sor.u32 256, 64
        %3410 = vbcast.lane.b32.xlu0 %v3376, %s3409
        %v3411 = vpop.permute.xlu0 %3410
        %s3413 = sor.u32 256, 72
        %3414 = vbcast.lane.b32.xlu0 %v3376, %s3413
        %v3415 = vpop.permute.xlu0 %3414
        %s3417 = sor.u32 256, 80
        %3418 = vbcast.lane.b32.xlu0 %v3376, %s3417
        %v3419 = vpop.permute.xlu0 %3418
        %s3421 = sor.u32 256, 88
        %3422 = vbcast.lane.b32.xlu0 %v3376, %s3421
        %v3423 = vpop.permute.xlu0 %3422
        %s3425 = sor.u32 256, 96
        %3426 = vbcast.lane.b32.xlu0 %v3376, %s3425
        %v3427 = vpop.permute.xlu0 %3426
        %s3429 = sor.u32 256, 104
        %3430 = vbcast.lane.b32.xlu0 %v3376, %s3429
        %v3431 = vpop.permute.xlu0 %3430
        %s3433 = sor.u32 256, 112
        %3434 = vbcast.lane.b32.xlu0 %v3376, %s3433
        %v3435 = vpop.permute.xlu0 %3434
        %s3437 = sor.u32 256, 120
        %3438 = vbcast.lane.b32.xlu0 %v3376, %s3437
        %v3439 = vpop.permute.xlu0 %3438
        %v3440 = vlaneseq
        %v3441 = vshrl.u32 %v3440, 7
        %v3442 = vsub.s32 4, %v3441
        %v3443 = vrot.slane %v311, %v3442
        %v3444 = vmul.f32 %v3379, %v3443
        %v3445 = vmul.f32 %v3383, %v3443
        %v3446 = vmul.f32 %v3387, %v3443
        %v3447 = vmul.f32 %v3391, %v3443
        %v3448 = vmul.f32 %v3395, %v3443
        %v3449 = vmul.f32 %v3399, %v3443
        %v3450 = vmul.f32 %v3403, %v3443
        %v3451 = vmul.f32 %v3407, %v3443
        %v3452 = vmul.f32 %v3411, %v3443
        %v3453 = vmul.f32 %v3415, %v3443
        %v3454 = vmul.f32 %v3419, %v3443
        %v3455 = vmul.f32 %v3423, %v3443
        %v3456 = vmul.f32 %v3427, %v3443
        %v3457 = vmul.f32 %v3431, %v3443
        %v3458 = vmul.f32 %v3435, %v3443
        %v3459 = vmul.f32 %v3439, %v3443
        %v3460 = vmin.f32 %v3444, 0.0
        %v3461 = vmin.f32 %v3445, 0.0
        %v3462 = vmin.f32 %v3446, 0.0
        %v3463 = vmin.f32 %v3447, 0.0
        %v3464 = vmin.f32 %v3448, 0.0
        %v3465 = vmin.f32 %v3449, 0.0
        %v3466 = vmin.f32 %v3450, 0.0
        %v3467 = vmin.f32 %v3451, 0.0
        %v3468 = vmin.f32 %v3452, 0.0
        %v3469 = vmin.f32 %v3453, 0.0
        %v3470 = vmin.f32 %v3454, 0.0
        %v3471 = vmin.f32 %v3455, 0.0
        %v3472 = vmin.f32 %v3456, 0.0
        %v3473 = vmin.f32 %v3457, 0.0
        %v3474 = vmin.f32 %v3458, 0.0
        %v3475 = vmin.f32 %v3459, 0.0
        %v3476 = vand.u32 2147483647, %v3444
        %v3477 = vand.u32 2147483647, %v3445
        %v3478 = vand.u32 2147483647, %v3446
        %v3479 = vand.u32 2147483647, %v3447
        %v3480 = vand.u32 2147483647, %v3448
        %v3481 = vand.u32 2147483647, %v3449
        %v3482 = vand.u32 2147483647, %v3450
        %v3483 = vand.u32 2147483647, %v3451
        %v3484 = vand.u32 2147483647, %v3452
        %v3485 = vand.u32 2147483647, %v3453
        %v3486 = vand.u32 2147483647, %v3454
        %v3487 = vand.u32 2147483647, %v3455
        %v3488 = vand.u32 2147483647, %v3456
        %v3489 = vand.u32 2147483647, %v3457
        %v3490 = vand.u32 2147483647, %v3458
        %v3491 = vand.u32 2147483647, %v3459
        %v3492 = vsub.f32 0.0, %v3476
        %v3493 = vsub.f32 0.0, %v3477
        %v3494 = vsub.f32 0.0, %v3478
        %v3495 = vsub.f32 0.0, %v3479
        %v3496 = vsub.f32 0.0, %v3480
        %v3497 = vsub.f32 0.0, %v3481
        %v3498 = vsub.f32 0.0, %v3482
        %v3499 = vsub.f32 0.0, %v3483
        %v3500 = vsub.f32 0.0, %v3484
        %v3501 = vsub.f32 0.0, %v3485
        %v3502 = vsub.f32 0.0, %v3486
        %v3503 = vsub.f32 0.0, %v3487
        %v3504 = vsub.f32 0.0, %v3488
        %v3505 = vsub.f32 0.0, %v3489
        %v3506 = vsub.f32 0.0, %v3490
        %v3507 = vsub.f32 0.0, %v3491
        %v3508 = vmul.f32 %v3492, 1.442695
        %v3509 = vpow.pop %v3508
        %v3510 = vmul.f32 %v3493, 1.442695
        %v3511 = vpow.pop %v3510
        %v3512 = vmul.f32 %v3494, 1.442695
        %v3513 = vpow.pop %v3512
        %v3514 = vmul.f32 %v3495, 1.442695
        %v3515 = vpow.pop %v3514
        %v3516 = vmul.f32 %v3496, 1.442695
        %v3517 = vpow.pop %v3516
        %v3518 = vmul.f32 %v3497, 1.442695
        %v3519 = vpow.pop %v3518
        %v3520 = vmul.f32 %v3498, 1.442695
        %v3521 = vpow.pop %v3520
        %v3522 = vmul.f32 %v3499, 1.442695
        %v3523 = vpow.pop %v3522
        %v3524 = vmul.f32 %v3500, 1.442695
        %v3525 = vpow.pop %v3524
        %v3526 = vmul.f32 %v3501, 1.442695
        %v3527 = vpow.pop %v3526
        %v3528 = vmul.f32 %v3502, 1.442695
        %v3529 = vpow.pop %v3528
        %v3530 = vmul.f32 %v3503, 1.442695
        %v3531 = vpow.pop %v3530
        %v3532 = vmul.f32 %v3504, 1.442695
        %v3533 = vpow.pop %v3532
        %v3534 = vmul.f32 %v3505, 1.442695
        %v3535 = vpow.pop %v3534
        %v3536 = vmul.f32 %v3506, 1.442695
        %v3537 = vpow.pop %v3536
        %v3538 = vmul.f32 %v3507, 1.442695
        %v3539 = vpow.pop %v3538
        %v3540 = vadd.f32 %v3509, 1.0
        %v3541 = vadd.f32 %v3511, 1.0
        %v3542 = vadd.f32 %v3513, 1.0
        %v3543 = vadd.f32 %v3515, 1.0
        %v3544 = vadd.f32 %v3517, 1.0
        %v3545 = vadd.f32 %v3519, 1.0
        %v3546 = vadd.f32 %v3521, 1.0
        %v3547 = vadd.f32 %v3523, 1.0
        %v3548 = vadd.f32 %v3525, 1.0
        %v3549 = vadd.f32 %v3527, 1.0
        %v3550 = vadd.f32 %v3529, 1.0
        %v3551 = vadd.f32 %v3531, 1.0
        %v3552 = vadd.f32 %v3533, 1.0
        %v3553 = vadd.f32 %v3535, 1.0
        %v3554 = vadd.f32 %v3537, 1.0
        %v3555 = vadd.f32 %v3539, 1.0
        %v3556 = vlog2.pop %v3540
        %v3557 = vmul.f32 %v3556, 0.6931472
        %v3558 = vlog2.pop %v3541
        %v3559 = vmul.f32 %v3558, 0.6931472
        %v3560 = vlog2.pop %v3542
        %v3561 = vmul.f32 %v3560, 0.6931472
        %v3562 = vlog2.pop %v3543
        %v3563 = vmul.f32 %v3562, 0.6931472
        %v3564 = vlog2.pop %v3544
        %v3565 = vmul.f32 %v3564, 0.6931472
        %v3566 = vlog2.pop %v3545
        %v3567 = vmul.f32 %v3566, 0.6931472
        %v3568 = vlog2.pop %v3546
        %v3569 = vmul.f32 %v3568, 0.6931472
        %v3570 = vlog2.pop %v3547
        %v3571 = vmul.f32 %v3570, 0.6931472
        %v3572 = vlog2.pop %v3548
        %v3573 = vmul.f32 %v3572, 0.6931472
        %v3574 = vlog2.pop %v3549
        %v3575 = vmul.f32 %v3574, 0.6931472
        %v3576 = vlog2.pop %v3550
        %v3577 = vmul.f32 %v3576, 0.6931472
        %v3578 = vlog2.pop %v3551
        %v3579 = vmul.f32 %v3578, 0.6931472
        %v3580 = vlog2.pop %v3552
        %v3581 = vmul.f32 %v3580, 0.6931472
        %v3582 = vlog2.pop %v3553
        %v3583 = vmul.f32 %v3582, 0.6931472
        %v3584 = vlog2.pop %v3554
        %v3585 = vmul.f32 %v3584, 0.6931472
        %v3586 = vlog2.pop %v3555
        %v3587 = vmul.f32 %v3586, 0.6931472
        %v3588 = vsub.f32 %v3460, %v3557
        %v3589 = vsub.f32 %v3461, %v3559
        %v3590 = vsub.f32 %v3462, %v3561
        %v3591 = vsub.f32 %v3463, %v3563
        %v3592 = vsub.f32 %v3464, %v3565
        %v3593 = vsub.f32 %v3465, %v3567
        %v3594 = vsub.f32 %v3466, %v3569
        %v3595 = vsub.f32 %v3467, %v3571
        %v3596 = vsub.f32 %v3468, %v3573
        %v3597 = vsub.f32 %v3469, %v3575
        %v3598 = vsub.f32 %v3470, %v3577
        %v3599 = vsub.f32 %v3471, %v3579
        %v3600 = vsub.f32 %v3472, %v3581
        %v3601 = vsub.f32 %v3473, %v3583
        %v3602 = vsub.f32 %v3474, %v3585
        %v3603 = vsub.f32 %v3475, %v3587
        %v3604 = vld [vmem:[#allocation2] sm:$0x1]
        %v3605 = vadd.f32 %v3588, %v3589
        %v3606 = vadd.f32 %v3605, %v3590
        %v3607 = vadd.f32 %v3606, %v3591
        %v3608 = vadd.f32 %v3607, %v3592
        %v3609 = vadd.f32 %v3608, %v3593
        %v3610 = vadd.f32 %v3609, %v3594
        %v3611 = vadd.f32 %v3610, %v3595
        %v3612 = vadd.f32 %v3611, %v3596
        %v3613 = vadd.f32 %v3612, %v3597
        %v3614 = vadd.f32 %v3613, %v3598
        %v3615 = vadd.f32 %v3614, %v3599
        %v3616 = vadd.f32 %v3615, %v3600
        %v3617 = vadd.f32 %v3616, %v3601
        %v3618 = vadd.f32 %v3617, %v3602
        %v3619 = vadd.f32 %v3618, %v3603
        %v3620 = vrot.slane %v3619, 4
        %v3621 = vadd.f32 %v3619, %v3620
        %v3622 = vrot.slane %v3621, 2
        %v3623 = vadd.f32 %v3621, %v3622
        %v3624 = vrot.slane %v3623, 1
        %v3625 = vadd.f32 %v3623, %v3624
        %v3626 = vadd.f32 %v3604, %v3625
        %3627 = vst [vmem:[#allocation2] sm:$0x1] %v3626
        %v3628 = vlaneseq
        %v3629 = vshrl.u32 %v3628, 7
        %v3630 = vsub.s32 5, %v3629
        %v3631 = vrot.slane %v309, %v3630
        %3633 = vbcast.lane.b32.xlu0 %v3631, 256
        %v3634 = vpop.permute.xlu0 %3633
        %s3636 = sor.u32 256, 8
        %3637 = vbcast.lane.b32.xlu0 %v3631, %s3636
        %v3638 = vpop.permute.xlu0 %3637
        %s3640 = sor.u32 256, 16
        %3641 = vbcast.lane.b32.xlu0 %v3631, %s3640
        %v3642 = vpop.permute.xlu0 %3641
        %s3644 = sor.u32 256, 24
        %3645 = vbcast.lane.b32.xlu0 %v3631, %s3644
        %v3646 = vpop.permute.xlu0 %3645
        %s3648 = sor.u32 256, 32
        %3649 = vbcast.lane.b32.xlu0 %v3631, %s3648
        %v3650 = vpop.permute.xlu0 %3649
        %s3652 = sor.u32 256, 40
        %3653 = vbcast.lane.b32.xlu0 %v3631, %s3652
        %v3654 = vpop.permute.xlu0 %3653
        %s3656 = sor.u32 256, 48
        %3657 = vbcast.lane.b32.xlu0 %v3631, %s3656
        %v3658 = vpop.permute.xlu0 %3657
        %s3660 = sor.u32 256, 56
        %3661 = vbcast.lane.b32.xlu0 %v3631, %s3660
        %v3662 = vpop.permute.xlu0 %3661
        %s3664 = sor.u32 256, 64
        %3665 = vbcast.lane.b32.xlu0 %v3631, %s3664
        %v3666 = vpop.permute.xlu0 %3665
        %s3668 = sor.u32 256, 72
        %3669 = vbcast.lane.b32.xlu0 %v3631, %s3668
        %v3670 = vpop.permute.xlu0 %3669
        %s3672 = sor.u32 256, 80
        %3673 = vbcast.lane.b32.xlu0 %v3631, %s3672
        %v3674 = vpop.permute.xlu0 %3673
        %s3676 = sor.u32 256, 88
        %3677 = vbcast.lane.b32.xlu0 %v3631, %s3676
        %v3678 = vpop.permute.xlu0 %3677
        %s3680 = sor.u32 256, 96
        %3681 = vbcast.lane.b32.xlu0 %v3631, %s3680
        %v3682 = vpop.permute.xlu0 %3681
        %s3684 = sor.u32 256, 104
        %3685 = vbcast.lane.b32.xlu0 %v3631, %s3684
        %v3686 = vpop.permute.xlu0 %3685
        %s3688 = sor.u32 256, 112
        %3689 = vbcast.lane.b32.xlu0 %v3631, %s3688
        %v3690 = vpop.permute.xlu0 %3689
        %s3692 = sor.u32 256, 120
        %3693 = vbcast.lane.b32.xlu0 %v3631, %s3692
        %v3694 = vpop.permute.xlu0 %3693
        %v3695 = vlaneseq
        %v3696 = vshrl.u32 %v3695, 7
        %v3697 = vsub.s32 5, %v3696
        %v3698 = vrot.slane %v311, %v3697
        %v3699 = vmul.f32 %v3634, %v3698
        %v3700 = vmul.f32 %v3638, %v3698
        %v3701 = vmul.f32 %v3642, %v3698
        %v3702 = vmul.f32 %v3646, %v3698
        %v3703 = vmul.f32 %v3650, %v3698
        %v3704 = vmul.f32 %v3654, %v3698
        %v3705 = vmul.f32 %v3658, %v3698
        %v3706 = vmul.f32 %v3662, %v3698
        %v3707 = vmul.f32 %v3666, %v3698
        %v3708 = vmul.f32 %v3670, %v3698
        %v3709 = vmul.f32 %v3674, %v3698
        %v3710 = vmul.f32 %v3678, %v3698
        %v3711 = vmul.f32 %v3682, %v3698
        %v3712 = vmul.f32 %v3686, %v3698
        %v3713 = vmul.f32 %v3690, %v3698
        %v3714 = vmul.f32 %v3694, %v3698
        %v3715 = vmin.f32 %v3699, 0.0
        %v3716 = vmin.f32 %v3700, 0.0
        %v3717 = vmin.f32 %v3701, 0.0
        %v3718 = vmin.f32 %v3702, 0.0
        %v3719 = vmin.f32 %v3703, 0.0
        %v3720 = vmin.f32 %v3704, 0.0
        %v3721 = vmin.f32 %v3705, 0.0
        %v3722 = vmin.f32 %v3706, 0.0
        %v3723 = vmin.f32 %v3707, 0.0
        %v3724 = vmin.f32 %v3708, 0.0
        %v3725 = vmin.f32 %v3709, 0.0
        %v3726 = vmin.f32 %v3710, 0.0
        %v3727 = vmin.f32 %v3711, 0.0
        %v3728 = vmin.f32 %v3712, 0.0
        %v3729 = vmin.f32 %v3713, 0.0
        %v3730 = vmin.f32 %v3714, 0.0
        %v3731 = vand.u32 2147483647, %v3699
        %v3732 = vand.u32 2147483647, %v3700
        %v3733 = vand.u32 2147483647, %v3701
        %v3734 = vand.u32 2147483647, %v3702
        %v3735 = vand.u32 2147483647, %v3703
        %v3736 = vand.u32 2147483647, %v3704
        %v3737 = vand.u32 2147483647, %v3705
        %v3738 = vand.u32 2147483647, %v3706
        %v3739 = vand.u32 2147483647, %v3707
        %v3740 = vand.u32 2147483647, %v3708
        %v3741 = vand.u32 2147483647, %v3709
        %v3742 = vand.u32 2147483647, %v3710
        %v3743 = vand.u32 2147483647, %v3711
        %v3744 = vand.u32 2147483647, %v3712
        %v3745 = vand.u32 2147483647, %v3713
        %v3746 = vand.u32 2147483647, %v3714
        %v3747 = vsub.f32 0.0, %v3731
        %v3748 = vsub.f32 0.0, %v3732
        %v3749 = vsub.f32 0.0, %v3733
        %v3750 = vsub.f32 0.0, %v3734
        %v3751 = vsub.f32 0.0, %v3735
        %v3752 = vsub.f32 0.0, %v3736
        %v3753 = vsub.f32 0.0, %v3737
        %v3754 = vsub.f32 0.0, %v3738
        %v3755 = vsub.f32 0.0, %v3739
        %v3756 = vsub.f32 0.0, %v3740
        %v3757 = vsub.f32 0.0, %v3741
        %v3758 = vsub.f32 0.0, %v3742
        %v3759 = vsub.f32 0.0, %v3743
        %v3760 = vsub.f32 0.0, %v3744
        %v3761 = vsub.f32 0.0, %v3745
        %v3762 = vsub.f32 0.0, %v3746
        %v3763 = vmul.f32 %v3747, 1.442695
        %v3764 = vpow.pop %v3763
        %v3765 = vmul.f32 %v3748, 1.442695
        %v3766 = vpow.pop %v3765
        %v3767 = vmul.f32 %v3749, 1.442695
        %v3768 = vpow.pop %v3767
        %v3769 = vmul.f32 %v3750, 1.442695
        %v3770 = vpow.pop %v3769
        %v3771 = vmul.f32 %v3751, 1.442695
        %v3772 = vpow.pop %v3771
        %v3773 = vmul.f32 %v3752, 1.442695
        %v3774 = vpow.pop %v3773
        %v3775 = vmul.f32 %v3753, 1.442695
        %v3776 = vpow.pop %v3775
        %v3777 = vmul.f32 %v3754, 1.442695
        %v3778 = vpow.pop %v3777
        %v3779 = vmul.f32 %v3755, 1.442695
        %v3780 = vpow.pop %v3779
        %v3781 = vmul.f32 %v3756, 1.442695
        %v3782 = vpow.pop %v3781
        %v3783 = vmul.f32 %v3757, 1.442695
        %v3784 = vpow.pop %v3783
        %v3785 = vmul.f32 %v3758, 1.442695
        %v3786 = vpow.pop %v3785
        %v3787 = vmul.f32 %v3759, 1.442695
        %v3788 = vpow.pop %v3787
        %v3789 = vmul.f32 %v3760, 1.442695
        %v3790 = vpow.pop %v3789
        %v3791 = vmul.f32 %v3761, 1.442695
        %v3792 = vpow.pop %v3791
        %v3793 = vmul.f32 %v3762, 1.442695
        %v3794 = vpow.pop %v3793
        %v3795 = vadd.f32 %v3764, 1.0
        %v3796 = vadd.f32 %v3766, 1.0
        %v3797 = vadd.f32 %v3768, 1.0
        %v3798 = vadd.f32 %v3770, 1.0
        %v3799 = vadd.f32 %v3772, 1.0
        %v3800 = vadd.f32 %v3774, 1.0
        %v3801 = vadd.f32 %v3776, 1.0
        %v3802 = vadd.f32 %v3778, 1.0
        %v3803 = vadd.f32 %v3780, 1.0
        %v3804 = vadd.f32 %v3782, 1.0
        %v3805 = vadd.f32 %v3784, 1.0
        %v3806 = vadd.f32 %v3786, 1.0
        %v3807 = vadd.f32 %v3788, 1.0
        %v3808 = vadd.f32 %v3790, 1.0
        %v3809 = vadd.f32 %v3792, 1.0
        %v3810 = vadd.f32 %v3794, 1.0
        %v3811 = vlog2.pop %v3795
        %v3812 = vmul.f32 %v3811, 0.6931472
        %v3813 = vlog2.pop %v3796
        %v3814 = vmul.f32 %v3813, 0.6931472
        %v3815 = vlog2.pop %v3797
        %v3816 = vmul.f32 %v3815, 0.6931472
        %v3817 = vlog2.pop %v3798
        %v3818 = vmul.f32 %v3817, 0.6931472
        %v3819 = vlog2.pop %v3799
        %v3820 = vmul.f32 %v3819, 0.6931472
        %v3821 = vlog2.pop %v3800
        %v3822 = vmul.f32 %v3821, 0.6931472
        %v3823 = vlog2.pop %v3801
        %v3824 = vmul.f32 %v3823, 0.6931472
        %v3825 = vlog2.pop %v3802
        %v3826 = vmul.f32 %v3825, 0.6931472
        %v3827 = vlog2.pop %v3803
        %v3828 = vmul.f32 %v3827, 0.6931472
        %v3829 = vlog2.pop %v3804
        %v3830 = vmul.f32 %v3829, 0.6931472
        %v3831 = vlog2.pop %v3805
        %v3832 = vmul.f32 %v3831, 0.6931472
        %v3833 = vlog2.pop %v3806
        %v3834 = vmul.f32 %v3833, 0.6931472
        %v3835 = vlog2.pop %v3807
        %v3836 = vmul.f32 %v3835, 0.6931472
        %v3837 = vlog2.pop %v3808
        %v3838 = vmul.f32 %v3837, 0.6931472
        %v3839 = vlog2.pop %v3809
        %v3840 = vmul.f32 %v3839, 0.6931472
        %v3841 = vlog2.pop %v3810
        %v3842 = vmul.f32 %v3841, 0.6931472
        %v3843 = vsub.f32 %v3715, %v3812
        %v3844 = vsub.f32 %v3716, %v3814
        %v3845 = vsub.f32 %v3717, %v3816
        %v3846 = vsub.f32 %v3718, %v3818
        %v3847 = vsub.f32 %v3719, %v3820
        %v3848 = vsub.f32 %v3720, %v3822
        %v3849 = vsub.f32 %v3721, %v3824
        %v3850 = vsub.f32 %v3722, %v3826
        %v3851 = vsub.f32 %v3723, %v3828
        %v3852 = vsub.f32 %v3724, %v3830
        %v3853 = vsub.f32 %v3725, %v3832
        %v3854 = vsub.f32 %v3726, %v3834
        %v3855 = vsub.f32 %v3727, %v3836
        %v3856 = vsub.f32 %v3728, %v3838
        %v3857 = vsub.f32 %v3729, %v3840
        %v3858 = vsub.f32 %v3730, %v3842
        %v3859 = vld [vmem:[#allocation2] sm:$0x1]
        %v3860 = vadd.f32 %v3843, %v3844
        %v3861 = vadd.f32 %v3860, %v3845
        %v3862 = vadd.f32 %v3861, %v3846
        %v3863 = vadd.f32 %v3862, %v3847
        %v3864 = vadd.f32 %v3863, %v3848
        %v3865 = vadd.f32 %v3864, %v3849
        %v3866 = vadd.f32 %v3865, %v3850
        %v3867 = vadd.f32 %v3866, %v3851
        %v3868 = vadd.f32 %v3867, %v3852
        %v3869 = vadd.f32 %v3868, %v3853
        %v3870 = vadd.f32 %v3869, %v3854
        %v3871 = vadd.f32 %v3870, %v3855
        %v3872 = vadd.f32 %v3871, %v3856
        %v3873 = vadd.f32 %v3872, %v3857
        %v3874 = vadd.f32 %v3873, %v3858
        %v3875 = vrot.slane %v3874, 4
        %v3876 = vadd.f32 %v3874, %v3875
        %v3877 = vrot.slane %v3876, 2
        %v3878 = vadd.f32 %v3876, %v3877
        %v3879 = vrot.slane %v3878, 1
        %v3880 = vadd.f32 %v3878, %v3879
        %v3881 = vadd.f32 %v3859, %v3880
        %3882 = vst [vmem:[#allocation2] sm:$0x1] %v3881
        %v3883 = vlaneseq
        %v3884 = vshrl.u32 %v3883, 7
        %v3885 = vsub.s32 6, %v3884
        %v3886 = vrot.slane %v309, %v3885
        %3888 = vbcast.lane.b32.xlu0 %v3886, 256
        %v3889 = vpop.permute.xlu0 %3888
        %s3891 = sor.u32 256, 8
        %3892 = vbcast.lane.b32.xlu0 %v3886, %s3891
        %v3893 = vpop.permute.xlu0 %3892
        %s3895 = sor.u32 256, 16
        %3896 = vbcast.lane.b32.xlu0 %v3886, %s3895
        %v3897 = vpop.permute.xlu0 %3896
        %s3899 = sor.u32 256, 24
        %3900 = vbcast.lane.b32.xlu0 %v3886, %s3899
        %v3901 = vpop.permute.xlu0 %3900
        %s3903 = sor.u32 256, 32
        %3904 = vbcast.lane.b32.xlu0 %v3886, %s3903
        %v3905 = vpop.permute.xlu0 %3904
        %s3907 = sor.u32 256, 40
        %3908 = vbcast.lane.b32.xlu0 %v3886, %s3907
        %v3909 = vpop.permute.xlu0 %3908
        %s3911 = sor.u32 256, 48
        %3912 = vbcast.lane.b32.xlu0 %v3886, %s3911
        %v3913 = vpop.permute.xlu0 %3912
        %s3915 = sor.u32 256, 56
        %3916 = vbcast.lane.b32.xlu0 %v3886, %s3915
        %v3917 = vpop.permute.xlu0 %3916
        %s3919 = sor.u32 256, 64
        %3920 = vbcast.lane.b32.xlu0 %v3886, %s3919
        %v3921 = vpop.permute.xlu0 %3920
        %s3923 = sor.u32 256, 72
        %3924 = vbcast.lane.b32.xlu0 %v3886, %s3923
        %v3925 = vpop.permute.xlu0 %3924
        %s3927 = sor.u32 256, 80
        %3928 = vbcast.lane.b32.xlu0 %v3886, %s3927
        %v3929 = vpop.permute.xlu0 %3928
        %s3931 = sor.u32 256, 88
        %3932 = vbcast.lane.b32.xlu0 %v3886, %s3931
        %v3933 = vpop.permute.xlu0 %3932
        %s3935 = sor.u32 256, 96
        %3936 = vbcast.lane.b32.xlu0 %v3886, %s3935
        %v3937 = vpop.permute.xlu0 %3936
        %s3939 = sor.u32 256, 104
        %3940 = vbcast.lane.b32.xlu0 %v3886, %s3939
        %v3941 = vpop.permute.xlu0 %3940
        %s3943 = sor.u32 256, 112
        %3944 = vbcast.lane.b32.xlu0 %v3886, %s3943
        %v3945 = vpop.permute.xlu0 %3944
        %s3947 = sor.u32 256, 120
        %3948 = vbcast.lane.b32.xlu0 %v3886, %s3947
        %v3949 = vpop.permute.xlu0 %3948
        %v3950 = vlaneseq
        %v3951 = vshrl.u32 %v3950, 7
        %v3952 = vsub.s32 6, %v3951
        %v3953 = vrot.slane %v311, %v3952
        %v3954 = vmul.f32 %v3889, %v3953
        %v3955 = vmul.f32 %v3893, %v3953
        %v3956 = vmul.f32 %v3897, %v3953
        %v3957 = vmul.f32 %v3901, %v3953
        %v3958 = vmul.f32 %v3905, %v3953
        %v3959 = vmul.f32 %v3909, %v3953
        %v3960 = vmul.f32 %v3913, %v3953
        %v3961 = vmul.f32 %v3917, %v3953
        %v3962 = vmul.f32 %v3921, %v3953
        %v3963 = vmul.f32 %v3925, %v3953
        %v3964 = vmul.f32 %v3929, %v3953
        %v3965 = vmul.f32 %v3933, %v3953
        %v3966 = vmul.f32 %v3937, %v3953
        %v3967 = vmul.f32 %v3941, %v3953
        %v3968 = vmul.f32 %v3945, %v3953
        %v3969 = vmul.f32 %v3949, %v3953
        %v3970 = vmin.f32 %v3954, 0.0
        %v3971 = vmin.f32 %v3955, 0.0
        %v3972 = vmin.f32 %v3956, 0.0
        %v3973 = vmin.f32 %v3957, 0.0
        %v3974 = vmin.f32 %v3958, 0.0
        %v3975 = vmin.f32 %v3959, 0.0
        %v3976 = vmin.f32 %v3960, 0.0
        %v3977 = vmin.f32 %v3961, 0.0
        %v3978 = vmin.f32 %v3962, 0.0
        %v3979 = vmin.f32 %v3963, 0.0
        %v3980 = vmin.f32 %v3964, 0.0
        %v3981 = vmin.f32 %v3965, 0.0
        %v3982 = vmin.f32 %v3966, 0.0
        %v3983 = vmin.f32 %v3967, 0.0
        %v3984 = vmin.f32 %v3968, 0.0
        %v3985 = vmin.f32 %v3969, 0.0
        %v3986 = vand.u32 2147483647, %v3954
        %v3987 = vand.u32 2147483647, %v3955
        %v3988 = vand.u32 2147483647, %v3956
        %v3989 = vand.u32 2147483647, %v3957
        %v3990 = vand.u32 2147483647, %v3958
        %v3991 = vand.u32 2147483647, %v3959
        %v3992 = vand.u32 2147483647, %v3960
        %v3993 = vand.u32 2147483647, %v3961
        %v3994 = vand.u32 2147483647, %v3962
        %v3995 = vand.u32 2147483647, %v3963
        %v3996 = vand.u32 2147483647, %v3964
        %v3997 = vand.u32 2147483647, %v3965
        %v3998 = vand.u32 2147483647, %v3966
        %v3999 = vand.u32 2147483647, %v3967
        %v4000 = vand.u32 2147483647, %v3968
        %v4001 = vand.u32 2147483647, %v3969
        %v4002 = vsub.f32 0.0, %v3986
        %v4003 = vsub.f32 0.0, %v3987
        %v4004 = vsub.f32 0.0, %v3988
        %v4005 = vsub.f32 0.0, %v3989
        %v4006 = vsub.f32 0.0, %v3990
        %v4007 = vsub.f32 0.0, %v3991
        %v4008 = vsub.f32 0.0, %v3992
        %v4009 = vsub.f32 0.0, %v3993
        %v4010 = vsub.f32 0.0, %v3994
        %v4011 = vsub.f32 0.0, %v3995
        %v4012 = vsub.f32 0.0, %v3996
        %v4013 = vsub.f32 0.0, %v3997
        %v4014 = vsub.f32 0.0, %v3998
        %v4015 = vsub.f32 0.0, %v3999
        %v4016 = vsub.f32 0.0, %v4000
        %v4017 = vsub.f32 0.0, %v4001
        %v4018 = vmul.f32 %v4002, 1.442695
        %v4019 = vpow.pop %v4018
        %v4020 = vmul.f32 %v4003, 1.442695
        %v4021 = vpow.pop %v4020
        %v4022 = vmul.f32 %v4004, 1.442695
        %v4023 = vpow.pop %v4022
        %v4024 = vmul.f32 %v4005, 1.442695
        %v4025 = vpow.pop %v4024
        %v4026 = vmul.f32 %v4006, 1.442695
        %v4027 = vpow.pop %v4026
        %v4028 = vmul.f32 %v4007, 1.442695
        %v4029 = vpow.pop %v4028
        %v4030 = vmul.f32 %v4008, 1.442695
        %v4031 = vpow.pop %v4030
        %v4032 = vmul.f32 %v4009, 1.442695
        %v4033 = vpow.pop %v4032
        %v4034 = vmul.f32 %v4010, 1.442695
        %v4035 = vpow.pop %v4034
        %v4036 = vmul.f32 %v4011, 1.442695
        %v4037 = vpow.pop %v4036
        %v4038 = vmul.f32 %v4012, 1.442695
        %v4039 = vpow.pop %v4038
        %v4040 = vmul.f32 %v4013, 1.442695
        %v4041 = vpow.pop %v4040
        %v4042 = vmul.f32 %v4014, 1.442695
        %v4043 = vpow.pop %v4042
        %v4044 = vmul.f32 %v4015, 1.442695
        %v4045 = vpow.pop %v4044
        %v4046 = vmul.f32 %v4016, 1.442695
        %v4047 = vpow.pop %v4046
        %v4048 = vmul.f32 %v4017, 1.442695
        %v4049 = vpow.pop %v4048
        %v4050 = vadd.f32 %v4019, 1.0
        %v4051 = vadd.f32 %v4021, 1.0
        %v4052 = vadd.f32 %v4023, 1.0
        %v4053 = vadd.f32 %v4025, 1.0
        %v4054 = vadd.f32 %v4027, 1.0
        %v4055 = vadd.f32 %v4029, 1.0
        %v4056 = vadd.f32 %v4031, 1.0
        %v4057 = vadd.f32 %v4033, 1.0
        %v4058 = vadd.f32 %v4035, 1.0
        %v4059 = vadd.f32 %v4037, 1.0
        %v4060 = vadd.f32 %v4039, 1.0
        %v4061 = vadd.f32 %v4041, 1.0
        %v4062 = vadd.f32 %v4043, 1.0
        %v4063 = vadd.f32 %v4045, 1.0
        %v4064 = vadd.f32 %v4047, 1.0
        %v4065 = vadd.f32 %v4049, 1.0
        %v4066 = vlog2.pop %v4050
        %v4067 = vmul.f32 %v4066, 0.6931472
        %v4068 = vlog2.pop %v4051
        %v4069 = vmul.f32 %v4068, 0.6931472
        %v4070 = vlog2.pop %v4052
        %v4071 = vmul.f32 %v4070, 0.6931472
        %v4072 = vlog2.pop %v4053
        %v4073 = vmul.f32 %v4072, 0.6931472
        %v4074 = vlog2.pop %v4054
        %v4075 = vmul.f32 %v4074, 0.6931472
        %v4076 = vlog2.pop %v4055
        %v4077 = vmul.f32 %v4076, 0.6931472
        %v4078 = vlog2.pop %v4056
        %v4079 = vmul.f32 %v4078, 0.6931472
        %v4080 = vlog2.pop %v4057
        %v4081 = vmul.f32 %v4080, 0.6931472
        %v4082 = vlog2.pop %v4058
        %v4083 = vmul.f32 %v4082, 0.6931472
        %v4084 = vlog2.pop %v4059
        %v4085 = vmul.f32 %v4084, 0.6931472
        %v4086 = vlog2.pop %v4060
        %v4087 = vmul.f32 %v4086, 0.6931472
        %v4088 = vlog2.pop %v4061
        %v4089 = vmul.f32 %v4088, 0.6931472
        %v4090 = vlog2.pop %v4062
        %v4091 = vmul.f32 %v4090, 0.6931472
        %v4092 = vlog2.pop %v4063
        %v4093 = vmul.f32 %v4092, 0.6931472
        %v4094 = vlog2.pop %v4064
        %v4095 = vmul.f32 %v4094, 0.6931472
        %v4096 = vlog2.pop %v4065
        %v4097 = vmul.f32 %v4096, 0.6931472
        %v4098 = vsub.f32 %v3970, %v4067
        %v4099 = vsub.f32 %v3971, %v4069
        %v4100 = vsub.f32 %v3972, %v4071
        %v4101 = vsub.f32 %v3973, %v4073
        %v4102 = vsub.f32 %v3974, %v4075
        %v4103 = vsub.f32 %v3975, %v4077
        %v4104 = vsub.f32 %v3976, %v4079
        %v4105 = vsub.f32 %v3977, %v4081
        %v4106 = vsub.f32 %v3978, %v4083
        %v4107 = vsub.f32 %v3979, %v4085
        %v4108 = vsub.f32 %v3980, %v4087
        %v4109 = vsub.f32 %v3981, %v4089
        %v4110 = vsub.f32 %v3982, %v4091
        %v4111 = vsub.f32 %v3983, %v4093
        %v4112 = vsub.f32 %v3984, %v4095
        %v4113 = vsub.f32 %v3985, %v4097
        %v4114 = vld [vmem:[#allocation2] sm:$0x1]
        %v4115 = vadd.f32 %v4098, %v4099
        %v4116 = vadd.f32 %v4115, %v4100
        %v4117 = vadd.f32 %v4116, %v4101
        %v4118 = vadd.f32 %v4117, %v4102
        %v4119 = vadd.f32 %v4118, %v4103
        %v4120 = vadd.f32 %v4119, %v4104
        %v4121 = vadd.f32 %v4120, %v4105
        %v4122 = vadd.f32 %v4121, %v4106
        %v4123 = vadd.f32 %v4122, %v4107
        %v4124 = vadd.f32 %v4123, %v4108
        %v4125 = vadd.f32 %v4124, %v4109
        %v4126 = vadd.f32 %v4125, %v4110
        %v4127 = vadd.f32 %v4126, %v4111
        %v4128 = vadd.f32 %v4127, %v4112
        %v4129 = vadd.f32 %v4128, %v4113
        %v4130 = vrot.slane %v4129, 4
        %v4131 = vadd.f32 %v4129, %v4130
        %v4132 = vrot.slane %v4131, 2
        %v4133 = vadd.f32 %v4131, %v4132
        %v4134 = vrot.slane %v4133, 1
        %v4135 = vadd.f32 %v4133, %v4134
        %v4136 = vadd.f32 %v4114, %v4135
        %4137 = vst [vmem:[#allocation2] sm:$0x1] %v4136
        %v4138 = vlaneseq
        %v4139 = vshrl.u32 %v4138, 7
        %v4140 = vsub.s32 7, %v4139
        %v4141 = vrot.slane %v309, %v4140
        %4143 = vbcast.lane.b32.xlu0 %v4141, 256
        %v4144 = vpop.permute.xlu0 %4143
        %s4146 = sor.u32 256, 8
        %4147 = vbcast.lane.b32.xlu0 %v4141, %s4146
        %v4148 = vpop.permute.xlu0 %4147
        %s4150 = sor.u32 256, 16
        %4151 = vbcast.lane.b32.xlu0 %v4141, %s4150
        %v4152 = vpop.permute.xlu0 %4151
        %s4154 = sor.u32 256, 24
        %4155 = vbcast.lane.b32.xlu0 %v4141, %s4154
        %v4156 = vpop.permute.xlu0 %4155
        %s4158 = sor.u32 256, 32
        %4159 = vbcast.lane.b32.xlu0 %v4141, %s4158
        %v4160 = vpop.permute.xlu0 %4159
        %s4162 = sor.u32 256, 40
        %4163 = vbcast.lane.b32.xlu0 %v4141, %s4162
        %v4164 = vpop.permute.xlu0 %4163
        %s4166 = sor.u32 256, 48
        %4167 = vbcast.lane.b32.xlu0 %v4141, %s4166
        %v4168 = vpop.permute.xlu0 %4167
        %s4170 = sor.u32 256, 56
        %4171 = vbcast.lane.b32.xlu0 %v4141, %s4170
        %v4172 = vpop.permute.xlu0 %4171
        %s4174 = sor.u32 256, 64
        %4175 = vbcast.lane.b32.xlu0 %v4141, %s4174
        %v4176 = vpop.permute.xlu0 %4175
        %s4178 = sor.u32 256, 72
        %4179 = vbcast.lane.b32.xlu0 %v4141, %s4178
        %v4180 = vpop.permute.xlu0 %4179
        %s4182 = sor.u32 256, 80
        %4183 = vbcast.lane.b32.xlu0 %v4141, %s4182
        %v4184 = vpop.permute.xlu0 %4183
        %s4186 = sor.u32 256, 88
        %4187 = vbcast.lane.b32.xlu0 %v4141, %s4186
        %v4188 = vpop.permute.xlu0 %4187
        %s4190 = sor.u32 256, 96
        %4191 = vbcast.lane.b32.xlu0 %v4141, %s4190
        %v4192 = vpop.permute.xlu0 %4191
        %s4194 = sor.u32 256, 104
        %4195 = vbcast.lane.b32.xlu0 %v4141, %s4194
        %v4196 = vpop.permute.xlu0 %4195
        %s4198 = sor.u32 256, 112
        %4199 = vbcast.lane.b32.xlu0 %v4141, %s4198
        %v4200 = vpop.permute.xlu0 %4199
        %s4202 = sor.u32 256, 120
        %4203 = vbcast.lane.b32.xlu0 %v4141, %s4202
        %v4204 = vpop.permute.xlu0 %4203
        %v4205 = vlaneseq
        %v4206 = vshrl.u32 %v4205, 7
        %v4207 = vsub.s32 7, %v4206
        %v4208 = vrot.slane %v311, %v4207
        %v4209 = vmul.f32 %v4144, %v4208
        %v4210 = vmul.f32 %v4148, %v4208
        %v4211 = vmul.f32 %v4152, %v4208
        %v4212 = vmul.f32 %v4156, %v4208
        %v4213 = vmul.f32 %v4160, %v4208
        %v4214 = vmul.f32 %v4164, %v4208
        %v4215 = vmul.f32 %v4168, %v4208
        %v4216 = vmul.f32 %v4172, %v4208
        %v4217 = vmul.f32 %v4176, %v4208
        %v4218 = vmul.f32 %v4180, %v4208
        %v4219 = vmul.f32 %v4184, %v4208
        %v4220 = vmul.f32 %v4188, %v4208
        %v4221 = vmul.f32 %v4192, %v4208
        %v4222 = vmul.f32 %v4196, %v4208
        %v4223 = vmul.f32 %v4200, %v4208
        %v4224 = vmul.f32 %v4204, %v4208
        %v4225 = vmin.f32 %v4209, 0.0
        %v4226 = vmin.f32 %v4210, 0.0
        %v4227 = vmin.f32 %v4211, 0.0
        %v4228 = vmin.f32 %v4212, 0.0
        %v4229 = vmin.f32 %v4213, 0.0
        %v4230 = vmin.f32 %v4214, 0.0
        %v4231 = vmin.f32 %v4215, 0.0
        %v4232 = vmin.f32 %v4216, 0.0
        %v4233 = vmin.f32 %v4217, 0.0
        %v4234 = vmin.f32 %v4218, 0.0
        %v4235 = vmin.f32 %v4219, 0.0
        %v4236 = vmin.f32 %v4220, 0.0
        %v4237 = vmin.f32 %v4221, 0.0
        %v4238 = vmin.f32 %v4222, 0.0
        %v4239 = vmin.f32 %v4223, 0.0
        %v4240 = vmin.f32 %v4224, 0.0
        %v4241 = vand.u32 2147483647, %v4209
        %v4242 = vand.u32 2147483647, %v4210
        %v4243 = vand.u32 2147483647, %v4211
        %v4244 = vand.u32 2147483647, %v4212
        %v4245 = vand.u32 2147483647, %v4213
        %v4246 = vand.u32 2147483647, %v4214
        %v4247 = vand.u32 2147483647, %v4215
        %v4248 = vand.u32 2147483647, %v4216
        %v4249 = vand.u32 2147483647, %v4217
        %v4250 = vand.u32 2147483647, %v4218
        %v4251 = vand.u32 2147483647, %v4219
        %v4252 = vand.u32 2147483647, %v4220
        %v4253 = vand.u32 2147483647, %v4221
        %v4254 = vand.u32 2147483647, %v4222
        %v4255 = vand.u32 2147483647, %v4223
        %v4256 = vand.u32 2147483647, %v4224
        %v4257 = vsub.f32 0.0, %v4241
        %v4258 = vsub.f32 0.0, %v4242
        %v4259 = vsub.f32 0.0, %v4243
        %v4260 = vsub.f32 0.0, %v4244
        %v4261 = vsub.f32 0.0, %v4245
        %v4262 = vsub.f32 0.0, %v4246
        %v4263 = vsub.f32 0.0, %v4247
        %v4264 = vsub.f32 0.0, %v4248
        %v4265 = vsub.f32 0.0, %v4249
        %v4266 = vsub.f32 0.0, %v4250
        %v4267 = vsub.f32 0.0, %v4251
        %v4268 = vsub.f32 0.0, %v4252
        %v4269 = vsub.f32 0.0, %v4253
        %v4270 = vsub.f32 0.0, %v4254
        %v4271 = vsub.f32 0.0, %v4255
        %v4272 = vsub.f32 0.0, %v4256
        %v4273 = vmul.f32 %v4257, 1.442695
        %v4274 = vpow.pop %v4273
        %v4275 = vmul.f32 %v4258, 1.442695
        %v4276 = vpow.pop %v4275
        %v4277 = vmul.f32 %v4259, 1.442695
        %v4278 = vpow.pop %v4277
        %v4279 = vmul.f32 %v4260, 1.442695
        %v4280 = vpow.pop %v4279
        %v4281 = vmul.f32 %v4261, 1.442695
        %v4282 = vpow.pop %v4281
        %v4283 = vmul.f32 %v4262, 1.442695
        %v4284 = vpow.pop %v4283
        %v4285 = vmul.f32 %v4263, 1.442695
        %v4286 = vpow.pop %v4285
        %v4287 = vmul.f32 %v4264, 1.442695
        %v4288 = vpow.pop %v4287
        %v4289 = vmul.f32 %v4265, 1.442695
        %v4290 = vpow.pop %v4289
        %v4291 = vmul.f32 %v4266, 1.442695
        %v4292 = vpow.pop %v4291
        %v4293 = vmul.f32 %v4267, 1.442695
        %v4294 = vpow.pop %v4293
        %v4295 = vmul.f32 %v4268, 1.442695
        %v4296 = vpow.pop %v4295
        %v4297 = vmul.f32 %v4269, 1.442695
        %v4298 = vpow.pop %v4297
        %v4299 = vmul.f32 %v4270, 1.442695
        %v4300 = vpow.pop %v4299
        %v4301 = vmul.f32 %v4271, 1.442695
        %v4302 = vpow.pop %v4301
        %v4303 = vmul.f32 %v4272, 1.442695
        %v4304 = vpow.pop %v4303
        %v4305 = vadd.f32 %v4274, 1.0
        %v4306 = vadd.f32 %v4276, 1.0
        %v4307 = vadd.f32 %v4278, 1.0
        %v4308 = vadd.f32 %v4280, 1.0
        %v4309 = vadd.f32 %v4282, 1.0
        %v4310 = vadd.f32 %v4284, 1.0
        %v4311 = vadd.f32 %v4286, 1.0
        %v4312 = vadd.f32 %v4288, 1.0
        %v4313 = vadd.f32 %v4290, 1.0
        %v4314 = vadd.f32 %v4292, 1.0
        %v4315 = vadd.f32 %v4294, 1.0
        %v4316 = vadd.f32 %v4296, 1.0
        %v4317 = vadd.f32 %v4298, 1.0
        %v4318 = vadd.f32 %v4300, 1.0
        %v4319 = vadd.f32 %v4302, 1.0
        %v4320 = vadd.f32 %v4304, 1.0
        %v4321 = vlog2.pop %v4305
        %v4322 = vmul.f32 %v4321, 0.6931472
        %v4323 = vlog2.pop %v4306
        %v4324 = vmul.f32 %v4323, 0.6931472
        %v4325 = vlog2.pop %v4307
        %v4326 = vmul.f32 %v4325, 0.6931472
        %v4327 = vlog2.pop %v4308
        %v4328 = vmul.f32 %v4327, 0.6931472
        %v4329 = vlog2.pop %v4309
        %v4330 = vmul.f32 %v4329, 0.6931472
        %v4331 = vlog2.pop %v4310
        %v4332 = vmul.f32 %v4331, 0.6931472
        %v4333 = vlog2.pop %v4311
        %v4334 = vmul.f32 %v4333, 0.6931472
        %v4335 = vlog2.pop %v4312
        %v4336 = vmul.f32 %v4335, 0.6931472
        %v4337 = vlog2.pop %v4313
        %v4338 = vmul.f32 %v4337, 0.6931472
        %v4339 = vlog2.pop %v4314
        %v4340 = vmul.f32 %v4339, 0.6931472
        %v4341 = vlog2.pop %v4315
        %v4342 = vmul.f32 %v4341, 0.6931472
        %v4343 = vlog2.pop %v4316
        %v4344 = vmul.f32 %v4343, 0.6931472
        %v4345 = vlog2.pop %v4317
        %v4346 = vmul.f32 %v4345, 0.6931472
        %v4347 = vlog2.pop %v4318
        %v4348 = vmul.f32 %v4347, 0.6931472
        %v4349 = vlog2.pop %v4319
        %v4350 = vmul.f32 %v4349, 0.6931472
        %v4351 = vlog2.pop %v4320
        %v4352 = vmul.f32 %v4351, 0.6931472
        %v4353 = vsub.f32 %v4225, %v4322
        %v4354 = vsub.f32 %v4226, %v4324
        %v4355 = vsub.f32 %v4227, %v4326
        %v4356 = vsub.f32 %v4228, %v4328
        %v4357 = vsub.f32 %v4229, %v4330
        %v4358 = vsub.f32 %v4230, %v4332
        %v4359 = vsub.f32 %v4231, %v4334
        %v4360 = vsub.f32 %v4232, %v4336
        %v4361 = vsub.f32 %v4233, %v4338
        %v4362 = vsub.f32 %v4234, %v4340
        %v4363 = vsub.f32 %v4235, %v4342
        %v4364 = vsub.f32 %v4236, %v4344
        %v4365 = vsub.f32 %v4237, %v4346
        %v4366 = vsub.f32 %v4238, %v4348
        %v4367 = vsub.f32 %v4239, %v4350
        %v4368 = vsub.f32 %v4240, %v4352
        %v4369 = vld [vmem:[#allocation2] sm:$0x1]
        %v4370 = vadd.f32 %v4353, %v4354
        %v4371 = vadd.f32 %v4370, %v4355
        %v4372 = vadd.f32 %v4371, %v4356
        %v4373 = vadd.f32 %v4372, %v4357
        %v4374 = vadd.f32 %v4373, %v4358
        %v4375 = vadd.f32 %v4374, %v4359
        %v4376 = vadd.f32 %v4375, %v4360
        %v4377 = vadd.f32 %v4376, %v4361
        %v4378 = vadd.f32 %v4377, %v4362
        %v4379 = vadd.f32 %v4378, %v4363
        %v4380 = vadd.f32 %v4379, %v4364
        %v4381 = vadd.f32 %v4380, %v4365
        %v4382 = vadd.f32 %v4381, %v4366
        %v4383 = vadd.f32 %v4382, %v4367
        %v4384 = vadd.f32 %v4383, %v4368
        %v4385 = vrot.slane %v4384, 4
        %v4386 = vadd.f32 %v4384, %v4385
        %v4387 = vrot.slane %v4386, 2
        %v4388 = vadd.f32 %v4386, %v4387
        %v4389 = vrot.slane %v4388, 1
        %v4390 = vadd.f32 %v4388, %v4389
        %v4391 = vadd.f32 %v4369, %v4390
        %4392 = vst [vmem:[#allocation2] sm:$0x1] %v4391
        %v4393 = vld [vmem:[%s259] sm:$0xff]
        %v4394 = vld [vmem:[%s259 + $0x8] sm:$0xff]
        %v4395 = vld [vmem:[%s259 + $0x10] sm:$0xff]
        %v4396 = vld [vmem:[%s259 + $0x18] sm:$0xff]
        %v4397 = vld [vmem:[%s259 + $0x20] sm:$0xff]
        %v4398 = vld [vmem:[%s259 + $0x28] sm:$0xff]
        %v4399 = vld [vmem:[%s259 + $0x30] sm:$0xff]
        %v4400 = vld [vmem:[%s259 + $0x38] sm:$0xff]
        %v4401 = vld [vmem:[%s259 + $0x40] sm:$0xff]
        %v4402 = vld [vmem:[%s259 + $0x48] sm:$0xff]
        %v4403 = vld [vmem:[%s259 + $0x50] sm:$0xff]
        %v4404 = vld [vmem:[%s259 + $0x58] sm:$0xff]
        %v4405 = vld [vmem:[%s259 + $0x60] sm:$0xff]
        %v4406 = vld [vmem:[%s259 + $0x68] sm:$0xff]
        %v4407 = vld [vmem:[%s259 + $0x70] sm:$0xff]
        %v4408 = vld [vmem:[%s259 + $0x78] sm:$0xff]
        %v4409 = vld [vmem:[%s259 + $0x80] sm:$0xff]
        %v4410 = vld [vmem:[%s259 + $0x88] sm:$0xff]
        %v4411 = vld [vmem:[%s259 + $0x90] sm:$0xff]
        %v4412 = vld [vmem:[%s259 + $0x98] sm:$0xff]
        %v4413 = vld [vmem:[%s259 + $0xa0] sm:$0xff]
        %v4414 = vld [vmem:[%s259 + $0xa8] sm:$0xff]
        %v4415 = vld [vmem:[%s259 + $0xb0] sm:$0xff]
        %v4416 = vld [vmem:[%s259 + $0xb8] sm:$0xff]
        %v4417 = vld [vmem:[%s259 + $0xc0] sm:$0xff]
        %v4418 = vld [vmem:[%s259 + $0xc8] sm:$0xff]
        %v4419 = vld [vmem:[%s259 + $0xd0] sm:$0xff]
        %v4420 = vld [vmem:[%s259 + $0xd8] sm:$0xff]
        %v4421 = vld [vmem:[%s259 + $0xe0] sm:$0xff]
        %v4422 = vld [vmem:[%s259 + $0xe8] sm:$0xff]
        %v4423 = vld [vmem:[%s259 + $0xf0] sm:$0xff]
        %v4424 = vld [vmem:[%s259 + $0xf8] sm:$0xff]
        %v4427 = vcombine.high %v308, %v308
        %v4429 = vunpack.c.l.s4 1966171168
        %v4430 = vunpack.c.0.s8 %v4429
        %v4431 = vlaneseq
        %v4432 = vshrl.u32 %v4431, 7
        %v4433 = vsub.s32 %v4430, %v4432
        %v4434 = vrot.slane %v308, %v4433
        %v4436 = vunpack.c.l.s4 1966171168
        %v4437 = vunpack.c.0.s8 %v4436
        %v4438 = vlaneseq
        %v4439 = vshrl.u32 %v4438, 7
        %v4440 = vsub.s32 %v4437, %v4439
        %v4441 = vrot.slane %v4427, %v4440
        %v4442 = vcombine.high %v4434, %v4434
        %v4443 = vcombine.high %v4441, %v4441
        %v4445 = vunpack.c.l.s4 1966171168
        %v4446 = vunpack.c.0.s8 %v4445
        %v4447 = vlaneseq
        %v4448 = vshrl.u32 %v4447, 7
        %v4449 = vsub.s32 %v4446, %v4448
        %v4450 = vrot.slane %v4434, %v4449
        %v4452 = vunpack.c.l.s4 1966171168
        %v4453 = vunpack.c.0.s8 %v4452
        %v4454 = vlaneseq
        %v4455 = vshrl.u32 %v4454, 7
        %v4456 = vsub.s32 %v4453, %v4455
        %v4457 = vrot.slane %v4441, %v4456
        %v4459 = vunpack.c.l.s4 1966171168
        %v4460 = vunpack.c.0.s8 %v4459
        %v4461 = vlaneseq
        %v4462 = vshrl.u32 %v4461, 7
        %v4463 = vsub.s32 %v4460, %v4462
        %v4464 = vrot.slane %v4442, %v4463
        %v4466 = vunpack.c.l.s4 1966171168
        %v4467 = vunpack.c.0.s8 %v4466
        %v4468 = vlaneseq
        %v4469 = vshrl.u32 %v4468, 7
        %v4470 = vsub.s32 %v4467, %v4469
        %v4471 = vrot.slane %v4443, %v4470
        %v4472 = vcombine.high %v4450, %v4450
        %v4473 = vcombine.high %v4457, %v4457
        %v4474 = vcombine.high %v4464, %v4464
        %v4475 = vcombine.high %v4471, %v4471
        %v4476 = vcombine.high %v309, %v309
        %v4478 = vunpack.c.l.s4 1966171168
        %v4479 = vunpack.c.0.s8 %v4478
        %v4480 = vlaneseq
        %v4481 = vshrl.u32 %v4480, 7
        %v4482 = vsub.s32 %v4479, %v4481
        %v4483 = vrot.slane %v309, %v4482
        %v4485 = vunpack.c.l.s4 1966171168
        %v4486 = vunpack.c.0.s8 %v4485
        %v4487 = vlaneseq
        %v4488 = vshrl.u32 %v4487, 7
        %v4489 = vsub.s32 %v4486, %v4488
        %v4490 = vrot.slane %v4476, %v4489
        %v4491 = vcombine.high %v4483, %v4483
        %v4492 = vcombine.high %v4490, %v4490
        %v4494 = vunpack.c.l.s4 1966171168
        %v4495 = vunpack.c.0.s8 %v4494
        %v4496 = vlaneseq
        %v4497 = vshrl.u32 %v4496, 7
        %v4498 = vsub.s32 %v4495, %v4497
        %v4499 = vrot.slane %v4483, %v4498
        %v4501 = vunpack.c.l.s4 1966171168
        %v4502 = vunpack.c.0.s8 %v4501
        %v4503 = vlaneseq
        %v4504 = vshrl.u32 %v4503, 7
        %v4505 = vsub.s32 %v4502, %v4504
        %v4506 = vrot.slane %v4490, %v4505
        %v4508 = vunpack.c.l.s4 1966171168
        %v4509 = vunpack.c.0.s8 %v4508
        %v4510 = vlaneseq
        %v4511 = vshrl.u32 %v4510, 7
        %v4512 = vsub.s32 %v4509, %v4511
        %v4513 = vrot.slane %v4491, %v4512
        %v4515 = vunpack.c.l.s4 1966171168
        %v4516 = vunpack.c.0.s8 %v4515
        %v4517 = vlaneseq
        %v4518 = vshrl.u32 %v4517, 7
        %v4519 = vsub.s32 %v4516, %v4518
        %v4520 = vrot.slane %v4492, %v4519
        %v4521 = vcombine.high %v4499, %v4499
        %v4522 = vcombine.high %v4506, %v4506
        %v4523 = vcombine.high %v4513, %v4513
        %v4524 = vcombine.high %v4520, %v4520
        %v4525 = vlaneseq
        %v4526 = vshrl.u32 %v4525, 7
        %v4527 = vsub.s32 0, %v4526
        %v4528 = vrot.slane %v4450, %v4527
        %v4529 = vlaneseq
        %v4530 = vshrl.u32 %v4529, 7
        %v4531 = vsub.s32 0, %v4530
        %v4532 = vrot.slane %v4464, %v4531
        %v4533 = vlaneseq
        %v4534 = vshrl.u32 %v4533, 7
        %v4535 = vsub.s32 0, %v4534
        %v4536 = vrot.slane %v4472, %v4535
        %v4537 = vlaneseq
        %v4538 = vshrl.u32 %v4537, 7
        %v4539 = vsub.s32 0, %v4538
        %v4540 = vrot.slane %v4474, %v4539
        %v4541 = vlaneseq
        %v4542 = vshrl.u32 %v4541, 7
        %v4543 = vsub.s32 0, %v4542
        %v4544 = vrot.slane %v4457, %v4543
        %v4545 = vlaneseq
        %v4546 = vshrl.u32 %v4545, 7
        %v4547 = vsub.s32 0, %v4546
        %v4548 = vrot.slane %v4471, %v4547
        %v4549 = vlaneseq
        %v4550 = vshrl.u32 %v4549, 7
        %v4551 = vsub.s32 0, %v4550
        %v4552 = vrot.slane %v4473, %v4551
        %v4553 = vlaneseq
        %v4554 = vshrl.u32 %v4553, 7
        %v4555 = vsub.s32 0, %v4554
        %v4556 = vrot.slane %v4475, %v4555
        %v4557 = vlaneseq
        %v4558 = vshrl.u32 %v4557, 7
        %v4559 = vsub.s32 0, %v4558
        %v4560 = vrot.slane %v4499, %v4559
        %v4561 = vlaneseq
        %v4562 = vshrl.u32 %v4561, 7
        %v4563 = vsub.s32 0, %v4562
        %v4564 = vrot.slane %v4513, %v4563
        %v4565 = vlaneseq
        %v4566 = vshrl.u32 %v4565, 7
        %v4567 = vsub.s32 0, %v4566
        %v4568 = vrot.slane %v4521, %v4567
        %v4569 = vlaneseq
        %v4570 = vshrl.u32 %v4569, 7
        %v4571 = vsub.s32 0, %v4570
        %v4572 = vrot.slane %v4523, %v4571
        %v4573 = vlaneseq
        %v4574 = vshrl.u32 %v4573, 7
        %v4575 = vsub.s32 0, %v4574
        %v4576 = vrot.slane %v4506, %v4575
        %v4577 = vlaneseq
        %v4578 = vshrl.u32 %v4577, 7
        %v4579 = vsub.s32 0, %v4578
        %v4580 = vrot.slane %v4520, %v4579
        %v4581 = vlaneseq
        %v4582 = vshrl.u32 %v4581, 7
        %v4583 = vsub.s32 0, %v4582
        %v4584 = vrot.slane %v4522, %v4583
        %v4585 = vlaneseq
        %v4586 = vshrl.u32 %v4585, 7
        %v4587 = vsub.s32 0, %v4586
        %v4588 = vrot.slane %v4524, %v4587
        %v4605 = vmul.f32 %v4393, %v4528
        %v4606 = vmul.f32 %v4394, %v4528
        %v4607 = vmul.f32 %v4395, %v4532
        %v4608 = vmul.f32 %v4396, %v4532
        %v4609 = vmul.f32 %v4397, %v4536
        %v4610 = vmul.f32 %v4398, %v4536
        %v4611 = vmul.f32 %v4399, %v4540
        %v4612 = vmul.f32 %v4400, %v4540
        %v4613 = vmul.f32 %v4401, %v4544
        %v4614 = vmul.f32 %v4402, %v4544
        %v4615 = vmul.f32 %v4403, %v4548
        %v4616 = vmul.f32 %v4404, %v4548
        %v4617 = vmul.f32 %v4405, %v4552
        %v4618 = vmul.f32 %v4406, %v4552
        %v4619 = vmul.f32 %v4407, %v4556
        %v4620 = vmul.f32 %v4408, %v4556
        %v4621 = vmul.f32 %v4409, %v4560
        %v4622 = vmul.f32 %v4410, %v4560
        %v4623 = vmul.f32 %v4411, %v4564
        %v4624 = vmul.f32 %v4412, %v4564
        %v4625 = vmul.f32 %v4413, %v4568
        %v4626 = vmul.f32 %v4414, %v4568
        %v4627 = vmul.f32 %v4415, %v4572
        %v4628 = vmul.f32 %v4416, %v4572
        %v4629 = vmul.f32 %v4417, %v4576
        %v4630 = vmul.f32 %v4418, %v4576
        %v4631 = vmul.f32 %v4419, %v4580
        %v4632 = vmul.f32 %v4420, %v4580
        %v4633 = vmul.f32 %v4421, %v4584
        %v4634 = vmul.f32 %v4422, %v4584
        %v4635 = vmul.f32 %v4423, %v4588
        %v4636 = vmul.f32 %v4424, %v4588
        %4637 = vadd.xlane.f32.xlu0 %v4605
        %v4638 = vpop.xlane.xlu0 %4637
        %4639 = vadd.xlane.f32.xlu0 %v4606
        %v4640 = vpop.xlane.xlu0 %4639
        %4641 = vadd.xlane.f32.xlu0 %v4607
        %v4642 = vpop.xlane.xlu0 %4641
        %4643 = vadd.xlane.f32.xlu0 %v4608
        %v4644 = vpop.xlane.xlu0 %4643
        %4645 = vadd.xlane.f32.xlu0 %v4609
        %v4646 = vpop.xlane.xlu0 %4645
        %4647 = vadd.xlane.f32.xlu0 %v4610
        %v4648 = vpop.xlane.xlu0 %4647
        %4649 = vadd.xlane.f32.xlu0 %v4611
        %v4650 = vpop.xlane.xlu0 %4649
        %4651 = vadd.xlane.f32.xlu0 %v4612
        %v4652 = vpop.xlane.xlu0 %4651
        %4653 = vadd.xlane.f32.xlu0 %v4613
        %v4654 = vpop.xlane.xlu0 %4653
        %4655 = vadd.xlane.f32.xlu0 %v4614
        %v4656 = vpop.xlane.xlu0 %4655
        %4657 = vadd.xlane.f32.xlu0 %v4615
        %v4658 = vpop.xlane.xlu0 %4657
        %4659 = vadd.xlane.f32.xlu0 %v4616
        %v4660 = vpop.xlane.xlu0 %4659
        %4661 = vadd.xlane.f32.xlu0 %v4617
        %v4662 = vpop.xlane.xlu0 %4661
        %4663 = vadd.xlane.f32.xlu0 %v4618
        %v4664 = vpop.xlane.xlu0 %4663
        %4665 = vadd.xlane.f32.xlu0 %v4619
        %v4666 = vpop.xlane.xlu0 %4665
        %4667 = vadd.xlane.f32.xlu0 %v4620
        %v4668 = vpop.xlane.xlu0 %4667
        %4669 = vadd.xlane.f32.xlu0 %v4621
        %v4670 = vpop.xlane.xlu0 %4669
        %4671 = vadd.xlane.f32.xlu0 %v4622
        %v4672 = vpop.xlane.xlu0 %4671
        %4673 = vadd.xlane.f32.xlu0 %v4623
        %v4674 = vpop.xlane.xlu0 %4673
        %4675 = vadd.xlane.f32.xlu0 %v4624
        %v4676 = vpop.xlane.xlu0 %4675
        %4677 = vadd.xlane.f32.xlu0 %v4625
        %v4678 = vpop.xlane.xlu0 %4677
        %4679 = vadd.xlane.f32.xlu0 %v4626
        %v4680 = vpop.xlane.xlu0 %4679
        %4681 = vadd.xlane.f32.xlu0 %v4627
        %v4682 = vpop.xlane.xlu0 %4681
        %4683 = vadd.xlane.f32.xlu0 %v4628
        %v4684 = vpop.xlane.xlu0 %4683
        %4685 = vadd.xlane.f32.xlu0 %v4629
        %v4686 = vpop.xlane.xlu0 %4685
        %4687 = vadd.xlane.f32.xlu0 %v4630
        %v4688 = vpop.xlane.xlu0 %4687
        %4689 = vadd.xlane.f32.xlu0 %v4631
        %v4690 = vpop.xlane.xlu0 %4689
        %4691 = vadd.xlane.f32.xlu0 %v4632
        %v4692 = vpop.xlane.xlu0 %4691
        %4693 = vadd.xlane.f32.xlu0 %v4633
        %v4694 = vpop.xlane.xlu0 %4693
        %4695 = vadd.xlane.f32.xlu0 %v4634
        %v4696 = vpop.xlane.xlu0 %4695
        %4697 = vadd.xlane.f32.xlu0 %v4635
        %v4698 = vpop.xlane.xlu0 %4697
        %4699 = vadd.xlane.f32.xlu0 %v4636
        %v4700 = vpop.xlane.xlu0 %4699
        %v4701 = vld [vmem:[#allocation2] sm:$0x1]
        %4702 = vst [vmem:[%s302] sm:$0x1] %v4701
        %v4703 = vmin.f32 %v4638, 0.0
        %v4704 = vmin.f32 %v4640, 0.0
        %v4705 = vmin.f32 %v4642, 0.0
        %v4706 = vmin.f32 %v4644, 0.0
        %v4707 = vmin.f32 %v4646, 0.0
        %v4708 = vmin.f32 %v4648, 0.0
        %v4709 = vmin.f32 %v4650, 0.0
        %v4710 = vmin.f32 %v4652, 0.0
        %v4711 = vmin.f32 %v4654, 0.0
        %v4712 = vmin.f32 %v4656, 0.0
        %v4713 = vmin.f32 %v4658, 0.0
        %v4714 = vmin.f32 %v4660, 0.0
        %v4715 = vmin.f32 %v4662, 0.0
        %v4716 = vmin.f32 %v4664, 0.0
        %v4717 = vmin.f32 %v4666, 0.0
        %v4718 = vmin.f32 %v4668, 0.0
        %v4719 = vmin.f32 %v4670, 0.0
        %v4720 = vmin.f32 %v4672, 0.0
        %v4721 = vmin.f32 %v4674, 0.0
        %v4722 = vmin.f32 %v4676, 0.0
        %v4723 = vmin.f32 %v4678, 0.0
        %v4724 = vmin.f32 %v4680, 0.0
        %v4725 = vmin.f32 %v4682, 0.0
        %v4726 = vmin.f32 %v4684, 0.0
        %v4727 = vmin.f32 %v4686, 0.0
        %v4728 = vmin.f32 %v4688, 0.0
        %v4729 = vmin.f32 %v4690, 0.0
        %v4730 = vmin.f32 %v4692, 0.0
        %v4731 = vmin.f32 %v4694, 0.0
        %v4732 = vmin.f32 %v4696, 0.0
        %v4733 = vmin.f32 %v4698, 0.0
        %v4734 = vmin.f32 %v4700, 0.0
        %v4735 = vand.u32 2147483647, %v4638
        %v4736 = vand.u32 2147483647, %v4640
        %v4737 = vand.u32 2147483647, %v4642
        %v4738 = vand.u32 2147483647, %v4644
        %v4739 = vand.u32 2147483647, %v4646
        %v4740 = vand.u32 2147483647, %v4648
        %v4741 = vand.u32 2147483647, %v4650
        %v4742 = vand.u32 2147483647, %v4652
        %v4743 = vand.u32 2147483647, %v4654
        %v4744 = vand.u32 2147483647, %v4656
        %v4745 = vand.u32 2147483647, %v4658
        %v4746 = vand.u32 2147483647, %v4660
        %v4747 = vand.u32 2147483647, %v4662
        %v4748 = vand.u32 2147483647, %v4664
        %v4749 = vand.u32 2147483647, %v4666
        %v4750 = vand.u32 2147483647, %v4668
        %v4751 = vand.u32 2147483647, %v4670
        %v4752 = vand.u32 2147483647, %v4672
        %v4753 = vand.u32 2147483647, %v4674
        %v4754 = vand.u32 2147483647, %v4676
        %v4755 = vand.u32 2147483647, %v4678
        %v4756 = vand.u32 2147483647, %v4680
        %v4757 = vand.u32 2147483647, %v4682
        %v4758 = vand.u32 2147483647, %v4684
        %v4759 = vand.u32 2147483647, %v4686
        %v4760 = vand.u32 2147483647, %v4688
        %v4761 = vand.u32 2147483647, %v4690
        %v4762 = vand.u32 2147483647, %v4692
        %v4763 = vand.u32 2147483647, %v4694
        %v4764 = vand.u32 2147483647, %v4696
        %v4765 = vand.u32 2147483647, %v4698
        %v4766 = vand.u32 2147483647, %v4700
        %v4767 = vsub.f32 0.0, %v4735
        %v4768 = vsub.f32 0.0, %v4736
        %v4769 = vsub.f32 0.0, %v4737
        %v4770 = vsub.f32 0.0, %v4738
        %v4771 = vsub.f32 0.0, %v4739
        %v4772 = vsub.f32 0.0, %v4740
        %v4773 = vsub.f32 0.0, %v4741
        %v4774 = vsub.f32 0.0, %v4742
        %v4775 = vsub.f32 0.0, %v4743
        %v4776 = vsub.f32 0.0, %v4744
        %v4777 = vsub.f32 0.0, %v4745
        %v4778 = vsub.f32 0.0, %v4746
        %v4779 = vsub.f32 0.0, %v4747
        %v4780 = vsub.f32 0.0, %v4748
        %v4781 = vsub.f32 0.0, %v4749
        %v4782 = vsub.f32 0.0, %v4750
        %v4783 = vsub.f32 0.0, %v4751
        %v4784 = vsub.f32 0.0, %v4752
        %v4785 = vsub.f32 0.0, %v4753
        %v4786 = vsub.f32 0.0, %v4754
        %v4787 = vsub.f32 0.0, %v4755
        %v4788 = vsub.f32 0.0, %v4756
        %v4789 = vsub.f32 0.0, %v4757
        %v4790 = vsub.f32 0.0, %v4758
        %v4791 = vsub.f32 0.0, %v4759
        %v4792 = vsub.f32 0.0, %v4760
        %v4793 = vsub.f32 0.0, %v4761
        %v4794 = vsub.f32 0.0, %v4762
        %v4795 = vsub.f32 0.0, %v4763
        %v4796 = vsub.f32 0.0, %v4764
        %v4797 = vsub.f32 0.0, %v4765
        %v4798 = vsub.f32 0.0, %v4766
        %v4799 = vmul.f32 %v4767, 1.442695
        %v4800 = vpow.pop %v4799
        %v4801 = vmul.f32 %v4768, 1.442695
        %v4802 = vpow.pop %v4801
        %v4803 = vmul.f32 %v4769, 1.442695
        %v4804 = vpow.pop %v4803
        %v4805 = vmul.f32 %v4770, 1.442695
        %v4806 = vpow.pop %v4805
        %v4807 = vmul.f32 %v4771, 1.442695
        %v4808 = vpow.pop %v4807
        %v4809 = vmul.f32 %v4772, 1.442695
        %v4810 = vpow.pop %v4809
        %v4811 = vmul.f32 %v4773, 1.442695
        %v4812 = vpow.pop %v4811
        %v4813 = vmul.f32 %v4774, 1.442695
        %v4814 = vpow.pop %v4813
        %v4815 = vmul.f32 %v4775, 1.442695
        %v4816 = vpow.pop %v4815
        %v4817 = vmul.f32 %v4776, 1.442695
        %v4818 = vpow.pop %v4817
        %v4819 = vmul.f32 %v4777, 1.442695
        %v4820 = vpow.pop %v4819
        %v4821 = vmul.f32 %v4778, 1.442695
        %v4822 = vpow.pop %v4821
        %v4823 = vmul.f32 %v4779, 1.442695
        %v4824 = vpow.pop %v4823
        %v4825 = vmul.f32 %v4780, 1.442695
        %v4826 = vpow.pop %v4825
        %v4827 = vmul.f32 %v4781, 1.442695
        %v4828 = vpow.pop %v4827
        %v4829 = vmul.f32 %v4782, 1.442695
        %v4830 = vpow.pop %v4829
        %v4831 = vmul.f32 %v4783, 1.442695
        %v4832 = vpow.pop %v4831
        %v4833 = vmul.f32 %v4784, 1.442695
        %v4834 = vpow.pop %v4833
        %v4835 = vmul.f32 %v4785, 1.442695
        %v4836 = vpow.pop %v4835
        %v4837 = vmul.f32 %v4786, 1.442695
        %v4838 = vpow.pop %v4837
        %v4839 = vmul.f32 %v4787, 1.442695
        %v4840 = vpow.pop %v4839
        %v4841 = vmul.f32 %v4788, 1.442695
        %v4842 = vpow.pop %v4841
        %v4843 = vmul.f32 %v4789, 1.442695
        %v4844 = vpow.pop %v4843
        %v4845 = vmul.f32 %v4790, 1.442695
        %v4846 = vpow.pop %v4845
        %v4847 = vmul.f32 %v4791, 1.442695
        %v4848 = vpow.pop %v4847
        %v4849 = vmul.f32 %v4792, 1.442695
        %v4850 = vpow.pop %v4849
        %v4851 = vmul.f32 %v4793, 1.442695
        %v4852 = vpow.pop %v4851
        %v4853 = vmul.f32 %v4794, 1.442695
        %v4854 = vpow.pop %v4853
        %v4855 = vmul.f32 %v4795, 1.442695
        %v4856 = vpow.pop %v4855
        %v4857 = vmul.f32 %v4796, 1.442695
        %v4858 = vpow.pop %v4857
        %v4859 = vmul.f32 %v4797, 1.442695
        %v4860 = vpow.pop %v4859
        %v4861 = vmul.f32 %v4798, 1.442695
        %v4862 = vpow.pop %v4861
        %v4863 = vadd.f32 %v4800, 1.0
        %v4864 = vadd.f32 %v4802, 1.0
        %v4865 = vadd.f32 %v4804, 1.0
        %v4866 = vadd.f32 %v4806, 1.0
        %v4867 = vadd.f32 %v4808, 1.0
        %v4868 = vadd.f32 %v4810, 1.0
        %v4869 = vadd.f32 %v4812, 1.0
        %v4870 = vadd.f32 %v4814, 1.0
        %v4871 = vadd.f32 %v4816, 1.0
        %v4872 = vadd.f32 %v4818, 1.0
        %v4873 = vadd.f32 %v4820, 1.0
        %v4874 = vadd.f32 %v4822, 1.0
        %v4875 = vadd.f32 %v4824, 1.0
        %v4876 = vadd.f32 %v4826, 1.0
        %v4877 = vadd.f32 %v4828, 1.0
        %v4878 = vadd.f32 %v4830, 1.0
        %v4879 = vadd.f32 %v4832, 1.0
        %v4880 = vadd.f32 %v4834, 1.0
        %v4881 = vadd.f32 %v4836, 1.0
        %v4882 = vadd.f32 %v4838, 1.0
        %v4883 = vadd.f32 %v4840, 1.0
        %v4884 = vadd.f32 %v4842, 1.0
        %v4885 = vadd.f32 %v4844, 1.0
        %v4886 = vadd.f32 %v4846, 1.0
        %v4887 = vadd.f32 %v4848, 1.0
        %v4888 = vadd.f32 %v4850, 1.0
        %v4889 = vadd.f32 %v4852, 1.0
        %v4890 = vadd.f32 %v4854, 1.0
        %v4891 = vadd.f32 %v4856, 1.0
        %v4892 = vadd.f32 %v4858, 1.0
        %v4893 = vadd.f32 %v4860, 1.0
        %v4894 = vadd.f32 %v4862, 1.0
        %v4895 = vlog2.pop %v4863
        %v4896 = vmul.f32 %v4895, 0.6931472
        %v4897 = vlog2.pop %v4864
        %v4898 = vmul.f32 %v4897, 0.6931472
        %v4899 = vlog2.pop %v4865
        %v4900 = vmul.f32 %v4899, 0.6931472
        %v4901 = vlog2.pop %v4866
        %v4902 = vmul.f32 %v4901, 0.6931472
        %v4903 = vlog2.pop %v4867
        %v4904 = vmul.f32 %v4903, 0.6931472
        %v4905 = vlog2.pop %v4868
        %v4906 = vmul.f32 %v4905, 0.6931472
        %v4907 = vlog2.pop %v4869
        %v4908 = vmul.f32 %v4907, 0.6931472
        %v4909 = vlog2.pop %v4870
        %v4910 = vmul.f32 %v4909, 0.6931472
        %v4911 = vlog2.pop %v4871
        %v4912 = vmul.f32 %v4911, 0.6931472
        %v4913 = vlog2.pop %v4872
        %v4914 = vmul.f32 %v4913, 0.6931472
        %v4915 = vlog2.pop %v4873
        %v4916 = vmul.f32 %v4915, 0.6931472
        %v4917 = vlog2.pop %v4874
        %v4918 = vmul.f32 %v4917, 0.6931472
        %v4919 = vlog2.pop %v4875
        %v4920 = vmul.f32 %v4919, 0.6931472
        %v4921 = vlog2.pop %v4876
        %v4922 = vmul.f32 %v4921, 0.6931472
        %v4923 = vlog2.pop %v4877
        %v4924 = vmul.f32 %v4923, 0.6931472
        %v4925 = vlog2.pop %v4878
        %v4926 = vmul.f32 %v4925, 0.6931472
        %v4927 = vlog2.pop %v4879
        %v4928 = vmul.f32 %v4927, 0.6931472
        %v4929 = vlog2.pop %v4880
        %v4930 = vmul.f32 %v4929, 0.6931472
        %v4931 = vlog2.pop %v4881
        %v4932 = vmul.f32 %v4931, 0.6931472
        %v4933 = vlog2.pop %v4882
        %v4934 = vmul.f32 %v4933, 0.6931472
        %v4935 = vlog2.pop %v4883
        %v4936 = vmul.f32 %v4935, 0.6931472
        %v4937 = vlog2.pop %v4884
        %v4938 = vmul.f32 %v4937, 0.6931472
        %v4939 = vlog2.pop %v4885
        %v4940 = vmul.f32 %v4939, 0.6931472
        %v4941 = vlog2.pop %v4886
        %v4942 = vmul.f32 %v4941, 0.6931472
        %v4943 = vlog2.pop %v4887
        %v4944 = vmul.f32 %v4943, 0.6931472
        %v4945 = vlog2.pop %v4888
        %v4946 = vmul.f32 %v4945, 0.6931472
        %v4947 = vlog2.pop %v4889
        %v4948 = vmul.f32 %v4947, 0.6931472
        %v4949 = vlog2.pop %v4890
        %v4950 = vmul.f32 %v4949, 0.6931472
        %v4951 = vlog2.pop %v4891
        %v4952 = vmul.f32 %v4951, 0.6931472
        %v4953 = vlog2.pop %v4892
        %v4954 = vmul.f32 %v4953, 0.6931472
        %v4955 = vlog2.pop %v4893
        %v4956 = vmul.f32 %v4955, 0.6931472
        %v4957 = vlog2.pop %v4894
        %v4958 = vmul.f32 %v4957, 0.6931472
        %v4959 = vsub.f32 %v4703, %v4896
        %v4960 = vsub.f32 %v4704, %v4898
        %v4961 = vsub.f32 %v4705, %v4900
        %v4962 = vsub.f32 %v4706, %v4902
        %v4963 = vsub.f32 %v4707, %v4904
        %v4964 = vsub.f32 %v4708, %v4906
        %v4965 = vsub.f32 %v4709, %v4908
        %v4966 = vsub.f32 %v4710, %v4910
        %v4967 = vsub.f32 %v4711, %v4912
        %v4968 = vsub.f32 %v4712, %v4914
        %v4969 = vsub.f32 %v4713, %v4916
        %v4970 = vsub.f32 %v4714, %v4918
        %v4971 = vsub.f32 %v4715, %v4920
        %v4972 = vsub.f32 %v4716, %v4922
        %v4973 = vsub.f32 %v4717, %v4924
        %v4974 = vsub.f32 %v4718, %v4926
        %v4975 = vsub.f32 %v4719, %v4928
        %v4976 = vsub.f32 %v4720, %v4930
        %v4977 = vsub.f32 %v4721, %v4932
        %v4978 = vsub.f32 %v4722, %v4934
        %v4979 = vsub.f32 %v4723, %v4936
        %v4980 = vsub.f32 %v4724, %v4938
        %v4981 = vsub.f32 %v4725, %v4940
        %v4982 = vsub.f32 %v4726, %v4942
        %v4983 = vsub.f32 %v4727, %v4944
        %v4984 = vsub.f32 %v4728, %v4946
        %v4985 = vsub.f32 %v4729, %v4948
        %v4986 = vsub.f32 %v4730, %v4950
        %v4987 = vsub.f32 %v4731, %v4952
        %v4988 = vsub.f32 %v4732, %v4954
        %v4989 = vsub.f32 %v4733, %v4956
        %v4990 = vsub.f32 %v4734, %v4958
        %v5023 = vlaneseq
        %v5024 = vand.u32 %v5023, 127
        %v5025 = vlaneseq
        %v5026 = vshrl.u32 %v5025, 7
        %v5027 = vsub.s32 %v5024, %v5026
        %v5028 = vrot.slane %v4959, %v5027
        %v5029 = vadd.s32 %v5024, 4294967288
        %v5030 = vlaneseq
        %v5031 = vshrl.u32 %v5030, 7
        %v5032 = vsub.s32 %v5029, %v5031
        %v5033 = vrot.slane %v4960, %v5032
        %vm5034 = vcmask 130112
        %v5035 = vsel %vm5034, %v5033, %v5028
        %v5036 = vlaneseq
        %v5037 = vshrl.u32 %v5036, 7
        %v5038 = vsub.s32 %v5024, %v5037
        %v5039 = vrot.slane %v4961, %v5038
        %v5040 = vlaneseq
        %v5041 = vshrl.u32 %v5040, 7
        %v5042 = vsub.s32 %v5029, %v5041
        %v5043 = vrot.slane %v4962, %v5042
        %v5044 = vsel %vm5034, %v5043, %v5039
        %v5045 = vlaneseq
        %v5046 = vshrl.u32 %v5045, 7
        %v5047 = vsub.s32 %v5024, %v5046
        %v5048 = vrot.slane %v4963, %v5047
        %v5049 = vlaneseq
        %v5050 = vshrl.u32 %v5049, 7
        %v5051 = vsub.s32 %v5029, %v5050
        %v5052 = vrot.slane %v4964, %v5051
        %v5053 = vsel %vm5034, %v5052, %v5048
        %v5054 = vlaneseq
        %v5055 = vshrl.u32 %v5054, 7
        %v5056 = vsub.s32 %v5024, %v5055
        %v5057 = vrot.slane %v4965, %v5056
        %v5058 = vlaneseq
        %v5059 = vshrl.u32 %v5058, 7
        %v5060 = vsub.s32 %v5029, %v5059
        %v5061 = vrot.slane %v4966, %v5060
        %v5062 = vsel %vm5034, %v5061, %v5057
        %v5063 = vlaneseq
        %v5064 = vshrl.u32 %v5063, 7
        %v5065 = vsub.s32 %v5024, %v5064
        %v5066 = vrot.slane %v4967, %v5065
        %v5067 = vlaneseq
        %v5068 = vshrl.u32 %v5067, 7
        %v5069 = vsub.s32 %v5029, %v5068
        %v5070 = vrot.slane %v4968, %v5069
        %v5071 = vsel %vm5034, %v5070, %v5066
        %v5072 = vlaneseq
        %v5073 = vshrl.u32 %v5072, 7
        %v5074 = vsub.s32 %v5024, %v5073
        %v5075 = vrot.slane %v4969, %v5074
        %v5076 = vlaneseq
        %v5077 = vshrl.u32 %v5076, 7
        %v5078 = vsub.s32 %v5029, %v5077
        %v5079 = vrot.slane %v4970, %v5078
        %v5080 = vsel %vm5034, %v5079, %v5075
        %v5081 = vlaneseq
        %v5082 = vshrl.u32 %v5081, 7
        %v5083 = vsub.s32 %v5024, %v5082
        %v5084 = vrot.slane %v4971, %v5083
        %v5085 = vlaneseq
        %v5086 = vshrl.u32 %v5085, 7
        %v5087 = vsub.s32 %v5029, %v5086
        %v5088 = vrot.slane %v4972, %v5087
        %v5089 = vsel %vm5034, %v5088, %v5084
        %v5090 = vlaneseq
        %v5091 = vshrl.u32 %v5090, 7
        %v5092 = vsub.s32 %v5024, %v5091
        %v5093 = vrot.slane %v4973, %v5092
        %v5094 = vlaneseq
        %v5095 = vshrl.u32 %v5094, 7
        %v5096 = vsub.s32 %v5029, %v5095
        %v5097 = vrot.slane %v4974, %v5096
        %v5098 = vsel %vm5034, %v5097, %v5093
        %v5099 = vlaneseq
        %v5100 = vshrl.u32 %v5099, 7
        %v5101 = vsub.s32 %v5024, %v5100
        %v5102 = vrot.slane %v4975, %v5101
        %v5103 = vlaneseq
        %v5104 = vshrl.u32 %v5103, 7
        %v5105 = vsub.s32 %v5029, %v5104
        %v5106 = vrot.slane %v4976, %v5105
        %v5107 = vsel %vm5034, %v5106, %v5102
        %v5108 = vlaneseq
        %v5109 = vshrl.u32 %v5108, 7
        %v5110 = vsub.s32 %v5024, %v5109
        %v5111 = vrot.slane %v4977, %v5110
        %v5112 = vlaneseq
        %v5113 = vshrl.u32 %v5112, 7
        %v5114 = vsub.s32 %v5029, %v5113
        %v5115 = vrot.slane %v4978, %v5114
        %v5116 = vsel %vm5034, %v5115, %v5111
        %v5117 = vlaneseq
        %v5118 = vshrl.u32 %v5117, 7
        %v5119 = vsub.s32 %v5024, %v5118
        %v5120 = vrot.slane %v4979, %v5119
        %v5121 = vlaneseq
        %v5122 = vshrl.u32 %v5121, 7
        %v5123 = vsub.s32 %v5029, %v5122
        %v5124 = vrot.slane %v4980, %v5123
        %v5125 = vsel %vm5034, %v5124, %v5120
        %v5126 = vlaneseq
        %v5127 = vshrl.u32 %v5126, 7
        %v5128 = vsub.s32 %v5024, %v5127
        %v5129 = vrot.slane %v4981, %v5128
        %v5130 = vlaneseq
        %v5131 = vshrl.u32 %v5130, 7
        %v5132 = vsub.s32 %v5029, %v5131
        %v5133 = vrot.slane %v4982, %v5132
        %v5134 = vsel %vm5034, %v5133, %v5129
        %v5135 = vlaneseq
        %v5136 = vshrl.u32 %v5135, 7
        %v5137 = vsub.s32 %v5024, %v5136
        %v5138 = vrot.slane %v4983, %v5137
        %v5139 = vlaneseq
        %v5140 = vshrl.u32 %v5139, 7
        %v5141 = vsub.s32 %v5029, %v5140
        %v5142 = vrot.slane %v4984, %v5141
        %v5143 = vsel %vm5034, %v5142, %v5138
        %v5144 = vlaneseq
        %v5145 = vshrl.u32 %v5144, 7
        %v5146 = vsub.s32 %v5024, %v5145
        %v5147 = vrot.slane %v4985, %v5146
        %v5148 = vlaneseq
        %v5149 = vshrl.u32 %v5148, 7
        %v5150 = vsub.s32 %v5029, %v5149
        %v5151 = vrot.slane %v4986, %v5150
        %v5152 = vsel %vm5034, %v5151, %v5147
        %v5153 = vlaneseq
        %v5154 = vshrl.u32 %v5153, 7
        %v5155 = vsub.s32 %v5024, %v5154
        %v5156 = vrot.slane %v4987, %v5155
        %v5157 = vlaneseq
        %v5158 = vshrl.u32 %v5157, 7
        %v5159 = vsub.s32 %v5029, %v5158
        %v5160 = vrot.slane %v4988, %v5159
        %v5161 = vsel %vm5034, %v5160, %v5156
        %v5162 = vlaneseq
        %v5163 = vshrl.u32 %v5162, 7
        %v5164 = vsub.s32 %v5024, %v5163
        %v5165 = vrot.slane %v4989, %v5164
        %v5166 = vlaneseq
        %v5167 = vshrl.u32 %v5166, 7
        %v5168 = vsub.s32 %v5029, %v5167
        %v5169 = vrot.slane %v4990, %v5168
        %v5170 = vsel %vm5034, %v5169, %v5165
        %vm5171 = vcmask 1041409
        %v5172 = vsel %vm5171, %v5044, %v5035
        %vm5173 = vcmask 1042434
        %v5174 = vsel %vm5173, %v5053, %v5172
        %vm5175 = vcmask 1043459
        %v5176 = vsel %vm5175, %v5062, %v5174
        %vm5177 = vcmask 1044484
        %v5178 = vsel %vm5177, %v5071, %v5176
        %vm5179 = vcmask 1045509
        %v5180 = vsel %vm5179, %v5080, %v5178
        %vm5181 = vcmask 1046534
        %v5182 = vsel %vm5181, %v5089, %v5180
        %vm5183 = vcmask 1047559
        %v5184 = vsel %vm5183, %v5098, %v5182
        %v5185 = vsel %vm5171, %v5116, %v5107
        %v5186 = vsel %vm5173, %v5125, %v5185
        %v5187 = vsel %vm5175, %v5134, %v5186
        %v5188 = vsel %vm5177, %v5143, %v5187
        %v5189 = vsel %vm5179, %v5152, %v5188
        %v5190 = vsel %vm5181, %v5161, %v5189
        %v5191 = vsel %vm5183, %v5170, %v5190
        %vm5194 = vcmask 130048
        %5195 = vst.msk [vmem:[%s307] sm:$0xff] %vm5194, %v5184
        %5196 = vst.msk [vmem:[%s307 + $0x8] sm:$0xff] %vm5194, %v5191
        %p5197 = scmp.lt.s32.totalorder %s22, 1
        %s5198 = scalar_select %p5197, %s22, 1
        %s5199 = scalar_lea.vmem %s3, %s5198
        %p5200 = scmp.lt.s32.totalorder %s22, 1
        %s5201 = scalar_select %p5200, %s22, 1
        %s5202 = smul.addr %s5201, 2
        %s5203 = smul.addr %s5202, 8
        %s5204 = scalar_lea.vmem %s4, %s5203
        // Predicated region
        $region45: #{negative_loss.1} parent=31 // pred_check
          %p5205 = pneg %p118
        $region46: #{negative_loss.1} parent=31 // pred_check_branch
          %5207 = sbr.rel (%p5205) target = $region48
        $region47: #{negative_loss.1} parent=31 // pred_region
          _
        $region48: #{negative_loss.1} parent=31 // pred_fallthru
          _
        // Predicated region
        $region49: #{negative_loss.1} parent=31 // pred_check
          %p5208 = pneg %p144
        $region50: #{negative_loss.1} parent=31 // pred_check_branch
          %5210 = sbr.rel (%p5208) target = $region52
        $region51: #{negative_loss.1} parent=31 // pred_region
          _
        $region52: #{negative_loss.1} parent=31 // pred_fallthru
          _
      $region32: #{negative_loss.1} parent=5 // pred_fallthru
        _
      %p5211 = scmp.le.s32.totalorder 2, %s17
      // Predicated region
      $region53: #{negative_loss.1} parent=5 // pred_check
        %p5212 = pneg %p5211
      $region54: #{negative_loss.1} parent=5 // pred_check_branch
        %5214 = sbr.rel (%p5212) target = $region56
      $region55: #{negative_loss.1} parent=5 // pred_region
        %s5215 = ssub.s32 %s17, 2
        // Predicated region
        $region57: #{negative_loss.1} parent=55 // pred_check
          %p5216 = pneg %p124
        $region58: #{negative_loss.1} parent=55 // pred_check_branch
          %5218 = sbr.rel (%p5216) target = $region60
        $region59: #{negative_loss.1} parent=55 // pred_region
          %p5219 = scmp.lt.s32.totalorder %s23, 1
          %s5220 = scalar_select %p5219, %s23, 1
          %s5221 = scalar_lea.vmem %s3, %s5220
        $region60: #{negative_loss.1} parent=55 // pred_fallthru
          _
        // Predicated region
        $region61: #{negative_loss.1} parent=55 // pred_check
          %p5222 = pneg %p150
        $region62: #{negative_loss.1} parent=55 // pred_check_branch
          %5224 = sbr.rel (%p5222) target = $region64
        $region63: #{negative_loss.1} parent=55 // pred_region
          %p5225 = scmp.lt.s32.totalorder %s23, 1
          %s5226 = scalar_select %p5225, %s23, 1
          %s5227 = smul.addr %s5226, 2
          %s5228 = smul.addr %s5227, 8
          %s5229 = scalar_lea.vmem %s4, %s5228
        $region64: #{negative_loss.1} parent=55 // pred_fallthru
          _
      $region56: #{negative_loss.1} parent=5 // pred_fallthru
        _
    $region6: #{negative_loss.1} parent=1 // loop_footer
      %s21 = sadd.s32 1, %s17
    $region7: #{negative_loss.1} parent=1 // loop_footer_branch
      %16 = sbr.rel target = $region3
    $region8: #{negative_loss.1} parent=1 // loop_exit
      _
    %5230 = vsyncpa [#allocation4], 1
    %s5231 = scalar_lea.sflag [#allocation4], 1
    %5232 = vsyncpa %s5231, 1
    %5233 = vsyncpa [#allocation6], 1
    %s5234 = scalar_lea.sflag [#allocation6], 1
    %5235 = vsyncpa %s5234, 1

</llo_original>
